<compile_context>
chip_gen: v7x
topology: tpu7x:2x2x1
jax: 0.10.0
libtpu: 0.0.40
codegen_flags: <defaults>
</compile_context>

<pallas_src>
import math

import jax
import jax.numpy as jnp
from jax import lax
from jax.experimental import pallas as pl
from jax.experimental.pallas import tpu as pltpu

# ----------------------------- model dims ----------------------------------
B, S = 2, 8          # batch, seq
M = B * S
H = 64               # hidden size
NH, DH = 4, 16       # heads, head dim
F = 256              # FFN inner dim
V = 32               # transformers vocab size
MAX_POS = 16         # max_position_embeddings
TYPE_VOCAB = 2       # token_type vocab
N_LAYERS = 2
# transformers-side special ids for the toy vocab
PAD_ID = 0           # '[PAD]'
UNK_ID = 1           # '[UNK]'
CLS_ID = 2           # '[CLS]'
SEP_ID = 3           # '[SEP]'
LN_EPS = 1e-12
ATT_SCALE = 1.0 / math.sqrt(DH)
INV_SQRT2 = 1.0 / math.sqrt(2.0)
NEG_CROSS = 1e9      # extra additive mask magnitude for cross-sequence keys


# ----------------------------- fused Pallas kernel --------------------------


def _bert_fused_kernel(ids_ref, wemb_ref, pemb_ref, temb_ref,
                       ln_emb_g_ref, ln_emb_b_ref,
                       wqkv_ref, bqkv_ref, wo_ref, bo_ref,
                       ln1g_ref, ln1b_ref,
                       w1_ref, b1_ref, w2_ref, b2_ref,
                       ln2g_ref, ln2b_ref,
                       o_ref):
    f32 = jnp.float32
    bf16 = jnp.bfloat16

    def layernorm(x, g, b):
        mu = jnp.mean(x, axis=-1, keepdims=True)
        xc = x - mu
        var = jnp.mean(xc * xc, axis=-1, keepdims=True)
        return xc * lax.rsqrt(var + LN_EPS) * g + b

    # ---- correct_sent_indexing: AllenNLP -> transformers ids ---------------
    ids_raw = ids_ref[...]                                    # (M, 1) int32
    maskf = (ids_raw != 0).astype(f32)                        # input_mask
    ids = jnp.where(ids_raw > 1, ids_raw - 2,
                    jnp.where(ids_raw == 1, UNK_ID, PAD_ID))  # (M, 1) int32

    # ---- sequence-membership machinery (no integer vector division) --------
    r_mb = lax.broadcasted_iota(jnp.int32, (M, B), 0)
    b_mb = lax.broadcasted_iota(jnp.int32, (M, B), 1)
    off = r_mb - b_mb * S
    ind = ((off >= 0) & (off < S)).astype(f32)                # ind[m,b]=1 iff m//S==b
    # same-sequence indicator (M, M) and "same-seq AND real key" indicator
    samebf = jnp.einsum("mb,nb->mn", ind, ind,
                        preferred_element_type=f32)
    allowed = jnp.einsum("mb,nb->mn", ind, ind * maskf,
                         preferred_element_type=f32)

    # ---- get_seg_ids: cumulative [SEP] count per sequence -------------------
    rows = lax.broadcasted_iota(jnp.int32, (M, M), 0)
    cols = lax.broadcasted_iota(jnp.int32, (M, M), 1)
    le = (cols <= rows).astype(f32)
    sep = (ids == SEP_ID).astype(f32)                         # (M, 1)
    cum = jnp.dot(samebf * le, sep,
                  preferred_element_type=f32)                 # inclusive cumsum
    seg = (cum - sep) * maskf                                 # (M, 1) float segment id

    # ---- embedding gathers: exact one-hot matmuls on the MXU ----------------
    vidx = lax.broadcasted_iota(jnp.int32, (M, V), 1)
    oh_w = (ids == vidx).astype(f32)                          # (M, V)
    word = jnp.dot(oh_w, wemb_ref[...],
                   preferred_element_type=f32)                # (M, H) word_embeddings(ids)
    pos = jnp.concatenate([pemb_ref[0:S, :]] * B, axis=0)     # (M, H) positions 0..S-1 per seq
    t0 = temb_ref[0:1, :]
    t1 = temb_ref[1:2, :]
    typ = t0 + seg * (t1 - t0)        # exact for BERT's 2 token types (seg in {0,1})

    g_e = ln_emb_g_ref[...]
    b_e = ln_emb_b_ref[...]
    x = layernorm(word + pos + typ, g_e, b_e)                 # embeddings output
    lex = layernorm(word, g_e, b_e)                           # lex_seq

    # ---- attention bias, hoisted & materialized once ------------------------
    # HF semantics: (mask-1)*1e4 for padded keys; cross-sequence keys (which
    # only exist because heads/sequences are batched together) get -1e9.
    bias2 = (allowed - 1.0) * 10000.0 + (samebf - 1.0) * NEG_CROSS   # (M, M)
    bias3 = jnp.broadcast_to(bias2[None, :, :], (NH, M, M))

    def split_heads(mat, base):
        # (M, 3H) -> (NH, M, DH): heads stacked on a leading batch axis
        return jnp.stack(
            [mat[:, base + h * DH: base + (h + 1) * DH] for h in range(NH)],
            axis=0)

    # TODO(synk): switch to lax.fori_loop + dynamic ref[l] indexing at real depth.
    for l in range(N_LAYERS):
        # fused QKV projection (bf16 MXU operands, f32 accumulation)
        qkv = jnp.dot(x.astype(bf16), wqkv_ref[l],
                      preferred_element_type=f32) + bqkv_ref[l]        # (M, 3H)
        q = split_heads(qkv, 0)
        k = split_heads(qkv, H)
        v = split_heads(qkv, 2 * H)

        # one batched matmul each for scores and context over all heads
        s = jnp.einsum("hqd,hkd->hqk", q.astype(bf16), k.astype(bf16),
                       preferred_element_type=f32) * ATT_SCALE + bias3
        s = s - jnp.max(s, axis=-1, keepdims=True)
        e = jnp.exp(s)
        den = jnp.sum(e, axis=-1, keepdims=True)
        r = pl.reciprocal(den, approx=True)
        r = r * (2.0 - den * r)              # one Newton step -> ~f32-exact softmax
        p = e * r
        ctx = jnp.einsum("hqk,hkd->hqd", p.astype(bf16), v.astype(bf16),
                         preferred_element_type=f32)                   # (NH, M, DH)
        ctx_m = jnp.concatenate([ctx[h] for h in range(NH)], axis=-1)  # (M, H)

        # single output projection on the merged context + residual + post-LN
        attn = jnp.dot(ctx_m.astype(bf16), wo_ref[l],
                       preferred_element_type=f32) + bo_ref[l]
        x = layernorm(x + attn, ln1g_ref[l], ln1b_ref[l])

        # FFN with exact-erf GELU + residual + post-LN
        h1 = jnp.dot(x.astype(bf16), w1_ref[l],
                     preferred_element_type=f32) + b1_ref[l]
        h1 = 0.5 * h1 * (1.0 + lax.erf(h1 * INV_SQRT2))
        ffn = jnp.dot(h1.astype(bf16), w2_ref[l],
                      preferred_element_type=f32) + b2_ref[l]
        x = layernorm(x + ffn, ln2g_ref[l], ln2b_ref[l])

    # prepare_output("cat"): one unmasked full-width (128-lane) store
    o_ref[...] = jnp.concatenate([x, lex], axis=-1).astype(o_ref.dtype)


def bert_fused_pallas(ids_col, p):
    args = (ids_col, p["word_emb"], p["pos_emb"], p["type_emb"],
            p["ln_emb_g"], p["ln_emb_b"],
            p["wqkv"], p["bqkv"], p["wo"], p["bo"],
            p["ln1_g"], p["ln1_b"],
            p["w1"], p["b1"], p["w2"], p["b2"],
            p["ln2_g"], p["ln2_b"])

    per_layer_flops = (2 * M * H * 3 * H                 # fused QKV matmul
                       + 2 * 2 * NH * M * M * DH         # scores + context
                       + 2 * M * H * H                   # output projection
                       + 2 * 2 * M * H * F)              # FFN up + down
    flops = int(N_LAYERS * per_layer_flops
                + 2 * M * V * H + 6 * M * M + 12 * M * H)
    transcendentals = int(N_LAYERS * (M * F + NH * M * M + NH * M) + 8 * M)
    bytes_accessed = int(sum(a.size * a.dtype.itemsize for a in args)
                         + M * 2 * H * 4)

    vmem_spec = pl.BlockSpec(memory_space=pltpu.MemorySpace.VMEM)
    return pl.pallas_call(
        _bert_fused_kernel,
        out_shape=jax.ShapeDtypeStruct((M, 2 * H), jnp.float32),
        in_specs=[vmem_spec] * len(args),
        out_specs=vmem_spec,
        cost_estimate=pl.CostEstimate(flops=flops,
                                      transcendentals=transcendentals,
                                      bytes_accessed=bytes_accessed),
    )(*args)


# ----------------------------- parameters -----------------------------------


def init_params(key):
    def norm(k, shape, dtype=jnp.float32):
        return (0.02 * jax.random.normal(k, shape)).astype(dtype)

    ks = jax.random.split(key, 7)
    bf16 = jnp.bfloat16
    return {
        # embedding tables kept f32 (exact gather / LN statistics)
        "word_emb": norm(ks[0], (V, H)),
        "pos_emb": norm(ks[1], (MAX_POS, H)),
        "type_emb": norm(ks[2], (TYPE_VOCAB, H)),
        "ln_emb_g": jnp.ones((1, H), jnp.float32),
        "ln_emb_b": jnp.zeros((1, H), jnp.float32),
        # transformer block matmul weights stored bf16 (MXU operands);
        # biases + LayerNorm params stay f32
        "wqkv": norm(ks[3], (N_LAYERS, H, 3 * H), bf16),
        "bqkv": jnp.zeros((N_LAYERS, 1, 3 * H), jnp.float32),
        "wo": norm(ks[4], (N_LAYERS, H, H), bf16),
        "bo": jnp.zeros((N_LAYERS, 1, H), jnp.float32),
        "ln1_g": jnp.ones((N_LAYERS, 1, H), jnp.float32),
        "ln1_b": jnp.zeros((N_LAYERS, 1, H), jnp.float32),
        "w1": norm(ks[5], (N_LAYERS, H, F), bf16),
        "b1": jnp.zeros((N_LAYERS, 1, F), jnp.float32),
        "w2": norm(ks[6], (N_LAYERS, F, H), bf16),
        "b2": jnp.zeros((N_LAYERS, 1, H), jnp.float32),
        "ln2_g": jnp.ones((N_LAYERS, 1, H), jnp.float32),
        "ln2_b": jnp.zeros((N_LAYERS, 1, H), jnp.float32),
    }


# ----------------------------- forward pass ---------------------------------


def bert_embedder_forward(params, allen_ids):
    """jiant BertEmbedderModule.forward with output_mode='cat' (eval mode)."""
    assert allen_ids.shape[-1] <= MAX_POS, \
        "input length exceeds position embedding capacity"
    # (B, S) -> (B*S, 1) is a free row-major bitcast; everything else (id
    # correction, segment ids, masks, gathers, encoder, cat) runs in ONE kernel.
    ids_col = allen_ids.reshape(B * S, 1).astype(jnp.int32)
    out_flat = bert_fused_pallas(ids_col, params)              # (B*S, 2H)
    return out_flat.reshape(B, S, 2 * H)


# ----------------------------- main ------------------------------------------

if __name__ == "__main__":
    key = jax.random.PRNGKey(0)
    k_ids, k_params = jax.random.split(key)

    params = init_params(k_params)

    # AllenNLP-style ids: 0=pad, 1=unk, >=2 valid (allen = transformers_id + 2).
    # Random fillers avoid the special ids so seg_ids stay within TYPE_VOCAB.
    rand_tok = jax.random.randint(k_ids, (B, S), CLS_ID + 2 + 2, V + 2)
    allen = rand_tok
    allen = allen.at[:, 0].set(CLS_ID + 2)        # '[CLS]'
    allen = allen.at[0, S - 1].set(SEP_ID + 2)    # '[SEP]' at end of full seq
    allen = allen.at[0, 3].set(1)                 # one OOV token -> '[UNK]'
    allen = allen.at[1, 4].set(SEP_ID + 2)        # '[SEP]'
    allen = allen.at[1, 5:].set(0)                # right padding (len 5)
    allen_ids = allen.astype(jnp.int32)

    forward = jax.jit(bert_embedder_forward)
    out = forward(params, allen_ids)
    out = jax.block_until_ready(out)

    assert out.shape == (B, S, 2 * H), out.shape
    assert out.dtype == jnp.float32
    assert bool(jnp.all(jnp.isfinite(out)))
    # lex half of every padded position is LayerNorm(word_emb[PAD_ID]) -> identical
    assert bool(jnp.allclose(out[1, 5, H:], out[1, 7, H:], atol=1e-6))

    print("KERNEL_OK")
</pallas_src>

<mosaic_0001>
module attributes {stable_mosaic.version = 11 : i64} {
  func.func @_bert_fused_kernel(%arg0: memref<16x1xi32, #tpu.memory_space<vmem>>, %arg1: memref<32x64xf32, #tpu.memory_space<vmem>>, %arg2: memref<16x64xf32, #tpu.memory_space<vmem>>, %arg3: memref<2x64xf32, #tpu.memory_space<vmem>>, %arg4: memref<1x64xf32, #tpu.memory_space<vmem>>, %arg5: memref<1x64xf32, #tpu.memory_space<vmem>>, %arg6: memref<2x64x192xbf16, #tpu.memory_space<vmem>>, %arg7: memref<2x1x192xf32, #tpu.memory_space<vmem>>, %arg8: memref<2x64x64xbf16, #tpu.memory_space<vmem>>, %arg9: memref<2x1x64xf32, #tpu.memory_space<vmem>>, %arg10: memref<2x1x64xf32, #tpu.memory_space<vmem>>, %arg11: memref<2x1x64xf32, #tpu.memory_space<vmem>>, %arg12: memref<2x64x256xbf16, #tpu.memory_space<vmem>>, %arg13: memref<2x1x256xf32, #tpu.memory_space<vmem>>, %arg14: memref<2x256x64xbf16, #tpu.memory_space<vmem>>, %arg15: memref<2x1x64xf32, #tpu.memory_space<vmem>>, %arg16: memref<2x1x64xf32, #tpu.memory_space<vmem>>, %arg17: memref<2x1x64xf32, #tpu.memory_space<vmem>>, %arg18: memref<16x128xf32, #tpu.memory_space<vmem>>) attributes {dimension_semantics = [], scalar_prefetch = 0 : i64, scratch_operands = 0 : i64, tpu.core_type = #tpu.core_type<tc>} {
    %c0 = arith.constant 0 : index
    %c0_0 = arith.constant 0 : index
    %0 = vector.load %arg0[%c0, %c0_0] : memref<16x1xi32, #tpu.memory_space<vmem>>, vector<16x1xi32>
    %c0_i32 = arith.constant 0 : i32
    %1 = vector.broadcast %c0_i32 : i32 to vector<16x1xi32>
    %2 = arith.cmpi ne, %0, %1 : vector<16x1xi32>
    %3 = arith.extui %2 : vector<16x1xi1> to vector<16x1xi32>
    %4 = arith.sitofp %3 : vector<16x1xi32> to vector<16x1xf32>
    %c1_i32 = arith.constant 1 : i32
    %5 = vector.broadcast %c1_i32 : i32 to vector<16x1xi32>
    %6 = arith.cmpi sgt, %0, %5 : vector<16x1xi32>
    %c2_i32 = arith.constant 2 : i32
    %7 = vector.broadcast %c2_i32 : i32 to vector<16x1xi32>
    %8 = arith.subi %0, %7 : vector<16x1xi32>
    %c1_i32_1 = arith.constant 1 : i32
    %9 = vector.broadcast %c1_i32_1 : i32 to vector<16x1xi32>
    %10 = arith.cmpi eq, %0, %9 : vector<16x1xi32>
    %c1_i32_2 = arith.constant 1 : i32
    %c0_i32_3 = arith.constant 0 : i32
    %11 = vector.broadcast %c1_i32_2 : i32 to vector<16x1xi32>
    %12 = vector.broadcast %c0_i32_3 : i32 to vector<16x1xi32>
    %13 = arith.select %10, %11, %12 : vector<16x1xi1>, vector<16x1xi32>
    %14 = arith.select %6, %8, %13 : vector<16x1xi1>, vector<16x1xi32>
    %15 = tpu.iota {dimensions = array<i32: 0>} : vector<16x2xi32>
    %16 = tpu.iota {dimensions = array<i32: 1>} : vector<16x2xi32>
    %c8_i32 = arith.constant 8 : i32
    %17 = vector.broadcast %c8_i32 : i32 to vector<16x2xi32>
    %18 = arith.muli %16, %17 : vector<16x2xi32>
    %19 = arith.subi %15, %18 : vector<16x2xi32>
    %c0_i32_4 = arith.constant 0 : i32
    %20 = vector.broadcast %c0_i32_4 : i32 to vector<16x2xi32>
    %21 = arith.cmpi sge, %19, %20 : vector<16x2xi32>
    %c8_i32_5 = arith.constant 8 : i32
    %22 = vector.broadcast %c8_i32_5 : i32 to vector<16x2xi32>
    %23 = arith.cmpi slt, %19, %22 : vector<16x2xi32>
    %24 = arith.andi %21, %23 : vector<16x2xi1>
    %25 = arith.extui %24 : vector<16x2xi1> to vector<16x2xi32>
    %26 = arith.sitofp %25 : vector<16x2xi32> to vector<16x2xf32>
    "tpu.trace_start"() <{level = 10 : i32, message = "mb,nb->mn"}> : () -> ()
    %cst = arith.constant dense<0.000000e+00> : vector<16x16xf32>
    %27 = tpu.matmul %26, %26, %cst {dimension_numbers = #tpu.dot_dimension_numbers<[1], [1], [0], [0], [0, 0, 1, 0], [], []>} : vector<16x2xf32>, vector<16x2xf32>, vector<16x16xf32> -> vector<16x16xf32>
    "tpu.trace_stop"() : () -> ()
    %28 = vector.broadcast %4 : vector<16x1xf32> to vector<16x2xf32>
    %29 = arith.mulf %26, %28 : vector<16x2xf32>
    "tpu.trace_start"() <{level = 10 : i32, message = "mb,nb->mn"}> : () -> ()
    %cst_6 = arith.constant dense<0.000000e+00> : vector<16x16xf32>
    %30 = tpu.matmul %26, %29, %cst_6 {dimension_numbers = #tpu.dot_dimension_numbers<[1], [1], [0], [0], [0, 0, 1, 0], [], []>} : vector<16x2xf32>, vector<16x2xf32>, vector<16x16xf32> -> vector<16x16xf32>
    "tpu.trace_stop"() : () -> ()
    %31 = tpu.iota {dimensions = array<i32: 0>} : vector<16x16xi32>
    %32 = tpu.iota {dimensions = array<i32: 1>} : vector<16x16xi32>
    %33 = arith.cmpi sle, %32, %31 : vector<16x16xi32>
    %34 = arith.extui %33 : vector<16x16xi1> to vector<16x16xi32>
    %35 = arith.sitofp %34 : vector<16x16xi32> to vector<16x16xf32>
    %c3_i32 = arith.constant 3 : i32
    %36 = vector.broadcast %c3_i32 : i32 to vector<16x1xi32>
    %37 = arith.cmpi eq, %14, %36 : vector<16x1xi32>
    %38 = arith.extui %37 : vector<16x1xi1> to vector<16x1xi32>
    %39 = arith.sitofp %38 : vector<16x1xi32> to vector<16x1xf32>
    %40 = arith.mulf %27, %35 : vector<16x16xf32>
    %cst_7 = arith.constant dense<0.000000e+00> : vector<16x1xf32>
    %41 = tpu.matmul %40, %39, %cst_7 {dimension_numbers = #tpu.dot_dimension_numbers<[1], [0], [0], [1], [0, 0, 1, 1], [], []>} : vector<16x16xf32>, vector<16x1xf32>, vector<16x1xf32> -> vector<16x1xf32>
    %42 = arith.subf %41, %39 : vector<16x1xf32>
    %43 = arith.mulf %42, %4 : vector<16x1xf32>
    %44 = tpu.iota {dimensions = array<i32: 1>} : vector<16x32xi32>
    %45 = vector.broadcast %14 : vector<16x1xi32> to vector<16x32xi32>
    %46 = arith.cmpi eq, %45, %44 : vector<16x32xi32>
    %47 = arith.extui %46 : vector<16x32xi1> to vector<16x32xi32>
    %48 = arith.sitofp %47 : vector<16x32xi32> to vector<16x32xf32>
    %c0_8 = arith.constant 0 : index
    %c0_9 = arith.constant 0 : index
    %49 = vector.load %arg1[%c0_8, %c0_9] : memref<32x64xf32, #tpu.memory_space<vmem>>, vector<32x64xf32>
    %cst_10 = arith.constant dense<0.000000e+00> : vector<16x64xf32>
    %50 = tpu.matmul %48, %49, %cst_10 {dimension_numbers = #tpu.dot_dimension_numbers<[1], [0], [0], [1], [0, 0, 1, 1], [], []>} : vector<16x32xf32>, vector<32x64xf32>, vector<16x64xf32> -> vector<16x64xf32>
    %c0_11 = arith.constant 0 : index
    %c0_12 = arith.constant 0 : index
    %51 = vector.load %arg2[%c0_11, %c0_12] : memref<16x64xf32, #tpu.memory_space<vmem>>, vector<8x64xf32>
    %52 = tpu.concatenate %51, %51 in 0 : vector<8x64xf32>, vector<8x64xf32> -> vector<16x64xf32>
    %c0_13 = arith.constant 0 : index
    %c0_14 = arith.constant 0 : index
    %53 = vector.load %arg3[%c0_13, %c0_14] : memref<2x64xf32, #tpu.memory_space<vmem>>, vector<1x64xf32>
    %c1 = arith.constant 1 : index
    %c0_15 = arith.constant 0 : index
    %54 = vector.load %arg3[%c1, %c0_15] : memref<2x64xf32, #tpu.memory_space<vmem>>, vector<1x64xf32>
    %55 = arith.subf %54, %53 : vector<1x64xf32>
    %56 = vector.broadcast %43 : vector<16x1xf32> to vector<16x64xf32>
    %57 = vector.broadcast %55 : vector<1x64xf32> to vector<16x64xf32>
    %58 = arith.mulf %56, %57 : vector<16x64xf32>
    %59 = vector.broadcast %53 : vector<1x64xf32> to vector<16x64xf32>
    %60 = arith.addf %59, %58 : vector<16x64xf32>
    %c0_16 = arith.constant 0 : index
    %c0_17 = arith.constant 0 : index
    %61 = vector.load %arg4[%c0_16, %c0_17] : memref<1x64xf32, #tpu.memory_space<vmem>>, vector<1x64xf32>
    %c0_18 = arith.constant 0 : index
    %c0_19 = arith.constant 0 : index
    %62 = vector.load %arg5[%c0_18, %c0_19] : memref<1x64xf32, #tpu.memory_space<vmem>>, vector<1x64xf32>
    %63 = arith.addf %50, %52 : vector<16x64xf32>
    %64 = arith.addf %63, %60 : vector<16x64xf32>
    %cst_20 = arith.constant dense<0.000000e+00> : vector<16xf32>
    %65 = vector.multi_reduction <add>, %64, %cst_20 [1] : vector<16x64xf32> to vector<16xf32>
    %66 = vector.shape_cast %65 : vector<16xf32> to vector<16x1xf32>
    %cst_21 = arith.constant 6.400000e+01 : f32
    %67 = vector.broadcast %cst_21 : f32 to vector<16x1xf32>
    %68 = arith.divf %66, %67 : vector<16x1xf32>
    %69 = vector.broadcast %68 : vector<16x1xf32> to vector<16x64xf32>
    %70 = arith.subf %64, %69 : vector<16x64xf32>
    %71 = arith.mulf %70, %70 : vector<16x64xf32>
    %cst_22 = arith.constant dense<0.000000e+00> : vector<16xf32>
    %72 = vector.multi_reduction <add>, %71, %cst_22 [1] : vector<16x64xf32> to vector<16xf32>
    %73 = vector.shape_cast %72 : vector<16xf32> to vector<16x1xf32>
    %cst_23 = arith.constant 6.400000e+01 : f32
    %74 = vector.broadcast %cst_23 : f32 to vector<16x1xf32>
    %75 = arith.divf %73, %74 : vector<16x1xf32>
    %cst_24 = arith.constant 9.99999996E-13 : f32
    %76 = vector.broadcast %cst_24 : f32 to vector<16x1xf32>
    %77 = arith.addf %75, %76 : vector<16x1xf32>
    %78 = math.rsqrt %77 : vector<16x1xf32>
    %79 = vector.broadcast %78 : vector<16x1xf32> to vector<16x64xf32>
    %80 = arith.mulf %70, %79 : vector<16x64xf32>
    %81 = vector.broadcast %61 : vector<1x64xf32> to vector<16x64xf32>
    %82 = arith.mulf %80, %81 : vector<16x64xf32>
    %83 = vector.broadcast %62 : vector<1x64xf32> to vector<16x64xf32>
    %84 = arith.addf %82, %83 : vector<16x64xf32>
    %cst_25 = arith.constant dense<0.000000e+00> : vector<16xf32>
    %85 = vector.multi_reduction <add>, %50, %cst_25 [1] : vector<16x64xf32> to vector<16xf32>
    %86 = vector.shape_cast %85 : vector<16xf32> to vector<16x1xf32>
    %cst_26 = arith.constant 6.400000e+01 : f32
    %87 = vector.broadcast %cst_26 : f32 to vector<16x1xf32>
    %88 = arith.divf %86, %87 : vector<16x1xf32>
    %89 = vector.broadcast %88 : vector<16x1xf32> to vector<16x64xf32>
    %90 = arith.subf %50, %89 : vector<16x64xf32>
    %91 = arith.mulf %90, %90 : vector<16x64xf32>
    %cst_27 = arith.constant dense<0.000000e+00> : vector<16xf32>
    %92 = vector.multi_reduction <add>, %91, %cst_27 [1] : vector<16x64xf32> to vector<16xf32>
    %93 = vector.shape_cast %92 : vector<16xf32> to vector<16x1xf32>
    %cst_28 = arith.constant 6.400000e+01 : f32
    %94 = vector.broadcast %cst_28 : f32 to vector<16x1xf32>
    %95 = arith.divf %93, %94 : vector<16x1xf32>
    %cst_29 = arith.constant 9.99999996E-13 : f32
    %96 = vector.broadcast %cst_29 : f32 to vector<16x1xf32>
    %97 = arith.addf %95, %96 : vector<16x1xf32>
    %98 = math.rsqrt %97 : vector<16x1xf32>
    %99 = vector.broadcast %98 : vector<16x1xf32> to vector<16x64xf32>
    %100 = arith.mulf %90, %99 : vector<16x64xf32>
    %101 = vector.broadcast %61 : vector<1x64xf32> to vector<16x64xf32>
    %102 = arith.mulf %100, %101 : vector<16x64xf32>
    %103 = vector.broadcast %62 : vector<1x64xf32> to vector<16x64xf32>
    %104 = arith.addf %102, %103 : vector<16x64xf32>
    %cst_30 = arith.constant 1.000000e+00 : f32
    %105 = vector.broadcast %cst_30 : f32 to vector<16x16xf32>
    %106 = arith.subf %30, %105 : vector<16x16xf32>
    %cst_31 = arith.constant 1.000000e+04 : f32
    %107 = vector.broadcast %cst_31 : f32 to vector<16x16xf32>
    %108 = arith.mulf %106, %107 : vector<16x16xf32>
    %cst_32 = arith.constant 1.000000e+00 : f32
    %109 = vector.broadcast %cst_32 : f32 to vector<16x16xf32>
    %110 = arith.subf %27, %109 : vector<16x16xf32>
    %cst_33 = arith.constant 1.000000e+09 : f32
    %111 = vector.broadcast %cst_33 : f32 to vector<16x16xf32>
    %112 = arith.mulf %110, %111 : vector<16x16xf32>
    %113 = arith.addf %108, %112 : vector<16x16xf32>
    %114 = vector.shape_cast %113 : vector<16x16xf32> to vector<1x16x16xf32>
    %115 = vector.shape_cast %114 : vector<1x16x16xf32> to vector<1x16x16xf32>
    %116 = vector.broadcast %115 : vector<1x16x16xf32> to vector<4x16x16xf32>
    %117 = arith.truncf %84 : vector<16x64xf32> to vector<16x64xbf16>
    %c0_34 = arith.constant 0 : index
    %c0_35 = arith.constant 0 : index
    %c0_36 = arith.constant 0 : index
    %118 = vector.load %arg6[%c0_34, %c0_35, %c0_36] : memref<2x64x192xbf16, #tpu.memory_space<vmem>>, vector<1x64x192xbf16>
    %119 = vector.shape_cast %118 : vector<1x64x192xbf16> to vector<64x192xbf16>
    %cst_37 = arith.constant dense<0.000000e+00> : vector<16x192xf32>
    %120 = tpu.matmul %117, %119, %cst_37 {dimension_numbers = #tpu.dot_dimension_numbers<[1], [0], [0], [1], [0, 0, 1, 1], [], []>} : vector<16x64xbf16>, vector<64x192xbf16>, vector<16x192xf32> -> vector<16x192xf32>
    %c0_38 = arith.constant 0 : index
    %c0_39 = arith.constant 0 : index
    %c0_40 = arith.constant 0 : index
    %121 = vector.load %arg7[%c0_38, %c0_39, %c0_40] : memref<2x1x192xf32, #tpu.memory_space<vmem>>, vector<1x1x192xf32>
    %122 = vector.shape_cast %121 : vector<1x1x192xf32> to vector<1x192xf32>
    %123 = vector.broadcast %122 : vector<1x192xf32> to vector<16x192xf32>
    %124 = arith.addf %120, %123 : vector<16x192xf32>
    %125 = vector.extract_strided_slice %124 {offsets = [0, 0], sizes = [16, 16], strides = [1, 1]} : vector<16x192xf32> to vector<16x16xf32>
    %126 = vector.extract_strided_slice %124 {offsets = [0, 16], sizes = [16, 16], strides = [1, 1]} : vector<16x192xf32> to vector<16x16xf32>
    %127 = vector.extract_strided_slice %124 {offsets = [0, 32], sizes = [16, 16], strides = [1, 1]} : vector<16x192xf32> to vector<16x16xf32>
    %128 = vector.extract_strided_slice %124 {offsets = [0, 48], sizes = [16, 16], strides = [1, 1]} : vector<16x192xf32> to vector<16x16xf32>
    %129 = vector.shape_cast %125 : vector<16x16xf32> to vector<1x16x16xf32>
    %130 = vector.shape_cast %126 : vector<16x16xf32> to vector<1x16x16xf32>
    %131 = vector.shape_cast %127 : vector<16x16xf32> to vector<1x16x16xf32>
    %132 = vector.shape_cast %128 : vector<16x16xf32> to vector<1x16x16xf32>
    %133 = tpu.concatenate %129, %130, %131, %132 in 0 : vector<1x16x16xf32>, vector<1x16x16xf32>, vector<1x16x16xf32>, vector<1x16x16xf32> -> vector<4x16x16xf32>
    %134 = vector.extract_strided_slice %124 {offsets = [0, 64], sizes = [16, 16], strides = [1, 1]} : vector<16x192xf32> to vector<16x16xf32>
    %135 = vector.extract_strided_slice %124 {offsets = [0, 80], sizes = [16, 16], strides = [1, 1]} : vector<16x192xf32> to vector<16x16xf32>
    %136 = vector.extract_strided_slice %124 {offsets = [0, 96], sizes = [16, 16], strides = [1, 1]} : vector<16x192xf32> to vector<16x16xf32>
    %137 = vector.extract_strided_slice %124 {offsets = [0, 112], sizes = [16, 16], strides = [1, 1]} : vector<16x192xf32> to vector<16x16xf32>
    %138 = vector.shape_cast %134 : vector<16x16xf32> to vector<1x16x16xf32>
    %139 = vector.shape_cast %135 : vector<16x16xf32> to vector<1x16x16xf32>
    %140 = vector.shape_cast %136 : vector<16x16xf32> to vector<1x16x16xf32>
    %141 = vector.shape_cast %137 : vector<16x16xf32> to vector<1x16x16xf32>
    %142 = tpu.concatenate %138, %139, %140, %141 in 0 : vector<1x16x16xf32>, vector<1x16x16xf32>, vector<1x16x16xf32>, vector<1x16x16xf32> -> vector<4x16x16xf32>
    %143 = vector.extract_strided_slice %124 {offsets = [0, 128], sizes = [16, 16], strides = [1, 1]} : vector<16x192xf32> to vector<16x16xf32>
    %144 = vector.extract_strided_slice %124 {offsets = [0, 144], sizes = [16, 16], strides = [1, 1]} : vector<16x192xf32> to vector<16x16xf32>
    %145 = vector.extract_strided_slice %124 {offsets = [0, 160], sizes = [16, 16], strides = [1, 1]} : vector<16x192xf32> to vector<16x16xf32>
    %146 = vector.extract_strided_slice %124 {offsets = [0, 176], sizes = [16, 16], strides = [1, 1]} : vector<16x192xf32> to vector<16x16xf32>
    %147 = vector.shape_cast %143 : vector<16x16xf32> to vector<1x16x16xf32>
    %148 = vector.shape_cast %144 : vector<16x16xf32> to vector<1x16x16xf32>
    %149 = vector.shape_cast %145 : vector<16x16xf32> to vector<1x16x16xf32>
    %150 = vector.shape_cast %146 : vector<16x16xf32> to vector<1x16x16xf32>
    %151 = tpu.concatenate %147, %148, %149, %150 in 0 : vector<1x16x16xf32>, vector<1x16x16xf32>, vector<1x16x16xf32>, vector<1x16x16xf32> -> vector<4x16x16xf32>
    %152 = arith.truncf %133 : vector<4x16x16xf32> to vector<4x16x16xbf16>
    %153 = arith.truncf %142 : vector<4x16x16xf32> to vector<4x16x16xbf16>
    "tpu.trace_start"() <{level = 10 : i32, message = "hqd,hkd->hqk"}> : () -> ()
    %cst_41 = arith.constant dense<0.000000e+00> : vector<4x16x16xf32>
    %154 = tpu.matmul %152, %153, %cst_41 {dimension_numbers = #tpu.dot_dimension_numbers<[2], [2], [1], [1], [0, 0, 0, 1, 1, 1], [0], [0]>} : vector<4x16x16xbf16>, vector<4x16x16xbf16>, vector<4x16x16xf32> -> vector<4x16x16xf32>
    "tpu.trace_stop"() : () -> ()
    %cst_42 = arith.constant 2.500000e-01 : f32
    %155 = vector.broadcast %cst_42 : f32 to vector<4x16x16xf32>
    %156 = arith.mulf %154, %155 : vector<4x16x16xf32>
    %157 = arith.addf %156, %116 : vector<4x16x16xf32>
    %cst_43 = arith.constant dense<0xFF800000> : vector<4x16xf32>
    %158 = vector.multi_reduction <maximumf>, %157, %cst_43 [2] : vector<4x16x16xf32> to vector<4x16xf32>
    %159 = vector.shape_cast %158 : vector<4x16xf32> to vector<4x16x1xf32>
    %160 = vector.broadcast %159 : vector<4x16x1xf32> to vector<4x16x16xf32>
    %161 = arith.subf %157, %160 : vector<4x16x16xf32>
    %162 = math.exp %161 : vector<4x16x16xf32>
    %cst_44 = arith.constant dense<0.000000e+00> : vector<4x16xf32>
    %163 = vector.multi_reduction <add>, %162, %cst_44 [2] : vector<4x16x16xf32> to vector<4x16xf32>
    %164 = vector.shape_cast %163 : vector<4x16xf32> to vector<4x16x1xf32>
    %165 = tpu.reciprocal %164 {approx = true} : vector<4x16x1xf32> -> vector<4x16x1xf32>
    %166 = arith.mulf %164, %165 : vector<4x16x1xf32>
    %cst_45 = arith.constant 2.000000e+00 : f32
    %167 = vector.broadcast %cst_45 : f32 to vector<4x16x1xf32>
    %168 = arith.subf %167, %166 : vector<4x16x1xf32>
    %169 = arith.mulf %165, %168 : vector<4x16x1xf32>
    %170 = vector.broadcast %169 : vector<4x16x1xf32> to vector<4x16x16xf32>
    %171 = arith.mulf %162, %170 : vector<4x16x16xf32>
    %172 = arith.truncf %171 : vector<4x16x16xf32> to vector<4x16x16xbf16>
    %173 = arith.truncf %151 : vector<4x16x16xf32> to vector<4x16x16xbf16>
    "tpu.trace_start"() <{level = 10 : i32, message = "hqk,hkd->hqd"}> : () -> ()
    %cst_46 = arith.constant dense<0.000000e+00> : vector<4x16x16xf32>
    %174 = tpu.matmul %172, %173, %cst_46 {dimension_numbers = #tpu.dot_dimension_numbers<[2], [1], [1], [2], [0, 0, 0, 1, 1, 2], [0], [0]>} : vector<4x16x16xbf16>, vector<4x16x16xbf16>, vector<4x16x16xf32> -> vector<4x16x16xf32>
    "tpu.trace_stop"() : () -> ()
    %175 = vector.extract_strided_slice %174 {offsets = [0, 0, 0], sizes = [1, 16, 16], strides = [1, 1, 1]} : vector<4x16x16xf32> to vector<1x16x16xf32>
    %176 = vector.shape_cast %175 : vector<1x16x16xf32> to vector<16x16xf32>
    %177 = vector.extract_strided_slice %174 {offsets = [1, 0, 0], sizes = [1, 16, 16], strides = [1, 1, 1]} : vector<4x16x16xf32> to vector<1x16x16xf32>
    %178 = vector.shape_cast %177 : vector<1x16x16xf32> to vector<16x16xf32>
    %179 = vector.extract_strided_slice %174 {offsets = [2, 0, 0], sizes = [1, 16, 16], strides = [1, 1, 1]} : vector<4x16x16xf32> to vector<1x16x16xf32>
    %180 = vector.shape_cast %179 : vector<1x16x16xf32> to vector<16x16xf32>
    %181 = vector.extract_strided_slice %174 {offsets = [3, 0, 0], sizes = [1, 16, 16], strides = [1, 1, 1]} : vector<4x16x16xf32> to vector<1x16x16xf32>
    %182 = vector.shape_cast %181 : vector<1x16x16xf32> to vector<16x16xf32>
    %183 = tpu.concatenate %176, %178, %180, %182 in 1 : vector<16x16xf32>, vector<16x16xf32>, vector<16x16xf32>, vector<16x16xf32> -> vector<16x64xf32>
    %184 = arith.truncf %183 : vector<16x64xf32> to vector<16x64xbf16>
    %c0_47 = arith.constant 0 : index
    %c0_48 = arith.constant 0 : index
    %c0_49 = arith.constant 0 : index
    %185 = vector.load %arg8[%c0_47, %c0_48, %c0_49] : memref<2x64x64xbf16, #tpu.memory_space<vmem>>, vector<1x64x64xbf16>
    %186 = vector.shape_cast %185 : vector<1x64x64xbf16> to vector<64x64xbf16>
    %cst_50 = arith.constant dense<0.000000e+00> : vector<16x64xf32>
    %187 = tpu.matmul %184, %186, %cst_50 {dimension_numbers = #tpu.dot_dimension_numbers<[1], [0], [0], [1], [0, 0, 1, 1], [], []>} : vector<16x64xbf16>, vector<64x64xbf16>, vector<16x64xf32> -> vector<16x64xf32>
    %c0_51 = arith.constant 0 : index
    %c0_52 = arith.constant 0 : index
    %c0_53 = arith.constant 0 : index
    %188 = vector.load %arg9[%c0_51, %c0_52, %c0_53] : memref<2x1x64xf32, #tpu.memory_space<vmem>>, vector<1x1x64xf32>
    %189 = vector.shape_cast %188 : vector<1x1x64xf32> to vector<1x64xf32>
    %190 = vector.broadcast %189 : vector<1x64xf32> to vector<16x64xf32>
    %191 = arith.addf %187, %190 : vector<16x64xf32>
    %192 = arith.addf %84, %191 : vector<16x64xf32>
    %c0_54 = arith.constant 0 : index
    %c0_55 = arith.constant 0 : index
    %c0_56 = arith.constant 0 : index
    %193 = vector.load %arg10[%c0_54, %c0_55, %c0_56] : memref<2x1x64xf32, #tpu.memory_space<vmem>>, vector<1x1x64xf32>
    %194 = vector.shape_cast %193 : vector<1x1x64xf32> to vector<1x64xf32>
    %c0_57 = arith.constant 0 : index
    %c0_58 = arith.constant 0 : index
    %c0_59 = arith.constant 0 : index
    %195 = vector.load %arg11[%c0_57, %c0_58, %c0_59] : memref<2x1x64xf32, #tpu.memory_space<vmem>>, vector<1x1x64xf32>
    %196 = vector.shape_cast %195 : vector<1x1x64xf32> to vector<1x64xf32>
    %cst_60 = arith.constant dense<0.000000e+00> : vector<16xf32>
    %197 = vector.multi_reduction <add>, %192, %cst_60 [1] : vector<16x64xf32> to vector<16xf32>
    %198 = vector.shape_cast %197 : vector<16xf32> to vector<16x1xf32>
    %cst_61 = arith.constant 6.400000e+01 : f32
    %199 = vector.broadcast %cst_61 : f32 to vector<16x1xf32>
    %200 = arith.divf %198, %199 : vector<16x1xf32>
    %201 = vector.broadcast %200 : vector<16x1xf32> to vector<16x64xf32>
    %202 = arith.subf %192, %201 : vector<16x64xf32>
    %203 = arith.mulf %202, %202 : vector<16x64xf32>
    %cst_62 = arith.constant dense<0.000000e+00> : vector<16xf32>
    %204 = vector.multi_reduction <add>, %203, %cst_62 [1] : vector<16x64xf32> to vector<16xf32>
    %205 = vector.shape_cast %204 : vector<16xf32> to vector<16x1xf32>
    %cst_63 = arith.constant 6.400000e+01 : f32
    %206 = vector.broadcast %cst_63 : f32 to vector<16x1xf32>
    %207 = arith.divf %205, %206 : vector<16x1xf32>
    %cst_64 = arith.constant 9.99999996E-13 : f32
    %208 = vector.broadcast %cst_64 : f32 to vector<16x1xf32>
    %209 = arith.addf %207, %208 : vector<16x1xf32>
    %210 = math.rsqrt %209 : vector<16x1xf32>
    %211 = vector.broadcast %210 : vector<16x1xf32> to vector<16x64xf32>
    %212 = arith.mulf %202, %211 : vector<16x64xf32>
    %213 = vector.broadcast %194 : vector<1x64xf32> to vector<16x64xf32>
    %214 = arith.mulf %212, %213 : vector<16x64xf32>
    %215 = vector.broadcast %196 : vector<1x64xf32> to vector<16x64xf32>
    %216 = arith.addf %214, %215 : vector<16x64xf32>
    %217 = arith.truncf %216 : vector<16x64xf32> to vector<16x64xbf16>
    %c0_65 = arith.constant 0 : index
    %c0_66 = arith.constant 0 : index
    %c0_67 = arith.constant 0 : index
    %218 = vector.load %arg12[%c0_65, %c0_66, %c0_67] : memref<2x64x256xbf16, #tpu.memory_space<vmem>>, vector<1x64x256xbf16>
    %219 = vector.shape_cast %218 : vector<1x64x256xbf16> to vector<64x256xbf16>
    %cst_68 = arith.constant dense<0.000000e+00> : vector<16x256xf32>
    %220 = tpu.matmul %217, %219, %cst_68 {dimension_numbers = #tpu.dot_dimension_numbers<[1], [0], [0], [1], [0, 0, 1, 1], [], []>} : vector<16x64xbf16>, vector<64x256xbf16>, vector<16x256xf32> -> vector<16x256xf32>
    %c0_69 = arith.constant 0 : index
    %c0_70 = arith.constant 0 : index
    %c0_71 = arith.constant 0 : index
    %221 = vector.load %arg13[%c0_69, %c0_70, %c0_71] : memref<2x1x256xf32, #tpu.memory_space<vmem>>, vector<1x1x256xf32>
    %222 = vector.shape_cast %221 : vector<1x1x256xf32> to vector<1x256xf32>
    %223 = vector.broadcast %222 : vector<1x256xf32> to vector<16x256xf32>
    %224 = arith.addf %220, %223 : vector<16x256xf32>
    %cst_72 = arith.constant 5.000000e-01 : f32
    %225 = vector.broadcast %cst_72 : f32 to vector<16x256xf32>
    %226 = arith.mulf %225, %224 : vector<16x256xf32>
    %cst_73 = arith.constant 0.707106769 : f32
    %227 = vector.broadcast %cst_73 : f32 to vector<16x256xf32>
    %228 = arith.mulf %224, %227 : vector<16x256xf32>
    %229 = math.erf %228 : vector<16x256xf32>
    %cst_74 = arith.constant 1.000000e+00 : f32
    %230 = vector.broadcast %cst_74 : f32 to vector<16x256xf32>
    %231 = arith.addf %230, %229 : vector<16x256xf32>
    %232 = arith.mulf %226, %231 : vector<16x256xf32>
    %233 = arith.truncf %232 : vector<16x256xf32> to vector<16x256xbf16>
    %c0_75 = arith.constant 0 : index
    %c0_76 = arith.constant 0 : index
    %c0_77 = arith.constant 0 : index
    %234 = vector.load %arg14[%c0_75, %c0_76, %c0_77] : memref<2x256x64xbf16, #tpu.memory_space<vmem>>, vector<1x256x64xbf16>
    %235 = vector.shape_cast %234 : vector<1x256x64xbf16> to vector<256x64xbf16>
    %cst_78 = arith.constant dense<0.000000e+00> : vector<16x64xf32>
    %236 = tpu.matmul %233, %235, %cst_78 {dimension_numbers = #tpu.dot_dimension_numbers<[1], [0], [0], [1], [0, 0, 1, 1], [], []>} : vector<16x256xbf16>, vector<256x64xbf16>, vector<16x64xf32> -> vector<16x64xf32>
    %c0_79 = arith.constant 0 : index
    %c0_80 = arith.constant 0 : index
    %c0_81 = arith.constant 0 : index
    %237 = vector.load %arg15[%c0_79, %c0_80, %c0_81] : memref<2x1x64xf32, #tpu.memory_space<vmem>>, vector<1x1x64xf32>
    %238 = vector.shape_cast %237 : vector<1x1x64xf32> to vector<1x64xf32>
    %239 = vector.broadcast %238 : vector<1x64xf32> to vector<16x64xf32>
    %240 = arith.addf %236, %239 : vector<16x64xf32>
    %241 = arith.addf %216, %240 : vector<16x64xf32>
    %c0_82 = arith.constant 0 : index
    %c0_83 = arith.constant 0 : index
    %c0_84 = arith.constant 0 : index
    %242 = vector.load %arg16[%c0_82, %c0_83, %c0_84] : memref<2x1x64xf32, #tpu.memory_space<vmem>>, vector<1x1x64xf32>
    %243 = vector.shape_cast %242 : vector<1x1x64xf32> to vector<1x64xf32>
    %c0_85 = arith.constant 0 : index
    %c0_86 = arith.constant 0 : index
    %c0_87 = arith.constant 0 : index
    %244 = vector.load %arg17[%c0_85, %c0_86, %c0_87] : memref<2x1x64xf32, #tpu.memory_space<vmem>>, vector<1x1x64xf32>
    %245 = vector.shape_cast %244 : vector<1x1x64xf32> to vector<1x64xf32>
    %cst_88 = arith.constant dense<0.000000e+00> : vector<16xf32>
    %246 = vector.multi_reduction <add>, %241, %cst_88 [1] : vector<16x64xf32> to vector<16xf32>
    %247 = vector.shape_cast %246 : vector<16xf32> to vector<16x1xf32>
    %cst_89 = arith.constant 6.400000e+01 : f32
    %248 = vector.broadcast %cst_89 : f32 to vector<16x1xf32>
    %249 = arith.divf %247, %248 : vector<16x1xf32>
    %250 = vector.broadcast %249 : vector<16x1xf32> to vector<16x64xf32>
    %251 = arith.subf %241, %250 : vector<16x64xf32>
    %252 = arith.mulf %251, %251 : vector<16x64xf32>
    %cst_90 = arith.constant dense<0.000000e+00> : vector<16xf32>
    %253 = vector.multi_reduction <add>, %252, %cst_90 [1] : vector<16x64xf32> to vector<16xf32>
    %254 = vector.shape_cast %253 : vector<16xf32> to vector<16x1xf32>
    %cst_91 = arith.constant 6.400000e+01 : f32
    %255 = vector.broadcast %cst_91 : f32 to vector<16x1xf32>
    %256 = arith.divf %254, %255 : vector<16x1xf32>
    %cst_92 = arith.constant 9.99999996E-13 : f32
    %257 = vector.broadcast %cst_92 : f32 to vector<16x1xf32>
    %258 = arith.addf %256, %257 : vector<16x1xf32>
    %259 = math.rsqrt %258 : vector<16x1xf32>
    %260 = vector.broadcast %259 : vector<16x1xf32> to vector<16x64xf32>
    %261 = arith.mulf %251, %260 : vector<16x64xf32>
    %262 = vector.broadcast %243 : vector<1x64xf32> to vector<16x64xf32>
    %263 = arith.mulf %261, %262 : vector<16x64xf32>
    %264 = vector.broadcast %245 : vector<1x64xf32> to vector<16x64xf32>
    %265 = arith.addf %263, %264 : vector<16x64xf32>
    %266 = arith.truncf %265 : vector<16x64xf32> to vector<16x64xbf16>
    %c1_93 = arith.constant 1 : index
    %c0_94 = arith.constant 0 : index
    %c0_95 = arith.constant 0 : index
    %267 = vector.load %arg6[%c1_93, %c0_94, %c0_95] : memref<2x64x192xbf16, #tpu.memory_space<vmem>>, vector<1x64x192xbf16>
    %268 = vector.shape_cast %267 : vector<1x64x192xbf16> to vector<64x192xbf16>
    %cst_96 = arith.constant dense<0.000000e+00> : vector<16x192xf32>
    %269 = tpu.matmul %266, %268, %cst_96 {dimension_numbers = #tpu.dot_dimension_numbers<[1], [0], [0], [1], [0, 0, 1, 1], [], []>} : vector<16x64xbf16>, vector<64x192xbf16>, vector<16x192xf32> -> vector<16x192xf32>
    %c1_97 = arith.constant 1 : index
    %c0_98 = arith.constant 0 : index
    %c0_99 = arith.constant 0 : index
    %270 = vector.load %arg7[%c1_97, %c0_98, %c0_99] : memref<2x1x192xf32, #tpu.memory_space<vmem>>, vector<1x1x192xf32>
    %271 = vector.shape_cast %270 : vector<1x1x192xf32> to vector<1x192xf32>
    %272 = vector.broadcast %271 : vector<1x192xf32> to vector<16x192xf32>
    %273 = arith.addf %269, %272 : vector<16x192xf32>
    %274 = vector.extract_strided_slice %273 {offsets = [0, 0], sizes = [16, 16], strides = [1, 1]} : vector<16x192xf32> to vector<16x16xf32>
    %275 = vector.extract_strided_slice %273 {offsets = [0, 16], sizes = [16, 16], strides = [1, 1]} : vector<16x192xf32> to vector<16x16xf32>
    %276 = vector.extract_strided_slice %273 {offsets = [0, 32], sizes = [16, 16], strides = [1, 1]} : vector<16x192xf32> to vector<16x16xf32>
    %277 = vector.extract_strided_slice %273 {offsets = [0, 48], sizes = [16, 16], strides = [1, 1]} : vector<16x192xf32> to vector<16x16xf32>
    %278 = vector.shape_cast %274 : vector<16x16xf32> to vector<1x16x16xf32>
    %279 = vector.shape_cast %275 : vector<16x16xf32> to vector<1x16x16xf32>
    %280 = vector.shape_cast %276 : vector<16x16xf32> to vector<1x16x16xf32>
    %281 = vector.shape_cast %277 : vector<16x16xf32> to vector<1x16x16xf32>
    %282 = tpu.concatenate %278, %279, %280, %281 in 0 : vector<1x16x16xf32>, vector<1x16x16xf32>, vector<1x16x16xf32>, vector<1x16x16xf32> -> vector<4x16x16xf32>
    %283 = vector.extract_strided_slice %273 {offsets = [0, 64], sizes = [16, 16], strides = [1, 1]} : vector<16x192xf32> to vector<16x16xf32>
    %284 = vector.extract_strided_slice %273 {offsets = [0, 80], sizes = [16, 16], strides = [1, 1]} : vector<16x192xf32> to vector<16x16xf32>
    %285 = vector.extract_strided_slice %273 {offsets = [0, 96], sizes = [16, 16], strides = [1, 1]} : vector<16x192xf32> to vector<16x16xf32>
    %286 = vector.extract_strided_slice %273 {offsets = [0, 112], sizes = [16, 16], strides = [1, 1]} : vector<16x192xf32> to vector<16x16xf32>
    %287 = vector.shape_cast %283 : vector<16x16xf32> to vector<1x16x16xf32>
    %288 = vector.shape_cast %284 : vector<16x16xf32> to vector<1x16x16xf32>
    %289 = vector.shape_cast %285 : vector<16x16xf32> to vector<1x16x16xf32>
    %290 = vector.shape_cast %286 : vector<16x16xf32> to vector<1x16x16xf32>
    %291 = tpu.concatenate %287, %288, %289, %290 in 0 : vector<1x16x16xf32>, vector<1x16x16xf32>, vector<1x16x16xf32>, vector<1x16x16xf32> -> vector<4x16x16xf32>
    %292 = vector.extract_strided_slice %273 {offsets = [0, 128], sizes = [16, 16], strides = [1, 1]} : vector<16x192xf32> to vector<16x16xf32>
    %293 = vector.extract_strided_slice %273 {offsets = [0, 144], sizes = [16, 16], strides = [1, 1]} : vector<16x192xf32> to vector<16x16xf32>
    %294 = vector.extract_strided_slice %273 {offsets = [0, 160], sizes = [16, 16], strides = [1, 1]} : vector<16x192xf32> to vector<16x16xf32>
    %295 = vector.extract_strided_slice %273 {offsets = [0, 176], sizes = [16, 16], strides = [1, 1]} : vector<16x192xf32> to vector<16x16xf32>
    %296 = vector.shape_cast %292 : vector<16x16xf32> to vector<1x16x16xf32>
    %297 = vector.shape_cast %293 : vector<16x16xf32> to vector<1x16x16xf32>
    %298 = vector.shape_cast %294 : vector<16x16xf32> to vector<1x16x16xf32>
    %299 = vector.shape_cast %295 : vector<16x16xf32> to vector<1x16x16xf32>
    %300 = tpu.concatenate %296, %297, %298, %299 in 0 : vector<1x16x16xf32>, vector<1x16x16xf32>, vector<1x16x16xf32>, vector<1x16x16xf32> -> vector<4x16x16xf32>
    %301 = arith.truncf %282 : vector<4x16x16xf32> to vector<4x16x16xbf16>
    %302 = arith.truncf %291 : vector<4x16x16xf32> to vector<4x16x16xbf16>
    "tpu.trace_start"() <{level = 10 : i32, message = "hqd,hkd->hqk"}> : () -> ()
    %cst_100 = arith.constant dense<0.000000e+00> : vector<4x16x16xf32>
    %303 = tpu.matmul %301, %302, %cst_100 {dimension_numbers = #tpu.dot_dimension_numbers<[2], [2], [1], [1], [0, 0, 0, 1, 1, 1], [0], [0]>} : vector<4x16x16xbf16>, vector<4x16x16xbf16>, vector<4x16x16xf32> -> vector<4x16x16xf32>
    "tpu.trace_stop"() : () -> ()
    %cst_101 = arith.constant 2.500000e-01 : f32
    %304 = vector.broadcast %cst_101 : f32 to vector<4x16x16xf32>
    %305 = arith.mulf %303, %304 : vector<4x16x16xf32>
    %306 = arith.addf %305, %116 : vector<4x16x16xf32>
    %cst_102 = arith.constant dense<0xFF800000> : vector<4x16xf32>
    %307 = vector.multi_reduction <maximumf>, %306, %cst_102 [2] : vector<4x16x16xf32> to vector<4x16xf32>
    %308 = vector.shape_cast %307 : vector<4x16xf32> to vector<4x16x1xf32>
    %309 = vector.broadcast %308 : vector<4x16x1xf32> to vector<4x16x16xf32>
    %310 = arith.subf %306, %309 : vector<4x16x16xf32>
    %311 = math.exp %310 : vector<4x16x16xf32>
    %cst_103 = arith.constant dense<0.000000e+00> : vector<4x16xf32>
    %312 = vector.multi_reduction <add>, %311, %cst_103 [2] : vector<4x16x16xf32> to vector<4x16xf32>
    %313 = vector.shape_cast %312 : vector<4x16xf32> to vector<4x16x1xf32>
    %314 = tpu.reciprocal %313 {approx = true} : vector<4x16x1xf32> -> vector<4x16x1xf32>
    %315 = arith.mulf %313, %314 : vector<4x16x1xf32>
    %cst_104 = arith.constant 2.000000e+00 : f32
    %316 = vector.broadcast %cst_104 : f32 to vector<4x16x1xf32>
    %317 = arith.subf %316, %315 : vector<4x16x1xf32>
    %318 = arith.mulf %314, %317 : vector<4x16x1xf32>
    %319 = vector.broadcast %318 : vector<4x16x1xf32> to vector<4x16x16xf32>
    %320 = arith.mulf %311, %319 : vector<4x16x16xf32>
    %321 = arith.truncf %320 : vector<4x16x16xf32> to vector<4x16x16xbf16>
    %322 = arith.truncf %300 : vector<4x16x16xf32> to vector<4x16x16xbf16>
    "tpu.trace_start"() <{level = 10 : i32, message = "hqk,hkd->hqd"}> : () -> ()
    %cst_105 = arith.constant dense<0.000000e+00> : vector<4x16x16xf32>
    %323 = tpu.matmul %321, %322, %cst_105 {dimension_numbers = #tpu.dot_dimension_numbers<[2], [1], [1], [2], [0, 0, 0, 1, 1, 2], [0], [0]>} : vector<4x16x16xbf16>, vector<4x16x16xbf16>, vector<4x16x16xf32> -> vector<4x16x16xf32>
    "tpu.trace_stop"() : () -> ()
    %324 = vector.extract_strided_slice %323 {offsets = [0, 0, 0], sizes = [1, 16, 16], strides = [1, 1, 1]} : vector<4x16x16xf32> to vector<1x16x16xf32>
    %325 = vector.shape_cast %324 : vector<1x16x16xf32> to vector<16x16xf32>
    %326 = vector.extract_strided_slice %323 {offsets = [1, 0, 0], sizes = [1, 16, 16], strides = [1, 1, 1]} : vector<4x16x16xf32> to vector<1x16x16xf32>
    %327 = vector.shape_cast %326 : vector<1x16x16xf32> to vector<16x16xf32>
    %328 = vector.extract_strided_slice %323 {offsets = [2, 0, 0], sizes = [1, 16, 16], strides = [1, 1, 1]} : vector<4x16x16xf32> to vector<1x16x16xf32>
    %329 = vector.shape_cast %328 : vector<1x16x16xf32> to vector<16x16xf32>
    %330 = vector.extract_strided_slice %323 {offsets = [3, 0, 0], sizes = [1, 16, 16], strides = [1, 1, 1]} : vector<4x16x16xf32> to vector<1x16x16xf32>
    %331 = vector.shape_cast %330 : vector<1x16x16xf32> to vector<16x16xf32>
    %332 = tpu.concatenate %325, %327, %329, %331 in 1 : vector<16x16xf32>, vector<16x16xf32>, vector<16x16xf32>, vector<16x16xf32> -> vector<16x64xf32>
    %333 = arith.truncf %332 : vector<16x64xf32> to vector<16x64xbf16>
    %c1_106 = arith.constant 1 : index
    %c0_107 = arith.constant 0 : index
    %c0_108 = arith.constant 0 : index
    %334 = vector.load %arg8[%c1_106, %c0_107, %c0_108] : memref<2x64x64xbf16, #tpu.memory_space<vmem>>, vector<1x64x64xbf16>
    %335 = vector.shape_cast %334 : vector<1x64x64xbf16> to vector<64x64xbf16>
    %cst_109 = arith.constant dense<0.000000e+00> : vector<16x64xf32>
    %336 = tpu.matmul %333, %335, %cst_109 {dimension_numbers = #tpu.dot_dimension_numbers<[1], [0], [0], [1], [0, 0, 1, 1], [], []>} : vector<16x64xbf16>, vector<64x64xbf16>, vector<16x64xf32> -> vector<16x64xf32>
    %c1_110 = arith.constant 1 : index
    %c0_111 = arith.constant 0 : index
    %c0_112 = arith.constant 0 : index
    %337 = vector.load %arg9[%c1_110, %c0_111, %c0_112] : memref<2x1x64xf32, #tpu.memory_space<vmem>>, vector<1x1x64xf32>
    %338 = vector.shape_cast %337 : vector<1x1x64xf32> to vector<1x64xf32>
    %339 = vector.broadcast %338 : vector<1x64xf32> to vector<16x64xf32>
    %340 = arith.addf %336, %339 : vector<16x64xf32>
    %341 = arith.addf %265, %340 : vector<16x64xf32>
    %c1_113 = arith.constant 1 : index
    %c0_114 = arith.constant 0 : index
    %c0_115 = arith.constant 0 : index
    %342 = vector.load %arg10[%c1_113, %c0_114, %c0_115] : memref<2x1x64xf32, #tpu.memory_space<vmem>>, vector<1x1x64xf32>
    %343 = vector.shape_cast %342 : vector<1x1x64xf32> to vector<1x64xf32>
    %c1_116 = arith.constant 1 : index
    %c0_117 = arith.constant 0 : index
    %c0_118 = arith.constant 0 : index
    %344 = vector.load %arg11[%c1_116, %c0_117, %c0_118] : memref<2x1x64xf32, #tpu.memory_space<vmem>>, vector<1x1x64xf32>
    %345 = vector.shape_cast %344 : vector<1x1x64xf32> to vector<1x64xf32>
    %cst_119 = arith.constant dense<0.000000e+00> : vector<16xf32>
    %346 = vector.multi_reduction <add>, %341, %cst_119 [1] : vector<16x64xf32> to vector<16xf32>
    %347 = vector.shape_cast %346 : vector<16xf32> to vector<16x1xf32>
    %cst_120 = arith.constant 6.400000e+01 : f32
    %348 = vector.broadcast %cst_120 : f32 to vector<16x1xf32>
    %349 = arith.divf %347, %348 : vector<16x1xf32>
    %350 = vector.broadcast %349 : vector<16x1xf32> to vector<16x64xf32>
    %351 = arith.subf %341, %350 : vector<16x64xf32>
    %352 = arith.mulf %351, %351 : vector<16x64xf32>
    %cst_121 = arith.constant dense<0.000000e+00> : vector<16xf32>
    %353 = vector.multi_reduction <add>, %352, %cst_121 [1] : vector<16x64xf32> to vector<16xf32>
    %354 = vector.shape_cast %353 : vector<16xf32> to vector<16x1xf32>
    %cst_122 = arith.constant 6.400000e+01 : f32
    %355 = vector.broadcast %cst_122 : f32 to vector<16x1xf32>
    %356 = arith.divf %354, %355 : vector<16x1xf32>
    %cst_123 = arith.constant 9.99999996E-13 : f32
    %357 = vector.broadcast %cst_123 : f32 to vector<16x1xf32>
    %358 = arith.addf %356, %357 : vector<16x1xf32>
    %359 = math.rsqrt %358 : vector<16x1xf32>
    %360 = vector.broadcast %359 : vector<16x1xf32> to vector<16x64xf32>
    %361 = arith.mulf %351, %360 : vector<16x64xf32>
    %362 = vector.broadcast %343 : vector<1x64xf32> to vector<16x64xf32>
    %363 = arith.mulf %361, %362 : vector<16x64xf32>
    %364 = vector.broadcast %345 : vector<1x64xf32> to vector<16x64xf32>
    %365 = arith.addf %363, %364 : vector<16x64xf32>
    %366 = arith.truncf %365 : vector<16x64xf32> to vector<16x64xbf16>
    %c1_124 = arith.constant 1 : index
    %c0_125 = arith.constant 0 : index
    %c0_126 = arith.constant 0 : index
    %367 = vector.load %arg12[%c1_124, %c0_125, %c0_126] : memref<2x64x256xbf16, #tpu.memory_space<vmem>>, vector<1x64x256xbf16>
    %368 = vector.shape_cast %367 : vector<1x64x256xbf16> to vector<64x256xbf16>
    %cst_127 = arith.constant dense<0.000000e+00> : vector<16x256xf32>
    %369 = tpu.matmul %366, %368, %cst_127 {dimension_numbers = #tpu.dot_dimension_numbers<[1], [0], [0], [1], [0, 0, 1, 1], [], []>} : vector<16x64xbf16>, vector<64x256xbf16>, vector<16x256xf32> -> vector<16x256xf32>
    %c1_128 = arith.constant 1 : index
    %c0_129 = arith.constant 0 : index
    %c0_130 = arith.constant 0 : index
    %370 = vector.load %arg13[%c1_128, %c0_129, %c0_130] : memref<2x1x256xf32, #tpu.memory_space<vmem>>, vector<1x1x256xf32>
    %371 = vector.shape_cast %370 : vector<1x1x256xf32> to vector<1x256xf32>
    %372 = vector.broadcast %371 : vector<1x256xf32> to vector<16x256xf32>
    %373 = arith.addf %369, %372 : vector<16x256xf32>
    %cst_131 = arith.constant 5.000000e-01 : f32
    %374 = vector.broadcast %cst_131 : f32 to vector<16x256xf32>
    %375 = arith.mulf %374, %373 : vector<16x256xf32>
    %cst_132 = arith.constant 0.707106769 : f32
    %376 = vector.broadcast %cst_132 : f32 to vector<16x256xf32>
    %377 = arith.mulf %373, %376 : vector<16x256xf32>
    %378 = math.erf %377 : vector<16x256xf32>
    %cst_133 = arith.constant 1.000000e+00 : f32
    %379 = vector.broadcast %cst_133 : f32 to vector<16x256xf32>
    %380 = arith.addf %379, %378 : vector<16x256xf32>
    %381 = arith.mulf %375, %380 : vector<16x256xf32>
    %382 = arith.truncf %381 : vector<16x256xf32> to vector<16x256xbf16>
    %c1_134 = arith.constant 1 : index
    %c0_135 = arith.constant 0 : index
    %c0_136 = arith.constant 0 : index
    %383 = vector.load %arg14[%c1_134, %c0_135, %c0_136] : memref<2x256x64xbf16, #tpu.memory_space<vmem>>, vector<1x256x64xbf16>
    %384 = vector.shape_cast %383 : vector<1x256x64xbf16> to vector<256x64xbf16>
    %cst_137 = arith.constant dense<0.000000e+00> : vector<16x64xf32>
    %385 = tpu.matmul %382, %384, %cst_137 {dimension_numbers = #tpu.dot_dimension_numbers<[1], [0], [0], [1], [0, 0, 1, 1], [], []>} : vector<16x256xbf16>, vector<256x64xbf16>, vector<16x64xf32> -> vector<16x64xf32>
    %c1_138 = arith.constant 1 : index
    %c0_139 = arith.constant 0 : index
    %c0_140 = arith.constant 0 : index
    %386 = vector.load %arg15[%c1_138, %c0_139, %c0_140] : memref<2x1x64xf32, #tpu.memory_space<vmem>>, vector<1x1x64xf32>
    %387 = vector.shape_cast %386 : vector<1x1x64xf32> to vector<1x64xf32>
    %388 = vector.broadcast %387 : vector<1x64xf32> to vector<16x64xf32>
    %389 = arith.addf %385, %388 : vector<16x64xf32>
    %390 = arith.addf %365, %389 : vector<16x64xf32>
    %c1_141 = arith.constant 1 : index
    %c0_142 = arith.constant 0 : index
    %c0_143 = arith.constant 0 : index
    %391 = vector.load %arg16[%c1_141, %c0_142, %c0_143] : memref<2x1x64xf32, #tpu.memory_space<vmem>>, vector<1x1x64xf32>
    %392 = vector.shape_cast %391 : vector<1x1x64xf32> to vector<1x64xf32>
    %c1_144 = arith.constant 1 : index
    %c0_145 = arith.constant 0 : index
    %c0_146 = arith.constant 0 : index
    %393 = vector.load %arg17[%c1_144, %c0_145, %c0_146] : memref<2x1x64xf32, #tpu.memory_space<vmem>>, vector<1x1x64xf32>
    %394 = vector.shape_cast %393 : vector<1x1x64xf32> to vector<1x64xf32>
    %cst_147 = arith.constant dense<0.000000e+00> : vector<16xf32>
    %395 = vector.multi_reduction <add>, %390, %cst_147 [1] : vector<16x64xf32> to vector<16xf32>
    %396 = vector.shape_cast %395 : vector<16xf32> to vector<16x1xf32>
    %cst_148 = arith.constant 6.400000e+01 : f32
    %397 = vector.broadcast %cst_148 : f32 to vector<16x1xf32>
    %398 = arith.divf %396, %397 : vector<16x1xf32>
    %399 = vector.broadcast %398 : vector<16x1xf32> to vector<16x64xf32>
    %400 = arith.subf %390, %399 : vector<16x64xf32>
    %401 = arith.mulf %400, %400 : vector<16x64xf32>
    %cst_149 = arith.constant dense<0.000000e+00> : vector<16xf32>
    %402 = vector.multi_reduction <add>, %401, %cst_149 [1] : vector<16x64xf32> to vector<16xf32>
    %403 = vector.shape_cast %402 : vector<16xf32> to vector<16x1xf32>
    %cst_150 = arith.constant 6.400000e+01 : f32
    %404 = vector.broadcast %cst_150 : f32 to vector<16x1xf32>
    %405 = arith.divf %403, %404 : vector<16x1xf32>
    %cst_151 = arith.constant 9.99999996E-13 : f32
    %406 = vector.broadcast %cst_151 : f32 to vector<16x1xf32>
    %407 = arith.addf %405, %406 : vector<16x1xf32>
    %408 = math.rsqrt %407 : vector<16x1xf32>
    %409 = vector.broadcast %408 : vector<16x1xf32> to vector<16x64xf32>
    %410 = arith.mulf %400, %409 : vector<16x64xf32>
    %411 = vector.broadcast %392 : vector<1x64xf32> to vector<16x64xf32>
    %412 = arith.mulf %410, %411 : vector<16x64xf32>
    %413 = vector.broadcast %394 : vector<1x64xf32> to vector<16x64xf32>
    %414 = arith.addf %412, %413 : vector<16x64xf32>
    %415 = tpu.concatenate %414, %104 in 1 : vector<16x64xf32>, vector<16x64xf32> -> vector<16x128xf32>
    %c0_152 = arith.constant 0 : index
    %c0_153 = arith.constant 0 : index
    %416 = vector.load %arg18[%c0_152, %c0_153] : memref<16x128xf32, #tpu.memory_space<vmem>>, vector<16x128xf32>
    tpu.vector_store %arg18[%c0_152, %c0_153], %415 {strides = array<i32>} : memref<16x128xf32, #tpu.memory_space<vmem>>, vector<16x128xf32>,
    return
  }
}

</mosaic_0001>

<llo_original>
// kernel: bert_embedder_forward.1
$region0: #{bert_embedder_forward.1}
  #allocation0 [shape = 'u32[]', space=smem, size = 0x4, offset = 0x4, fixed_abs, tag = 'smem constant byte address 0x4 - core index']
  #allocation1 [shape = 'u32[144,128]{1,0:T(1,128)}', space=vmem, size = 0x12000, scoped, tag = 'internal scratch']
  %s0 = inlined_call_operand.vmem [shape: s32[16,1], index: 0, kind: input, shape index: {}]
  %s1 = inlined_call_operand.vmem [shape: f32[32,64], index: 1, kind: input, shape index: {}]
  %s2 = inlined_call_operand.vmem [shape: f32[16,64], index: 2, kind: input, shape index: {}]
  %s3 = inlined_call_operand.vmem [shape: f32[2,64], index: 3, kind: input, shape index: {}]
  %s4 = inlined_call_operand.vmem [shape: f32[1,64], index: 4, kind: input, shape index: {}]
  %s5 = inlined_call_operand.vmem [shape: f32[1,64], index: 5, kind: input, shape index: {}]
  %s6 = inlined_call_operand.vmem [shape: bf16[2,64,192], index: 6, kind: input, shape index: {}]
  %s7 = inlined_call_operand.vmem [shape: f32[2,1,192], index: 7, kind: input, shape index: {}]
  %s8 = inlined_call_operand.vmem [shape: bf16[2,64,64], index: 8, kind: input, shape index: {}]
  %s9 = inlined_call_operand.vmem [shape: f32[2,1,64], index: 9, kind: input, shape index: {}]
  %s10 = inlined_call_operand.vmem [shape: f32[2,1,64], index: 10, kind: input, shape index: {}]
  %s11 = inlined_call_operand.vmem [shape: f32[2,1,64], index: 11, kind: input, shape index: {}]
  %s12 = inlined_call_operand.vmem [shape: bf16[2,64,256], index: 12, kind: input, shape index: {}]
  %s13 = inlined_call_operand.vmem [shape: f32[2,1,256], index: 13, kind: input, shape index: {}]
  %s14 = inlined_call_operand.vmem [shape: bf16[2,256,64], index: 14, kind: input, shape index: {}]
  %s15 = inlined_call_operand.vmem [shape: f32[2,1,64], index: 15, kind: input, shape index: {}]
  %s16 = inlined_call_operand.vmem [shape: f32[2,1,64], index: 16, kind: input, shape index: {}]
  %s17 = inlined_call_operand.vmem [shape: f32[2,1,64], index: 17, kind: input, shape index: {}]
  %s18 = inlined_call_operand.hbm [shape: f32[16,128], index: 18, kind: output, shape index: {}]
  %s19 = sld [smem:[#allocation0]]
  $region82: #{bert_embedder_forward.1} parent=0
    _
  %s21 = ssub.s32 1, %s19
  %s22 = scalar_select 0, %s21, %s19
  $region1: #{bert_embedder_forward.1} parent=0
    #allocation2 [shape = 'u8[8192]{0}', space=vmem, size = 0x2000, scoped, tag = 'output window, operand 0, single buffered']
    #allocation3 [shape = 's32[1]{0}', space=sflag, size = 0x4, scoped, tag = 'scoped memory for bert_embedder_forward.1']
    %23 = vsyncpa [#allocation3], 0
    // Predicated region
    $region2: #{bert_embedder_forward.1} parent=1 // pred_check
      _
    $region3: #{bert_embedder_forward.1} parent=1 // pred_check_branch
      %25 = sbr.rel (0) target = $region5
    $region4: #{bert_embedder_forward.1} parent=1 // pred_region
      _
    $region5: #{bert_embedder_forward.1} parent=1 // pred_fallthru
      _
    // Predicated region
    $region6: #{bert_embedder_forward.1} parent=1 // pred_check
      _
    $region7: #{bert_embedder_forward.1} parent=1 // pred_check_branch
      %27 = sbr.rel (0) target = $region9
    $region8: #{bert_embedder_forward.1} parent=1 // pred_region
      _
    $region9: #{bert_embedder_forward.1} parent=1 // pred_fallthru
      _
    // Predicated region
    $region10: #{bert_embedder_forward.1} parent=1 // pred_check
      _
    $region11: #{bert_embedder_forward.1} parent=1 // pred_check_branch
      %29 = sbr.rel (0) target = $region13
    $region12: #{bert_embedder_forward.1} parent=1 // pred_region
      _
    $region13: #{bert_embedder_forward.1} parent=1 // pred_fallthru
      _
    // Predicated region
    $region14: #{bert_embedder_forward.1} parent=1 // pred_check
      _
    $region15: #{bert_embedder_forward.1} parent=1 // pred_check_branch
      %31 = sbr.rel (0) target = $region17
    $region16: #{bert_embedder_forward.1} parent=1 // pred_region
      _
    $region17: #{bert_embedder_forward.1} parent=1 // pred_fallthru
      _
    // Predicated region
    $region18: #{bert_embedder_forward.1} parent=1 // pred_check
      _
    $region19: #{bert_embedder_forward.1} parent=1 // pred_check_branch
      %33 = sbr.rel (0) target = $region21
    $region20: #{bert_embedder_forward.1} parent=1 // pred_region
      _
    $region21: #{bert_embedder_forward.1} parent=1 // pred_fallthru
      _
    // Predicated region
    $region22: #{bert_embedder_forward.1} parent=1 // pred_check
      _
    $region23: #{bert_embedder_forward.1} parent=1 // pred_check_branch
      %35 = sbr.rel (0) target = $region25
    $region24: #{bert_embedder_forward.1} parent=1 // pred_region
      _
    $region25: #{bert_embedder_forward.1} parent=1 // pred_fallthru
      _
    // Predicated region
    $region26: #{bert_embedder_forward.1} parent=1 // pred_check
      _
    $region27: #{bert_embedder_forward.1} parent=1 // pred_check_branch
      %37 = sbr.rel (0) target = $region29
    $region28: #{bert_embedder_forward.1} parent=1 // pred_region
      _
    $region29: #{bert_embedder_forward.1} parent=1 // pred_fallthru
      _
    // Predicated region
    $region30: #{bert_embedder_forward.1} parent=1 // pred_check
      _
    $region31: #{bert_embedder_forward.1} parent=1 // pred_check_branch
      %39 = sbr.rel (0) target = $region33
    $region32: #{bert_embedder_forward.1} parent=1 // pred_region
      _
    $region33: #{bert_embedder_forward.1} parent=1 // pred_fallthru
      _
    // Predicated region
    $region34: #{bert_embedder_forward.1} parent=1 // pred_check
      _
    $region35: #{bert_embedder_forward.1} parent=1 // pred_check_branch
      %41 = sbr.rel (0) target = $region37
    $region36: #{bert_embedder_forward.1} parent=1 // pred_region
      _
    $region37: #{bert_embedder_forward.1} parent=1 // pred_fallthru
      _
    // Predicated region
    $region38: #{bert_embedder_forward.1} parent=1 // pred_check
      _
    $region39: #{bert_embedder_forward.1} parent=1 // pred_check_branch
      %43 = sbr.rel (0) target = $region41
    $region40: #{bert_embedder_forward.1} parent=1 // pred_region
      _
    $region41: #{bert_embedder_forward.1} parent=1 // pred_fallthru
      _
    // Predicated region
    $region42: #{bert_embedder_forward.1} parent=1 // pred_check
      _
    $region43: #{bert_embedder_forward.1} parent=1 // pred_check_branch
      %45 = sbr.rel (0) target = $region45
    $region44: #{bert_embedder_forward.1} parent=1 // pred_region
      _
    $region45: #{bert_embedder_forward.1} parent=1 // pred_fallthru
      _
    // Predicated region
    $region46: #{bert_embedder_forward.1} parent=1 // pred_check
      _
    $region47: #{bert_embedder_forward.1} parent=1 // pred_check_branch
      %47 = sbr.rel (0) target = $region49
    $region48: #{bert_embedder_forward.1} parent=1 // pred_region
      _
    $region49: #{bert_embedder_forward.1} parent=1 // pred_fallthru
      _
    // Predicated region
    $region50: #{bert_embedder_forward.1} parent=1 // pred_check
      _
    $region51: #{bert_embedder_forward.1} parent=1 // pred_check_branch
      %49 = sbr.rel (0) target = $region53
    $region52: #{bert_embedder_forward.1} parent=1 // pred_region
      _
    $region53: #{bert_embedder_forward.1} parent=1 // pred_fallthru
      _
    // Predicated region
    $region54: #{bert_embedder_forward.1} parent=1 // pred_check
      _
    $region55: #{bert_embedder_forward.1} parent=1 // pred_check_branch
      %51 = sbr.rel (0) target = $region57
    $region56: #{bert_embedder_forward.1} parent=1 // pred_region
      _
    $region57: #{bert_embedder_forward.1} parent=1 // pred_fallthru
      _
    // Predicated region
    $region58: #{bert_embedder_forward.1} parent=1 // pred_check
      _
    $region59: #{bert_embedder_forward.1} parent=1 // pred_check_branch
      %53 = sbr.rel (0) target = $region61
    $region60: #{bert_embedder_forward.1} parent=1 // pred_region
      _
    $region61: #{bert_embedder_forward.1} parent=1 // pred_fallthru
      _
    // Predicated region
    $region62: #{bert_embedder_forward.1} parent=1 // pred_check
      _
    $region63: #{bert_embedder_forward.1} parent=1 // pred_check_branch
      %55 = sbr.rel (0) target = $region65
    $region64: #{bert_embedder_forward.1} parent=1 // pred_region
      _
    $region65: #{bert_embedder_forward.1} parent=1 // pred_fallthru
      _
    // Predicated region
    $region66: #{bert_embedder_forward.1} parent=1 // pred_check
      _
    $region67: #{bert_embedder_forward.1} parent=1 // pred_check_branch
      %57 = sbr.rel (0) target = $region69
    $region68: #{bert_embedder_forward.1} parent=1 // pred_region
      _
    $region69: #{bert_embedder_forward.1} parent=1 // pred_fallthru
      _
    // Predicated region
    $region70: #{bert_embedder_forward.1} parent=1 // pred_check
      _
    $region71: #{bert_embedder_forward.1} parent=1 // pred_check_branch
      %59 = sbr.rel (0) target = $region73
    $region72: #{bert_embedder_forward.1} parent=1 // pred_region
      _
    $region73: #{bert_embedder_forward.1} parent=1 // pred_fallthru
      _
    %v61 = vld [vmem:[%s0] sm:$0xff]
    %v62 = vld [vmem:[%s0 + $0x8] sm:$0xff]
    %vm63 = vcmp.ne.s32.totalorder %v61, 0
    %vm64 = vcmp.ne.s32.totalorder %v62, 0
    %v65 = vsel %vm63, 1, 0
    %v66 = vsel %vm64, 1, 0
    %v67 = vcvt.s32.f32 %v65
    %v68 = vcvt.s32.f32 %v66
    %vm69 = vcmp.gt.s32.totalorder %v61, 1
    %vm70 = vcmp.gt.s32.totalorder %v62, 1
    %v71 = vsub.s32 %v61, 2
    %v72 = vsub.s32 %v62, 2
    %vm73 = vcmp.eq.s32.totalorder %v61, 1
    %vm74 = vcmp.eq.s32.totalorder %v62, 1
    %v75 = vsel %vm73, 1, 0
    %v76 = vsel %vm74, 1, 0
    %v77 = vsel %vm69, %v71, %v75
    %v78 = vsel %vm70, %v72, %v76
    %v79 = vlaneseq
    %v80 = vshrl.u32 %v79, 7
    %v81 = vadd.s32 %v80, 8
    %v82 = vlaneseq
    %v83 = vand.u32 %v82, 127
    %v84 = vmul.u32 %v83, 8
    %v85 = vsub.s32 %v80, %v84
    %v86 = vsub.s32 %v81, %v84
    %vm87 = vcmp.ge.s32.totalorder %v85, 0
    %vm88 = vcmp.ge.s32.totalorder %v86, 0
    %vm89 = vcmp.lt.s32.totalorder %v85, 8
    %vm90 = vcmp.lt.s32.totalorder %v86, 8
    %vm91 = vmand %vm87, %vm89
    %vm92 = vmand %vm88, %vm90
    %v93 = vsel %vm91, 1, 0
    %v94 = vsel %vm92, 1, 0
    %v95 = vcvt.s32.f32 %v93
    %v96 = vcvt.s32.f32 %v94
    %vm97 = vcmask 15360
    %v99 = vsel %vm97, %v95, 0
    %v102 = vsel %vm97, %v96, 0
    %104 = vmatprep.subr.mxu0 0.0
    %105 = vmatpush1.xpose.msra.mxu0 %v99
    %106 = vmatprep.subr.mxu0 0.0
    %107 = vmatpush1.xpose.msra.mxu0 %v102
    %108 = vmatprep.subr.mxu0 0.0
    %109 = vmatpush1.xpose.msra.mxu0 0.0
    %110 = vmatprep.subr.mxu0 0.0
    %111 = vmatpush1.xpose.msra.mxu0 0.0
    %112 = vmatprep.subr.mxu0 0.0
    %113 = vmatpush1.xpose.msra.mxu0 0.0
    %114 = vmatprep.subr.mxu0 0.0
    %115 = vmatpush1.xpose.msra.mxu0 0.0
    %116 = vmatprep.subr.mxu0 0.0
    %117 = vmatpush1.xpose.msra.mxu0 0.0
    %118 = vmatprep.subr.mxu0 0.0
    %119 = vmatpush1.xpose.msra.mxu0 0.0
    %120 = vmatprep.subr.mxu0 0.0
    %121 = vmatpush1.xpose.msra.mxu0 0.0
    %122 = vmatprep.subr.mxu0 0.0
    %123 = vmatpush1.xpose.msra.mxu0 0.0
    %124 = vmatprep.subr.mxu0 0.0
    %125 = vmatpush1.xpose.msra.mxu0 0.0
    %126 = vmatprep.subr.mxu0 0.0
    %127 = vmatpush1.xpose.msra.mxu0 0.0
    %128 = vmatprep.subr.mxu0 0.0
    %129 = vmatpush1.xpose.msra.mxu0 0.0
    %130 = vmatprep.subr.mxu0 0.0
    %131 = vmatpush1.xpose.msra.mxu0 0.0
    %132 = vmatprep.subr.mxu0 0.0
    %133 = vmatpush1.xpose.msra.mxu0 0.0
    %134 = vmatprep.subr.mxu0 0.0
    %135 = vmatpush1.xpose.msra.mxu0 0.0
    %136 = vmatprep.subr.mxu0 0.0
    %137 = vmatpush1.xpose.msra.mxu0 0.0
    %138 = vmatprep.subr.mxu0 0.0
    %139 = vmatpush1.xpose.msra.mxu0 0.0
    %140 = vmatprep.subr.mxu0 0.0
    %141 = vmatpush1.xpose.msra.mxu0 0.0
    %142 = vmatprep.subr.mxu0 0.0
    %143 = vmatpush1.xpose.msra.mxu0 0.0
    %144 = vmatprep.subr.mxu0 0.0
    %145 = vmatpush1.xpose.msra.mxu0 0.0
    %146 = vmatprep.subr.mxu0 0.0
    %147 = vmatpush1.xpose.msra.mxu0 0.0
    %148 = vmatprep.subr.mxu0 0.0
    %149 = vmatpush1.xpose.msra.mxu0 0.0
    %150 = vmatprep.subr.mxu0 0.0
    %151 = vmatpush1.xpose.msra.mxu0 0.0
    %152 = vmatprep.subr.mxu0 0.0
    %153 = vmatpush1.xpose.msra.mxu0 0.0
    %154 = vmatprep.subr.mxu0 0.0
    %155 = vmatpush1.xpose.msra.mxu0 0.0
    %156 = vmatprep.subr.mxu0 0.0
    %157 = vmatpush1.xpose.msra.mxu0 0.0
    %158 = vmatprep.subr.mxu0 0.0
    %159 = vmatpush1.xpose.msra.mxu0 0.0
    %160 = vmatprep.subr.mxu0 0.0
    %161 = vmatpush1.xpose.msra.mxu0 0.0
    %162 = vmatprep.subr.mxu0 0.0
    %163 = vmatpush1.xpose.msra.mxu0 0.0
    %164 = vmatprep.subr.mxu0 0.0
    %165 = vmatpush1.xpose.msra.mxu0 0.0
    %166 = vmatprep.subr.mxu0 0.0
    %167 = vmatpush1.xpose.msra.mxu0 0.0
    %168 = vmatprep.mubr.f32.mxu0 0.0
    %169 = vmatmul.mubr.f32.gmra.mrb[0].mxu0 %v99
    %v170 = vpop.f32.mrb[0].mxu0
    %v171 = vadd.f32 0.0, %v170
    %v172 = vpop.f32.mrb[0].mxu0
    %173 = vmatprep.mubr.f32.mxu0 0.0
    %174 = vmatmul.mubr.f32.gmra.mrb[0].mxu0 %v102
    %v175 = vpop.f32.mrb[0].mxu0
    %v176 = vadd.f32 0.0, %v175
    %v177 = vpop.f32.mrb[0].mxu0
    %178 = vdwg.mxu0
    %180 = vset.pattern.permute.xlu0 0
    %181 = vperm.xlu0 %180, %v67
    %v182 = vpop.permute.xlu0 %181
    %185 = vset.pattern.permute.xlu0 0
    %186 = vperm.xlu0 %185, %v68
    %v187 = vpop.permute.xlu0 %186
    %v189 = vmul.f32 %v95, %v182
    %v190 = vmul.f32 %v96, %v187
    %v192 = vsel %vm97, %v189, 0
    %v195 = vsel %vm97, %v190, 0
    %197 = vmatprep.subr.mxu0 0.0
    %198 = vmatpush1.xpose.msra.mxu0 %v192
    %199 = vmatprep.subr.mxu0 0.0
    %200 = vmatpush1.xpose.msra.mxu0 %v195
    %201 = vmatprep.subr.mxu0 0.0
    %202 = vmatpush1.xpose.msra.mxu0 0.0
    %203 = vmatprep.subr.mxu0 0.0
    %204 = vmatpush1.xpose.msra.mxu0 0.0
    %205 = vmatprep.subr.mxu0 0.0
    %206 = vmatpush1.xpose.msra.mxu0 0.0
    %207 = vmatprep.subr.mxu0 0.0
    %208 = vmatpush1.xpose.msra.mxu0 0.0
    %209 = vmatprep.subr.mxu0 0.0
    %210 = vmatpush1.xpose.msra.mxu0 0.0
    %211 = vmatprep.subr.mxu0 0.0
    %212 = vmatpush1.xpose.msra.mxu0 0.0
    %213 = vmatprep.subr.mxu0 0.0
    %214 = vmatpush1.xpose.msra.mxu0 0.0
    %215 = vmatprep.subr.mxu0 0.0
    %216 = vmatpush1.xpose.msra.mxu0 0.0
    %217 = vmatprep.subr.mxu0 0.0
    %218 = vmatpush1.xpose.msra.mxu0 0.0
    %219 = vmatprep.subr.mxu0 0.0
    %220 = vmatpush1.xpose.msra.mxu0 0.0
    %221 = vmatprep.subr.mxu0 0.0
    %222 = vmatpush1.xpose.msra.mxu0 0.0
    %223 = vmatprep.subr.mxu0 0.0
    %224 = vmatpush1.xpose.msra.mxu0 0.0
    %225 = vmatprep.subr.mxu0 0.0
    %226 = vmatpush1.xpose.msra.mxu0 0.0
    %227 = vmatprep.subr.mxu0 0.0
    %228 = vmatpush1.xpose.msra.mxu0 0.0
    %229 = vmatprep.subr.mxu0 0.0
    %230 = vmatpush1.xpose.msra.mxu0 0.0
    %231 = vmatprep.subr.mxu0 0.0
    %232 = vmatpush1.xpose.msra.mxu0 0.0
    %233 = vmatprep.subr.mxu0 0.0
    %234 = vmatpush1.xpose.msra.mxu0 0.0
    %235 = vmatprep.subr.mxu0 0.0
    %236 = vmatpush1.xpose.msra.mxu0 0.0
    %237 = vmatprep.subr.mxu0 0.0
    %238 = vmatpush1.xpose.msra.mxu0 0.0
    %239 = vmatprep.subr.mxu0 0.0
    %240 = vmatpush1.xpose.msra.mxu0 0.0
    %241 = vmatprep.subr.mxu0 0.0
    %242 = vmatpush1.xpose.msra.mxu0 0.0
    %243 = vmatprep.subr.mxu0 0.0
    %244 = vmatpush1.xpose.msra.mxu0 0.0
    %245 = vmatprep.subr.mxu0 0.0
    %246 = vmatpush1.xpose.msra.mxu0 0.0
    %247 = vmatprep.subr.mxu0 0.0
    %248 = vmatpush1.xpose.msra.mxu0 0.0
    %249 = vmatprep.subr.mxu0 0.0
    %250 = vmatpush1.xpose.msra.mxu0 0.0
    %251 = vmatprep.subr.mxu0 0.0
    %252 = vmatpush1.xpose.msra.mxu0 0.0
    %253 = vmatprep.subr.mxu0 0.0
    %254 = vmatpush1.xpose.msra.mxu0 0.0
    %255 = vmatprep.subr.mxu0 0.0
    %256 = vmatpush1.xpose.msra.mxu0 0.0
    %257 = vmatprep.subr.mxu0 0.0
    %258 = vmatpush1.xpose.msra.mxu0 0.0
    %259 = vmatprep.subr.mxu0 0.0
    %260 = vmatpush1.xpose.msra.mxu0 0.0
    %261 = vmatprep.mubr.f32.mxu0 0.0
    %262 = vmatmul.mubr.f32.gmra.mrb[0].mxu0 %v99
    %v263 = vpop.f32.mrb[0].mxu0
    %v264 = vadd.f32 0.0, %v263
    %v265 = vpop.f32.mrb[0].mxu0
    %266 = vmatprep.mubr.f32.mxu0 0.0
    %267 = vmatmul.mubr.f32.gmra.mrb[0].mxu0 %v102
    %v268 = vpop.f32.mrb[0].mxu0
    %v269 = vadd.f32 0.0, %v268
    %v270 = vpop.f32.mrb[0].mxu0
    %271 = vdwg.mxu0
    %vm272 = vcmp.le.s32.totalorder %v83, %v80
    %vm273 = vcmp.le.s32.totalorder %v83, %v81
    %v274 = vsel %vm272, 1, 0
    %v275 = vsel %vm273, 1, 0
    %v276 = vcvt.s32.f32 %v274
    %v277 = vcvt.s32.f32 %v275
    %vm278 = vcmp.eq.s32.totalorder %v77, 3
    %vm279 = vcmp.eq.s32.totalorder %v78, 3
    %v280 = vsel %vm278, 1, 0
    %v281 = vsel %vm279, 1, 0
    %v282 = vcvt.s32.f32 %v280
    %v283 = vcvt.s32.f32 %v281
    %v284 = vmul.f32 %v171, %v276
    %v285 = vmul.f32 %v176, %v277
    %vm286 = vcmask 130048
    %v288 = vsel %vm286, %v284, 0
    %v291 = vsel %vm286, %v285, 0
    %293 = vmatprep.subr.mxu0 0.0
    %294 = vmatpush1.msra.mxu0 %v282
    %295 = vmatprep.subr.mxu0 0.0
    %296 = vmatpush1.msra.mxu0 %v283
    %297 = vmatprep.subr.mxu0 0.0
    %298 = vmatpush1.msra.mxu0 0.0
    %299 = vmatprep.subr.mxu0 0.0
    %300 = vmatpush1.msra.mxu0 0.0
    %301 = vmatprep.subr.mxu0 0.0
    %302 = vmatpush1.msra.mxu0 0.0
    %303 = vmatprep.subr.mxu0 0.0
    %304 = vmatpush1.msra.mxu0 0.0
    %305 = vmatprep.subr.mxu0 0.0
    %306 = vmatpush1.msra.mxu0 0.0
    %307 = vmatprep.subr.mxu0 0.0
    %308 = vmatpush1.msra.mxu0 0.0
    %309 = vmatprep.subr.mxu0 0.0
    %310 = vmatpush1.msra.mxu0 0.0
    %311 = vmatprep.subr.mxu0 0.0
    %312 = vmatpush1.msra.mxu0 0.0
    %313 = vmatprep.subr.mxu0 0.0
    %314 = vmatpush1.msra.mxu0 0.0
    %315 = vmatprep.subr.mxu0 0.0
    %316 = vmatpush1.msra.mxu0 0.0
    %317 = vmatprep.subr.mxu0 0.0
    %318 = vmatpush1.msra.mxu0 0.0
    %319 = vmatprep.subr.mxu0 0.0
    %320 = vmatpush1.msra.mxu0 0.0
    %321 = vmatprep.subr.mxu0 0.0
    %322 = vmatpush1.msra.mxu0 0.0
    %323 = vmatprep.subr.mxu0 0.0
    %324 = vmatpush1.msra.mxu0 0.0
    %325 = vmatprep.subr.mxu0 0.0
    %326 = vmatpush1.msra.mxu0 0.0
    %327 = vmatprep.subr.mxu0 0.0
    %328 = vmatpush1.msra.mxu0 0.0
    %329 = vmatprep.subr.mxu0 0.0
    %330 = vmatpush1.msra.mxu0 0.0
    %331 = vmatprep.subr.mxu0 0.0
    %332 = vmatpush1.msra.mxu0 0.0
    %333 = vmatprep.subr.mxu0 0.0
    %334 = vmatpush1.msra.mxu0 0.0
    %335 = vmatprep.subr.mxu0 0.0
    %336 = vmatpush1.msra.mxu0 0.0
    %337 = vmatprep.subr.mxu0 0.0
    %338 = vmatpush1.msra.mxu0 0.0
    %339 = vmatprep.subr.mxu0 0.0
    %340 = vmatpush1.msra.mxu0 0.0
    %341 = vmatprep.subr.mxu0 0.0
    %342 = vmatpush1.msra.mxu0 0.0
    %343 = vmatprep.subr.mxu0 0.0
    %344 = vmatpush1.msra.mxu0 0.0
    %345 = vmatprep.subr.mxu0 0.0
    %346 = vmatpush1.msra.mxu0 0.0
    %347 = vmatprep.subr.mxu0 0.0
    %348 = vmatpush1.msra.mxu0 0.0
    %349 = vmatprep.subr.mxu0 0.0
    %350 = vmatpush1.msra.mxu0 0.0
    %351 = vmatprep.subr.mxu0 0.0
    %352 = vmatpush1.msra.mxu0 0.0
    %353 = vmatprep.subr.mxu0 0.0
    %354 = vmatpush1.msra.mxu0 0.0
    %355 = vmatprep.subr.mxu0 0.0
    %356 = vmatpush1.msra.mxu0 0.0
    %357 = vmatprep.mubr.f32.mxu0 0.0
    %358 = vmatmul.mubr.f32.gmra.mrb[0].mxu0 %v288
    %v359 = vpop.f32.mrb[0].mxu0
    %v360 = vadd.f32 0.0, %v359
    %v361 = vpop.f32.mrb[0].mxu0
    %362 = vmatprep.mubr.f32.mxu0 0.0
    %363 = vmatmul.mubr.f32.gmra.mrb[0].mxu0 %v291
    %v364 = vpop.f32.mrb[0].mxu0
    %v365 = vadd.f32 0.0, %v364
    %v366 = vpop.f32.mrb[0].mxu0
    %367 = vdwg.mxu0
    %v368 = vsub.f32 %v360, %v282
    %v369 = vsub.f32 %v365, %v283
    %v370 = vmul.f32 %v368, %v67
    %v371 = vmul.f32 %v369, %v68
    %372 = vset.pattern.permute.xlu0 0
    %373 = vperm.xlu0 %372, %v77
    %v374 = vpop.permute.xlu0 %373
    %375 = vset.pattern.permute.xlu0 0
    %376 = vperm.xlu0 %375, %v78
    %v377 = vpop.permute.xlu0 %376
    %vm378 = vcmp.eq.s32.totalorder %v374, %v83
    %vm379 = vcmp.eq.s32.totalorder %v377, %v83
    %v380 = vsel %vm378, 1, 0
    %v381 = vsel %vm379, 1, 0
    %v382 = vcvt.s32.f32 %v380
    %v383 = vcvt.s32.f32 %v381
    %v384 = vld [vmem:[%s1] sm:$0xff]
    %v385 = vld [vmem:[%s1 + $0x8] sm:$0xff]
    %v386 = vld [vmem:[%s1 + $0x10] sm:$0xff]
    %v387 = vld [vmem:[%s1 + $0x18] sm:$0xff]
    %vm388 = vcmask 261120
    %v390 = vsel %vm388, %v382, 0
    %v393 = vsel %vm388, %v383, 0
    %395 = vmatprep.subr.mxu0 0.0
    %396 = vmatpush1.msra.mxu0 %v384
    %397 = vmatprep.subr.mxu0 0.0
    %398 = vmatpush1.msra.mxu0 %v385
    %399 = vmatprep.subr.mxu0 0.0
    %400 = vmatpush1.msra.mxu0 %v386
    %401 = vmatprep.subr.mxu0 0.0
    %402 = vmatpush1.msra.mxu0 %v387
    %403 = vmatprep.subr.mxu0 0.0
    %404 = vmatpush1.msra.mxu0 0.0
    %405 = vmatprep.subr.mxu0 0.0
    %406 = vmatpush1.msra.mxu0 0.0
    %407 = vmatprep.subr.mxu0 0.0
    %408 = vmatpush1.msra.mxu0 0.0
    %409 = vmatprep.subr.mxu0 0.0
    %410 = vmatpush1.msra.mxu0 0.0
    %411 = vmatprep.subr.mxu0 0.0
    %412 = vmatpush1.msra.mxu0 0.0
    %413 = vmatprep.subr.mxu0 0.0
    %414 = vmatpush1.msra.mxu0 0.0
    %415 = vmatprep.subr.mxu0 0.0
    %416 = vmatpush1.msra.mxu0 0.0
    %417 = vmatprep.subr.mxu0 0.0
    %418 = vmatpush1.msra.mxu0 0.0
    %419 = vmatprep.subr.mxu0 0.0
    %420 = vmatpush1.msra.mxu0 0.0
    %421 = vmatprep.subr.mxu0 0.0
    %422 = vmatpush1.msra.mxu0 0.0
    %423 = vmatprep.subr.mxu0 0.0
    %424 = vmatpush1.msra.mxu0 0.0
    %425 = vmatprep.subr.mxu0 0.0
    %426 = vmatpush1.msra.mxu0 0.0
    %427 = vmatprep.subr.mxu0 0.0
    %428 = vmatpush1.msra.mxu0 0.0
    %429 = vmatprep.subr.mxu0 0.0
    %430 = vmatpush1.msra.mxu0 0.0
    %431 = vmatprep.subr.mxu0 0.0
    %432 = vmatpush1.msra.mxu0 0.0
    %433 = vmatprep.subr.mxu0 0.0
    %434 = vmatpush1.msra.mxu0 0.0
    %435 = vmatprep.subr.mxu0 0.0
    %436 = vmatpush1.msra.mxu0 0.0
    %437 = vmatprep.subr.mxu0 0.0
    %438 = vmatpush1.msra.mxu0 0.0
    %439 = vmatprep.subr.mxu0 0.0
    %440 = vmatpush1.msra.mxu0 0.0
    %441 = vmatprep.subr.mxu0 0.0
    %442 = vmatpush1.msra.mxu0 0.0
    %443 = vmatprep.subr.mxu0 0.0
    %444 = vmatpush1.msra.mxu0 0.0
    %445 = vmatprep.subr.mxu0 0.0
    %446 = vmatpush1.msra.mxu0 0.0
    %447 = vmatprep.subr.mxu0 0.0
    %448 = vmatpush1.msra.mxu0 0.0
    %449 = vmatprep.subr.mxu0 0.0
    %450 = vmatpush1.msra.mxu0 0.0
    %451 = vmatprep.subr.mxu0 0.0
    %452 = vmatpush1.msra.mxu0 0.0
    %453 = vmatprep.subr.mxu0 0.0
    %454 = vmatpush1.msra.mxu0 0.0
    %455 = vmatprep.subr.mxu0 0.0
    %456 = vmatpush1.msra.mxu0 0.0
    %457 = vmatprep.subr.mxu0 0.0
    %458 = vmatpush1.msra.mxu0 0.0
    %459 = vmatprep.mubr.f32.mxu0 0.0
    %460 = vmatmul.mubr.f32.gmra.mrb[0].mxu0 %v390
    %v461 = vpop.f32.mrb[0].mxu0
    %v462 = vadd.f32 0.0, %v461
    %v463 = vpop.f32.mrb[0].mxu0
    %464 = vmatprep.mubr.f32.mxu0 0.0
    %465 = vmatmul.mubr.f32.gmra.mrb[0].mxu0 %v393
    %v466 = vpop.f32.mrb[0].mxu0
    %v467 = vadd.f32 0.0, %v466
    %v468 = vpop.f32.mrb[0].mxu0
    %469 = vdwg.mxu0
    %v470 = vld [vmem:[%s2] sm:$0xff]
    %v471 = vld [vmem:[%s3] sm:$0x1]
    %v472 = vld [vmem:[%s3 + $0x1] sm:$0x1]
    %v473 = vsub.f32 %v472, %v471
    %475 = vset.pattern.permute.xlu0 0
    %476 = vperm.xlu0 %475, %v370
    %v477 = vpop.permute.xlu0 %476
    %480 = vset.pattern.permute.xlu0 0
    %481 = vperm.xlu0 %480, %v371
    %v482 = vpop.permute.xlu0 %481
    %v484 = vlaneseq
    %v485 = vshrl.u32 %v484, 7
    %v486 = vsub.s32 0, %v485
    %v487 = vrot.slane %v473, %v486
    %v488 = vmul.f32 %v477, %v487
    %v489 = vmul.f32 %v482, %v487
    %v490 = vlaneseq
    %v491 = vshrl.u32 %v490, 7
    %v492 = vsub.s32 0, %v491
    %v493 = vrot.slane %v471, %v492
    %v494 = vadd.f32 %v493, %v488
    %v495 = vadd.f32 %v493, %v489
    %v496 = vld [vmem:[%s4] sm:$0x1]
    %v497 = vld [vmem:[%s5] sm:$0x1]
    %v498 = vadd.f32 %v462, %v470
    %v499 = vadd.f32 %v467, %v470
    %v500 = vadd.f32 %v498, %v494
    %v501 = vadd.f32 %v499, %v495
    %vm502 = vcmask 523264
    %v503 = vsel %vm502, %v500, 0.0
    %504 = vadd.xlane.f32.xlu0 %v503
    %v505 = vpop.xlane.xlu0 %504
    %v506 = vsel %vm502, %v501, 0.0
    %507 = vadd.xlane.f32.xlu0 %v506
    %v508 = vpop.xlane.xlu0 %507
    %v509 = vrcp.pop 64.0
    %v510 = vmul.f32 %v505, %v509
    %v511 = vmul.f32 %v508, %v509
    %v512 = vsub.f32 %v500, %v510
    %v513 = vsub.f32 %v501, %v511
    %v514 = vmul.f32 %v512, %v512
    %v515 = vmul.f32 %v513, %v513
    %v516 = vsel %vm502, %v514, 0.0
    %517 = vadd.xlane.f32.xlu0 %v516
    %v518 = vpop.xlane.xlu0 %517
    %v519 = vsel %vm502, %v515, 0.0
    %520 = vadd.xlane.f32.xlu0 %v519
    %v521 = vpop.xlane.xlu0 %520
    %v522 = vmul.f32 %v518, %v509
    %v523 = vmul.f32 %v521, %v509
    %v524 = vadd.f32 %v522, 1e-12
    %v525 = vadd.f32 %v523, 1e-12
    %v526 = vrsqrt.pop %v524
    %v527 = vrsqrt.pop %v525
    %v528 = vmul.f32 %v512, %v526
    %v529 = vmul.f32 %v513, %v527
    %v531 = vlaneseq
    %v532 = vshrl.u32 %v531, 7
    %v533 = vsub.s32 0, %v532
    %v534 = vrot.slane %v496, %v533
    %v536 = vmul.f32 %v528, %v534
    %v537 = vmul.f32 %v529, %v534
    %v539 = vlaneseq
    %v540 = vshrl.u32 %v539, 7
    %v541 = vsub.s32 0, %v540
    %v542 = vrot.slane %v497, %v541
    %v544 = vadd.f32 %v536, %v542
    %v545 = vadd.f32 %v537, %v542
    %v546 = vsel %vm502, %v462, 0.0
    %547 = vadd.xlane.f32.xlu0 %v546
    %v548 = vpop.xlane.xlu0 %547
    %v549 = vsel %vm502, %v467, 0.0
    %550 = vadd.xlane.f32.xlu0 %v549
    %v551 = vpop.xlane.xlu0 %550
    %v552 = vmul.f32 %v548, %v509
    %v553 = vmul.f32 %v551, %v509
    %v554 = vsub.f32 %v462, %v552
    %v555 = vsub.f32 %v467, %v553
    %v556 = vmul.f32 %v554, %v554
    %v557 = vmul.f32 %v555, %v555
    %v558 = vsel %vm502, %v556, 0.0
    %559 = vadd.xlane.f32.xlu0 %v558
    %v560 = vpop.xlane.xlu0 %559
    %v561 = vsel %vm502, %v557, 0.0
    %562 = vadd.xlane.f32.xlu0 %v561
    %v563 = vpop.xlane.xlu0 %562
    %v564 = vmul.f32 %v560, %v509
    %v565 = vmul.f32 %v563, %v509
    %v566 = vadd.f32 %v564, 1e-12
    %v567 = vadd.f32 %v565, 1e-12
    %v568 = vrsqrt.pop %v566
    %v569 = vrsqrt.pop %v567
    %v570 = vmul.f32 %v554, %v568
    %v571 = vmul.f32 %v555, %v569
    %v572 = vmul.f32 %v570, %v534
    %v573 = vmul.f32 %v571, %v534
    %v574 = vadd.f32 %v572, %v542
    %v575 = vadd.f32 %v573, %v542
    %v576 = vsub.f32 %v264, 1.0
    %v577 = vsub.f32 %v269, 1.0
    %v578 = vmul.f32 %v576, 10000.0
    %v579 = vmul.f32 %v577, 10000.0
    %v580 = vsub.f32 %v171, 1.0
    %v581 = vsub.f32 %v176, 1.0
    %v582 = vmul.f32 %v580, 1e+09
    %v583 = vmul.f32 %v581, 1e+09
    %v584 = vadd.f32 %v578, %v582
    %v585 = vadd.f32 %v579, %v583
    %v586 = vpack.c.bf16 %v545, %v544
    %v587 = vld [vmem:[%s6] sm:$0xff]
    %v588 = vld [vmem:[%s6 + $0x8] sm:$0xff]
    %v589 = vld [vmem:[%s6 + $0x10] sm:$0xff]
    %v590 = vld [vmem:[%s6 + $0x18] sm:$0xff]
    %v591 = vld [vmem:[%s6 + $0x20] sm:$0xff]
    %v592 = vld [vmem:[%s6 + $0x28] sm:$0xff]
    %v593 = vld [vmem:[%s6 + $0x30] sm:$0xff]
    %v594 = vld [vmem:[%s6 + $0x38] sm:$0xff]
    %v595 = vld [vmem:[%s7] sm:$0x3]
    %v597 = vlaneseq
    %v598 = vshrl.u32 %v597, 7
    %v599 = vsub.s32 0, %v598
    %v600 = vrot.slane %v595, %v599
    %v601 = vlaneseq
    %v602 = vshrl.u32 %v601, 7
    %v603 = vsub.s32 1, %v602
    %v604 = vrot.slane %v595, %v603
    %v615 = vunpack.c.l.b16 %v587
    %v616 = vunpack.c.h.b16 %v587
    %v617 = vunpack.c.l.b16 %v588
    %v618 = vunpack.c.h.b16 %v588
    %v619 = vunpack.c.l.b16 %v589
    %v620 = vunpack.c.h.b16 %v589
    %v621 = vunpack.c.l.b16 %v590
    %v622 = vunpack.c.h.b16 %v590
    %v623 = vunpack.c.l.b16 %v591
    %v624 = vunpack.c.h.b16 %v591
    %v625 = vunpack.c.l.b16 %v592
    %v626 = vunpack.c.h.b16 %v592
    %v627 = vunpack.c.l.b16 %v593
    %v628 = vunpack.c.h.b16 %v593
    %v629 = vunpack.c.l.b16 %v594
    %v630 = vunpack.c.h.b16 %v594
    %v631 = vpack.c.b16 %v617, %v615
    %v632 = vpack.c.b16 %v618, %v616
    %v633 = vpack.c.b16 %v621, %v619
    %v634 = vpack.c.b16 %v622, %v620
    %v635 = vpack.c.b16 %v625, %v623
    %v636 = vpack.c.b16 %v626, %v624
    %v637 = vpack.c.b16 %v629, %v627
    %v638 = vpack.c.b16 %v630, %v628
    %v648 = vsel %vm502, %v586, 0
    %650 = vmatprep.subr.bf16.mxu0 %v632
    %651 = vmatpush1.bf16.msra.mxu0 %v631
    %652 = vmatprep.subr.bf16.mxu0 %v634
    %653 = vmatpush1.bf16.msra.mxu0 %v633
    %654 = vmatprep.subr.bf16.mxu0 %v636
    %655 = vmatpush1.bf16.msra.mxu0 %v635
    %656 = vmatprep.subr.bf16.mxu0 %v638
    %657 = vmatpush1.bf16.msra.mxu0 %v637
    %658 = vmatprep.subr.bf16.mxu0 0
    %659 = vmatpush1.bf16.msra.mxu0 0
    %660 = vmatprep.subr.bf16.mxu0 0
    %661 = vmatpush1.bf16.msra.mxu0 0
    %662 = vmatprep.subr.bf16.mxu0 0
    %663 = vmatpush1.bf16.msra.mxu0 0
    %664 = vmatprep.subr.bf16.mxu0 0
    %665 = vmatpush1.bf16.msra.mxu0 0
    %666 = vmatprep.subr.bf16.mxu0 0
    %667 = vmatpush1.bf16.msra.mxu0 0
    %668 = vmatprep.subr.bf16.mxu0 0
    %669 = vmatpush1.bf16.msra.mxu0 0
    %670 = vmatprep.subr.bf16.mxu0 0
    %671 = vmatpush1.bf16.msra.mxu0 0
    %672 = vmatprep.subr.bf16.mxu0 0
    %673 = vmatpush1.bf16.msra.mxu0 0
    %674 = vmatprep.subr.bf16.mxu0 0
    %675 = vmatpush1.bf16.msra.mxu0 0
    %676 = vmatprep.subr.bf16.mxu0 0
    %677 = vmatpush1.bf16.msra.mxu0 0
    %678 = vmatprep.subr.bf16.mxu0 0
    %679 = vmatpush1.bf16.msra.mxu0 0
    %680 = vmatprep.subr.bf16.mxu0 0
    %681 = vmatpush1.bf16.msra.mxu0 0
    %682 = vmatprep.mubr.bf16.mxu0 0
    %683 = vmatmul.mubr.bf16.gmra.mrb[0].mxu0 %v648
    %v684 = vpop.f32.mrb[0].mxu0
    %v685 = vadd.f32 %v600, %v684
    %v686 = vpop.f32.mrb[0].mxu0
    %v687 = vadd.f32 %v604, %v686
    %v688 = vpop.f32.mrb[0].mxu0
    %v689 = vadd.f32 %v600, %v688
    %v690 = vpop.f32.mrb[0].mxu0
    %v691 = vadd.f32 %v604, %v690
    %692 = vdwg.mxu0
    %695 = vrot.lane.b32.xlu0 %v685, 112
    %v696 = vpop.permute.xlu0 %695
    %697 = vrot.lane.b32.xlu0 %v689, 112
    %v698 = vpop.permute.xlu0 %697
    %701 = vrot.lane.b32.xlu0 %v685, 96
    %v702 = vpop.permute.xlu0 %701
    %703 = vrot.lane.b32.xlu0 %v689, 96
    %v704 = vpop.permute.xlu0 %703
    %707 = vrot.lane.b32.xlu0 %v685, 80
    %v708 = vpop.permute.xlu0 %707
    %709 = vrot.lane.b32.xlu0 %v689, 80
    %v710 = vpop.permute.xlu0 %709
    %715 = vrot.lane.b32.xlu0 %v687, 112
    %v716 = vpop.permute.xlu0 %715
    %717 = vrot.lane.b32.xlu0 %v691, 112
    %v718 = vpop.permute.xlu0 %717
    %721 = vrot.lane.b32.xlu0 %v687, 96
    %v722 = vpop.permute.xlu0 %721
    %723 = vrot.lane.b32.xlu0 %v691, 96
    %v724 = vpop.permute.xlu0 %723
    %727 = vrot.lane.b32.xlu0 %v687, 80
    %v728 = vpop.permute.xlu0 %727
    %729 = vrot.lane.b32.xlu0 %v691, 80
    %v730 = vpop.permute.xlu0 %729
    %v733 = vpack.c.bf16 %v689, %v685
    %v734 = vpack.c.bf16 %v698, %v696
    %v735 = vpack.c.bf16 %v704, %v702
    %v736 = vpack.c.bf16 %v710, %v708
    %738 = vrot.lane.b32.xlu0 %v733, 64
    %v739 = vpop.permute.xlu0 %738
    %v741 = vsel %vm286, %v733, 0
    %v744 = vsel %vm286, %v739, 0
    %746 = vmatprep.subr.bf16.mxu0 0
    %747 = vmatpush1.bf16.xpose.msra.mxu0 %v744
    %748 = vmatprep.subr.bf16.mxu0 0
    %749 = vmatpush1.bf16.xpose.msra.mxu0 0
    %750 = vmatprep.subr.bf16.mxu0 0
    %751 = vmatpush1.bf16.xpose.msra.mxu0 0
    %752 = vmatprep.subr.bf16.mxu0 0
    %753 = vmatpush1.bf16.xpose.msra.mxu0 0
    %754 = vmatprep.subr.bf16.mxu0 0
    %755 = vmatpush1.bf16.xpose.msra.mxu0 0
    %756 = vmatprep.subr.bf16.mxu0 0
    %757 = vmatpush1.bf16.xpose.msra.mxu0 0
    %758 = vmatprep.subr.bf16.mxu0 0
    %759 = vmatpush1.bf16.xpose.msra.mxu0 0
    %760 = vmatprep.subr.bf16.mxu0 0
    %761 = vmatpush1.bf16.xpose.msra.mxu0 0
    %762 = vmatprep.subr.bf16.mxu0 0
    %763 = vmatpush1.bf16.xpose.msra.mxu0 0
    %764 = vmatprep.subr.bf16.mxu0 0
    %765 = vmatpush1.bf16.xpose.msra.mxu0 0
    %766 = vmatprep.subr.bf16.mxu0 0
    %767 = vmatpush1.bf16.xpose.msra.mxu0 0
    %768 = vmatprep.subr.bf16.mxu0 0
    %769 = vmatpush1.bf16.xpose.msra.mxu0 0
    %770 = vmatprep.subr.bf16.mxu0 0
    %771 = vmatpush1.bf16.xpose.msra.mxu0 0
    %772 = vmatprep.subr.bf16.mxu0 0
    %773 = vmatpush1.bf16.xpose.msra.mxu0 0
    %774 = vmatprep.subr.bf16.mxu0 0
    %775 = vmatpush1.bf16.xpose.msra.mxu0 0
    %776 = vmatprep.subr.bf16.mxu0 0
    %777 = vmatpush1.bf16.xpose.msra.mxu0 0
    %778 = vmatprep.mubr.bf16.mxu0 0
    %779 = vmatmul.mubr.bf16.gmra.mrb[0].mxu0 %v741
    %v780 = vpop.f32.mrb[0].mxu0
    %v781 = vadd.f32 0.0, %v780
    %v782 = vpop.f32.mrb[0].mxu0
    %v783 = vpop.f32.mrb[0].mxu0
    %v784 = vadd.f32 0.0, %v783
    %v785 = vpop.f32.mrb[0].mxu0
    %786 = vdwg.mxu0
    %788 = vrot.lane.b32.xlu0 %v734, 64
    %v789 = vpop.permute.xlu0 %788
    %v791 = vsel %vm286, %v734, 0
    %v794 = vsel %vm286, %v789, 0
    %796 = vmatprep.subr.bf16.mxu0 0
    %797 = vmatpush1.bf16.xpose.msra.mxu0 %v794
    %798 = vmatprep.subr.bf16.mxu0 0
    %799 = vmatpush1.bf16.xpose.msra.mxu0 0
    %800 = vmatprep.subr.bf16.mxu0 0
    %801 = vmatpush1.bf16.xpose.msra.mxu0 0
    %802 = vmatprep.subr.bf16.mxu0 0
    %803 = vmatpush1.bf16.xpose.msra.mxu0 0
    %804 = vmatprep.subr.bf16.mxu0 0
    %805 = vmatpush1.bf16.xpose.msra.mxu0 0
    %806 = vmatprep.subr.bf16.mxu0 0
    %807 = vmatpush1.bf16.xpose.msra.mxu0 0
    %808 = vmatprep.subr.bf16.mxu0 0
    %809 = vmatpush1.bf16.xpose.msra.mxu0 0
    %810 = vmatprep.subr.bf16.mxu0 0
    %811 = vmatpush1.bf16.xpose.msra.mxu0 0
    %812 = vmatprep.subr.bf16.mxu0 0
    %813 = vmatpush1.bf16.xpose.msra.mxu0 0
    %814 = vmatprep.subr.bf16.mxu0 0
    %815 = vmatpush1.bf16.xpose.msra.mxu0 0
    %816 = vmatprep.subr.bf16.mxu0 0
    %817 = vmatpush1.bf16.xpose.msra.mxu0 0
    %818 = vmatprep.subr.bf16.mxu0 0
    %819 = vmatpush1.bf16.xpose.msra.mxu0 0
    %820 = vmatprep.subr.bf16.mxu0 0
    %821 = vmatpush1.bf16.xpose.msra.mxu0 0
    %822 = vmatprep.subr.bf16.mxu0 0
    %823 = vmatpush1.bf16.xpose.msra.mxu0 0
    %824 = vmatprep.subr.bf16.mxu0 0
    %825 = vmatpush1.bf16.xpose.msra.mxu0 0
    %826 = vmatprep.subr.bf16.mxu0 0
    %827 = vmatpush1.bf16.xpose.msra.mxu0 0
    %828 = vmatprep.mubr.bf16.mxu0 0
    %829 = vmatmul.mubr.bf16.gmra.mrb[0].mxu0 %v791
    %v830 = vpop.f32.mrb[0].mxu0
    %v831 = vadd.f32 0.0, %v830
    %v832 = vpop.f32.mrb[0].mxu0
    %v833 = vpop.f32.mrb[0].mxu0
    %v834 = vadd.f32 0.0, %v833
    %v835 = vpop.f32.mrb[0].mxu0
    %836 = vdwg.mxu0
    %838 = vrot.lane.b32.xlu0 %v735, 64
    %v839 = vpop.permute.xlu0 %838
    %v841 = vsel %vm286, %v735, 0
    %v844 = vsel %vm286, %v839, 0
    %846 = vmatprep.subr.bf16.mxu0 0
    %847 = vmatpush1.bf16.xpose.msra.mxu0 %v844
    %848 = vmatprep.subr.bf16.mxu0 0
    %849 = vmatpush1.bf16.xpose.msra.mxu0 0
    %850 = vmatprep.subr.bf16.mxu0 0
    %851 = vmatpush1.bf16.xpose.msra.mxu0 0
    %852 = vmatprep.subr.bf16.mxu0 0
    %853 = vmatpush1.bf16.xpose.msra.mxu0 0
    %854 = vmatprep.subr.bf16.mxu0 0
    %855 = vmatpush1.bf16.xpose.msra.mxu0 0
    %856 = vmatprep.subr.bf16.mxu0 0
    %857 = vmatpush1.bf16.xpose.msra.mxu0 0
    %858 = vmatprep.subr.bf16.mxu0 0
    %859 = vmatpush1.bf16.xpose.msra.mxu0 0
    %860 = vmatprep.subr.bf16.mxu0 0
    %861 = vmatpush1.bf16.xpose.msra.mxu0 0
    %862 = vmatprep.subr.bf16.mxu0 0
    %863 = vmatpush1.bf16.xpose.msra.mxu0 0
    %864 = vmatprep.subr.bf16.mxu0 0
    %865 = vmatpush1.bf16.xpose.msra.mxu0 0
    %866 = vmatprep.subr.bf16.mxu0 0
    %867 = vmatpush1.bf16.xpose.msra.mxu0 0
    %868 = vmatprep.subr.bf16.mxu0 0
    %869 = vmatpush1.bf16.xpose.msra.mxu0 0
    %870 = vmatprep.subr.bf16.mxu0 0
    %871 = vmatpush1.bf16.xpose.msra.mxu0 0
    %872 = vmatprep.subr.bf16.mxu0 0
    %873 = vmatpush1.bf16.xpose.msra.mxu0 0
    %874 = vmatprep.subr.bf16.mxu0 0
    %875 = vmatpush1.bf16.xpose.msra.mxu0 0
    %876 = vmatprep.subr.bf16.mxu0 0
    %877 = vmatpush1.bf16.xpose.msra.mxu0 0
    %878 = vmatprep.mubr.bf16.mxu0 0
    %879 = vmatmul.mubr.bf16.gmra.mrb[0].mxu0 %v841
    %v880 = vpop.f32.mrb[0].mxu0
    %v881 = vadd.f32 0.0, %v880
    %v882 = vpop.f32.mrb[0].mxu0
    %v883 = vpop.f32.mrb[0].mxu0
    %v884 = vadd.f32 0.0, %v883
    %v885 = vpop.f32.mrb[0].mxu0
    %886 = vdwg.mxu0
    %888 = vrot.lane.b32.xlu0 %v736, 64
    %v889 = vpop.permute.xlu0 %888
    %v891 = vsel %vm286, %v736, 0
    %v894 = vsel %vm286, %v889, 0
    %896 = vmatprep.subr.bf16.mxu0 0
    %897 = vmatpush1.bf16.xpose.msra.mxu0 %v894
    %898 = vmatprep.subr.bf16.mxu0 0
    %899 = vmatpush1.bf16.xpose.msra.mxu0 0
    %900 = vmatprep.subr.bf16.mxu0 0
    %901 = vmatpush1.bf16.xpose.msra.mxu0 0
    %902 = vmatprep.subr.bf16.mxu0 0
    %903 = vmatpush1.bf16.xpose.msra.mxu0 0
    %904 = vmatprep.subr.bf16.mxu0 0
    %905 = vmatpush1.bf16.xpose.msra.mxu0 0
    %906 = vmatprep.subr.bf16.mxu0 0
    %907 = vmatpush1.bf16.xpose.msra.mxu0 0
    %908 = vmatprep.subr.bf16.mxu0 0
    %909 = vmatpush1.bf16.xpose.msra.mxu0 0
    %910 = vmatprep.subr.bf16.mxu0 0
    %911 = vmatpush1.bf16.xpose.msra.mxu0 0
    %912 = vmatprep.subr.bf16.mxu0 0
    %913 = vmatpush1.bf16.xpose.msra.mxu0 0
    %914 = vmatprep.subr.bf16.mxu0 0
    %915 = vmatpush1.bf16.xpose.msra.mxu0 0
    %916 = vmatprep.subr.bf16.mxu0 0
    %917 = vmatpush1.bf16.xpose.msra.mxu0 0
    %918 = vmatprep.subr.bf16.mxu0 0
    %919 = vmatpush1.bf16.xpose.msra.mxu0 0
    %920 = vmatprep.subr.bf16.mxu0 0
    %921 = vmatpush1.bf16.xpose.msra.mxu0 0
    %922 = vmatprep.subr.bf16.mxu0 0
    %923 = vmatpush1.bf16.xpose.msra.mxu0 0
    %924 = vmatprep.subr.bf16.mxu0 0
    %925 = vmatpush1.bf16.xpose.msra.mxu0 0
    %926 = vmatprep.subr.bf16.mxu0 0
    %927 = vmatpush1.bf16.xpose.msra.mxu0 0
    %928 = vmatprep.mubr.bf16.mxu0 0
    %929 = vmatmul.mubr.bf16.gmra.mrb[0].mxu0 %v891
    %v930 = vpop.f32.mrb[0].mxu0
    %v931 = vadd.f32 0.0, %v930
    %v932 = vpop.f32.mrb[0].mxu0
    %v933 = vpop.f32.mrb[0].mxu0
    %v934 = vadd.f32 0.0, %v933
    %v935 = vpop.f32.mrb[0].mxu0
    %936 = vdwg.mxu0
    %v937 = vmul.f32 %v781, 0.25
    %v938 = vmul.f32 %v784, 0.25
    %v939 = vmul.f32 %v831, 0.25
    %v940 = vmul.f32 %v834, 0.25
    %v941 = vmul.f32 %v881, 0.25
    %v942 = vmul.f32 %v884, 0.25
    %v943 = vmul.f32 %v931, 0.25
    %v944 = vmul.f32 %v934, 0.25
    %v945 = vadd.f32 %v937, %v584
    %v946 = vadd.f32 %v938, %v585
    %v947 = vadd.f32 %v939, %v584
    %v948 = vadd.f32 %v940, %v585
    %v949 = vadd.f32 %v941, %v584
    %v950 = vadd.f32 %v942, %v585
    %v951 = vadd.f32 %v943, %v584
    %v952 = vadd.f32 %v944, %v585
    %v953 = vsel %vm286, %v945, -inf
    %954 = vmax.xlane.f32.xlu0 %v953
    %v955 = vpop.xlane.xlu0 %954
    %v956 = vsel %vm286, %v946, -inf
    %957 = vmax.xlane.f32.xlu0 %v956
    %v958 = vpop.xlane.xlu0 %957
    %v959 = vsel %vm286, %v947, -inf
    %960 = vmax.xlane.f32.xlu0 %v959
    %v961 = vpop.xlane.xlu0 %960
    %v962 = vsel %vm286, %v948, -inf
    %963 = vmax.xlane.f32.xlu0 %v962
    %v964 = vpop.xlane.xlu0 %963
    %v965 = vsel %vm286, %v949, -inf
    %966 = vmax.xlane.f32.xlu0 %v965
    %v967 = vpop.xlane.xlu0 %966
    %v968 = vsel %vm286, %v950, -inf
    %969 = vmax.xlane.f32.xlu0 %v968
    %v970 = vpop.xlane.xlu0 %969
    %v971 = vsel %vm286, %v951, -inf
    %972 = vmax.xlane.f32.xlu0 %v971
    %v973 = vpop.xlane.xlu0 %972
    %v974 = vsel %vm286, %v952, -inf
    %975 = vmax.xlane.f32.xlu0 %v974
    %v976 = vpop.xlane.xlu0 %975
    %v977 = vsub.f32 %v945, %v955
    %v978 = vsub.f32 %v946, %v958
    %v979 = vsub.f32 %v947, %v961
    %v980 = vsub.f32 %v948, %v964
    %v981 = vsub.f32 %v949, %v967
    %v982 = vsub.f32 %v950, %v970
    %v983 = vsub.f32 %v951, %v973
    %v984 = vsub.f32 %v952, %v976
    %v985 = vmul.f32 %v977, 1.442695
    %v986 = vpow.pop %v985
    %v987 = vmul.f32 %v978, 1.442695
    %v988 = vpow.pop %v987
    %v989 = vmul.f32 %v979, 1.442695
    %v990 = vpow.pop %v989
    %v991 = vmul.f32 %v980, 1.442695
    %v992 = vpow.pop %v991
    %v993 = vmul.f32 %v981, 1.442695
    %v994 = vpow.pop %v993
    %v995 = vmul.f32 %v982, 1.442695
    %v996 = vpow.pop %v995
    %v997 = vmul.f32 %v983, 1.442695
    %v998 = vpow.pop %v997
    %v999 = vmul.f32 %v984, 1.442695
    %v1000 = vpow.pop %v999
    %v1001 = vsel %vm286, %v986, 0.0
    %1002 = vadd.xlane.f32.xlu0 %v1001
    %v1003 = vpop.xlane.xlu0 %1002
    %v1004 = vsel %vm286, %v988, 0.0
    %1005 = vadd.xlane.f32.xlu0 %v1004
    %v1006 = vpop.xlane.xlu0 %1005
    %v1007 = vsel %vm286, %v990, 0.0
    %1008 = vadd.xlane.f32.xlu0 %v1007
    %v1009 = vpop.xlane.xlu0 %1008
    %v1010 = vsel %vm286, %v992, 0.0
    %1011 = vadd.xlane.f32.xlu0 %v1010
    %v1012 = vpop.xlane.xlu0 %1011
    %v1013 = vsel %vm286, %v994, 0.0
    %1014 = vadd.xlane.f32.xlu0 %v1013
    %v1015 = vpop.xlane.xlu0 %1014
    %v1016 = vsel %vm286, %v996, 0.0
    %1017 = vadd.xlane.f32.xlu0 %v1016
    %v1018 = vpop.xlane.xlu0 %1017
    %v1019 = vsel %vm286, %v998, 0.0
    %1020 = vadd.xlane.f32.xlu0 %v1019
    %v1021 = vpop.xlane.xlu0 %1020
    %v1022 = vsel %vm286, %v1000, 0.0
    %1023 = vadd.xlane.f32.xlu0 %v1022
    %v1024 = vpop.xlane.xlu0 %1023
    %v1025 = vrcp.pop %v1003
    %v1026 = vrcp.pop %v1006
    %v1027 = vrcp.pop %v1009
    %v1028 = vrcp.pop %v1012
    %v1029 = vrcp.pop %v1015
    %v1030 = vrcp.pop %v1018
    %v1031 = vrcp.pop %v1021
    %v1032 = vrcp.pop %v1024
    %v1033 = vmul.f32 %v1003, %v1025
    %v1034 = vmul.f32 %v1006, %v1026
    %v1035 = vmul.f32 %v1009, %v1027
    %v1036 = vmul.f32 %v1012, %v1028
    %v1037 = vmul.f32 %v1015, %v1029
    %v1038 = vmul.f32 %v1018, %v1030
    %v1039 = vmul.f32 %v1021, %v1031
    %v1040 = vmul.f32 %v1024, %v1032
    %v1041 = vsub.f32 2.0, %v1033
    %v1042 = vsub.f32 2.0, %v1034
    %v1043 = vsub.f32 2.0, %v1035
    %v1044 = vsub.f32 2.0, %v1036
    %v1045 = vsub.f32 2.0, %v1037
    %v1046 = vsub.f32 2.0, %v1038
    %v1047 = vsub.f32 2.0, %v1039
    %v1048 = vsub.f32 2.0, %v1040
    %v1049 = vmul.f32 %v1025, %v1041
    %v1050 = vmul.f32 %v1026, %v1042
    %v1051 = vmul.f32 %v1027, %v1043
    %v1052 = vmul.f32 %v1028, %v1044
    %v1053 = vmul.f32 %v1029, %v1045
    %v1054 = vmul.f32 %v1030, %v1046
    %v1055 = vmul.f32 %v1031, %v1047
    %v1056 = vmul.f32 %v1032, %v1048
    %v1057 = vmul.f32 %v986, %v1049
    %v1058 = vmul.f32 %v988, %v1050
    %v1059 = vmul.f32 %v990, %v1051
    %v1060 = vmul.f32 %v992, %v1052
    %v1061 = vmul.f32 %v994, %v1053
    %v1062 = vmul.f32 %v996, %v1054
    %v1063 = vmul.f32 %v998, %v1055
    %v1064 = vmul.f32 %v1000, %v1056
    %v1065 = vpack.c.bf16 %v1058, %v1057
    %v1066 = vpack.c.bf16 %v1060, %v1059
    %v1067 = vpack.c.bf16 %v1062, %v1061
    %v1068 = vpack.c.bf16 %v1064, %v1063
    %v1069 = vpack.c.bf16 %v691, %v687
    %v1070 = vpack.c.bf16 %v718, %v716
    %v1071 = vpack.c.bf16 %v724, %v722
    %v1072 = vpack.c.bf16 %v730, %v728
    %v1074 = vsel %vm286, %v1065, 0
    %1076 = vmatprep.subr.bf16.mxu0 0
    %1077 = vmatpush1.bf16.msra.mxu0 %v1069
    %1078 = vmatprep.subr.bf16.mxu0 0
    %1079 = vmatpush1.bf16.msra.mxu0 0
    %1080 = vmatprep.subr.bf16.mxu0 0
    %1081 = vmatpush1.bf16.msra.mxu0 0
    %1082 = vmatprep.subr.bf16.mxu0 0
    %1083 = vmatpush1.bf16.msra.mxu0 0
    %1084 = vmatprep.subr.bf16.mxu0 0
    %1085 = vmatpush1.bf16.msra.mxu0 0
    %1086 = vmatprep.subr.bf16.mxu0 0
    %1087 = vmatpush1.bf16.msra.mxu0 0
    %1088 = vmatprep.subr.bf16.mxu0 0
    %1089 = vmatpush1.bf16.msra.mxu0 0
    %1090 = vmatprep.subr.bf16.mxu0 0
    %1091 = vmatpush1.bf16.msra.mxu0 0
    %1092 = vmatprep.subr.bf16.mxu0 0
    %1093 = vmatpush1.bf16.msra.mxu0 0
    %1094 = vmatprep.subr.bf16.mxu0 0
    %1095 = vmatpush1.bf16.msra.mxu0 0
    %1096 = vmatprep.subr.bf16.mxu0 0
    %1097 = vmatpush1.bf16.msra.mxu0 0
    %1098 = vmatprep.subr.bf16.mxu0 0
    %1099 = vmatpush1.bf16.msra.mxu0 0
    %1100 = vmatprep.subr.bf16.mxu0 0
    %1101 = vmatpush1.bf16.msra.mxu0 0
    %1102 = vmatprep.subr.bf16.mxu0 0
    %1103 = vmatpush1.bf16.msra.mxu0 0
    %1104 = vmatprep.subr.bf16.mxu0 0
    %1105 = vmatpush1.bf16.msra.mxu0 0
    %1106 = vmatprep.subr.bf16.mxu0 0
    %1107 = vmatpush1.bf16.msra.mxu0 0
    %1108 = vmatprep.mubr.bf16.mxu0 0
    %1109 = vmatmul.mubr.bf16.gmra.mrb[0].mxu0 %v1074
    %v1110 = vpop.f32.mrb[0].mxu0
    %v1111 = vadd.f32 0.0, %v1110
    %v1112 = vpop.f32.mrb[0].mxu0
    %v1113 = vpop.f32.mrb[0].mxu0
    %v1114 = vadd.f32 0.0, %v1113
    %v1115 = vpop.f32.mrb[0].mxu0
    %1116 = vdwg.mxu0
    %v1118 = vsel %vm286, %v1066, 0
    %1120 = vmatprep.subr.bf16.mxu0 0
    %1121 = vmatpush1.bf16.msra.mxu0 %v1070
    %1122 = vmatprep.subr.bf16.mxu0 0
    %1123 = vmatpush1.bf16.msra.mxu0 0
    %1124 = vmatprep.subr.bf16.mxu0 0
    %1125 = vmatpush1.bf16.msra.mxu0 0
    %1126 = vmatprep.subr.bf16.mxu0 0
    %1127 = vmatpush1.bf16.msra.mxu0 0
    %1128 = vmatprep.subr.bf16.mxu0 0
    %1129 = vmatpush1.bf16.msra.mxu0 0
    %1130 = vmatprep.subr.bf16.mxu0 0
    %1131 = vmatpush1.bf16.msra.mxu0 0
    %1132 = vmatprep.subr.bf16.mxu0 0
    %1133 = vmatpush1.bf16.msra.mxu0 0
    %1134 = vmatprep.subr.bf16.mxu0 0
    %1135 = vmatpush1.bf16.msra.mxu0 0
    %1136 = vmatprep.subr.bf16.mxu0 0
    %1137 = vmatpush1.bf16.msra.mxu0 0
    %1138 = vmatprep.subr.bf16.mxu0 0
    %1139 = vmatpush1.bf16.msra.mxu0 0
    %1140 = vmatprep.subr.bf16.mxu0 0
    %1141 = vmatpush1.bf16.msra.mxu0 0
    %1142 = vmatprep.subr.bf16.mxu0 0
    %1143 = vmatpush1.bf16.msra.mxu0 0
    %1144 = vmatprep.subr.bf16.mxu0 0
    %1145 = vmatpush1.bf16.msra.mxu0 0
    %1146 = vmatprep.subr.bf16.mxu0 0
    %1147 = vmatpush1.bf16.msra.mxu0 0
    %1148 = vmatprep.subr.bf16.mxu0 0
    %1149 = vmatpush1.bf16.msra.mxu0 0
    %1150 = vmatprep.subr.bf16.mxu0 0
    %1151 = vmatpush1.bf16.msra.mxu0 0
    %1152 = vmatprep.mubr.bf16.mxu0 0
    %1153 = vmatmul.mubr.bf16.gmra.mrb[0].mxu0 %v1118
    %v1154 = vpop.f32.mrb[0].mxu0
    %v1155 = vadd.f32 0.0, %v1154
    %v1156 = vpop.f32.mrb[0].mxu0
    %v1157 = vpop.f32.mrb[0].mxu0
    %v1158 = vadd.f32 0.0, %v1157
    %v1159 = vpop.f32.mrb[0].mxu0
    %1160 = vdwg.mxu0
    %v1162 = vsel %vm286, %v1067, 0
    %1164 = vmatprep.subr.bf16.mxu0 0
    %1165 = vmatpush1.bf16.msra.mxu0 %v1071
    %1166 = vmatprep.subr.bf16.mxu0 0
    %1167 = vmatpush1.bf16.msra.mxu0 0
    %1168 = vmatprep.subr.bf16.mxu0 0
    %1169 = vmatpush1.bf16.msra.mxu0 0
    %1170 = vmatprep.subr.bf16.mxu0 0
    %1171 = vmatpush1.bf16.msra.mxu0 0
    %1172 = vmatprep.subr.bf16.mxu0 0
    %1173 = vmatpush1.bf16.msra.mxu0 0
    %1174 = vmatprep.subr.bf16.mxu0 0
    %1175 = vmatpush1.bf16.msra.mxu0 0
    %1176 = vmatprep.subr.bf16.mxu0 0
    %1177 = vmatpush1.bf16.msra.mxu0 0
    %1178 = vmatprep.subr.bf16.mxu0 0
    %1179 = vmatpush1.bf16.msra.mxu0 0
    %1180 = vmatprep.subr.bf16.mxu0 0
    %1181 = vmatpush1.bf16.msra.mxu0 0
    %1182 = vmatprep.subr.bf16.mxu0 0
    %1183 = vmatpush1.bf16.msra.mxu0 0
    %1184 = vmatprep.subr.bf16.mxu0 0
    %1185 = vmatpush1.bf16.msra.mxu0 0
    %1186 = vmatprep.subr.bf16.mxu0 0
    %1187 = vmatpush1.bf16.msra.mxu0 0
    %1188 = vmatprep.subr.bf16.mxu0 0
    %1189 = vmatpush1.bf16.msra.mxu0 0
    %1190 = vmatprep.subr.bf16.mxu0 0
    %1191 = vmatpush1.bf16.msra.mxu0 0
    %1192 = vmatprep.subr.bf16.mxu0 0
    %1193 = vmatpush1.bf16.msra.mxu0 0
    %1194 = vmatprep.subr.bf16.mxu0 0
    %1195 = vmatpush1.bf16.msra.mxu0 0
    %1196 = vmatprep.mubr.bf16.mxu0 0
    %1197 = vmatmul.mubr.bf16.gmra.mrb[0].mxu0 %v1162
    %v1198 = vpop.f32.mrb[0].mxu0
    %v1199 = vadd.f32 0.0, %v1198
    %v1200 = vpop.f32.mrb[0].mxu0
    %v1201 = vpop.f32.mrb[0].mxu0
    %v1202 = vadd.f32 0.0, %v1201
    %v1203 = vpop.f32.mrb[0].mxu0
    %1204 = vdwg.mxu0
    %v1206 = vsel %vm286, %v1068, 0
    %1208 = vmatprep.subr.bf16.mxu0 0
    %1209 = vmatpush1.bf16.msra.mxu0 %v1072
    %1210 = vmatprep.subr.bf16.mxu0 0
    %1211 = vmatpush1.bf16.msra.mxu0 0
    %1212 = vmatprep.subr.bf16.mxu0 0
    %1213 = vmatpush1.bf16.msra.mxu0 0
    %1214 = vmatprep.subr.bf16.mxu0 0
    %1215 = vmatpush1.bf16.msra.mxu0 0
    %1216 = vmatprep.subr.bf16.mxu0 0
    %1217 = vmatpush1.bf16.msra.mxu0 0
    %1218 = vmatprep.subr.bf16.mxu0 0
    %1219 = vmatpush1.bf16.msra.mxu0 0
    %1220 = vmatprep.subr.bf16.mxu0 0
    %1221 = vmatpush1.bf16.msra.mxu0 0
    %1222 = vmatprep.subr.bf16.mxu0 0
    %1223 = vmatpush1.bf16.msra.mxu0 0
    %1224 = vmatprep.subr.bf16.mxu0 0
    %1225 = vmatpush1.bf16.msra.mxu0 0
    %1226 = vmatprep.subr.bf16.mxu0 0
    %1227 = vmatpush1.bf16.msra.mxu0 0
    %1228 = vmatprep.subr.bf16.mxu0 0
    %1229 = vmatpush1.bf16.msra.mxu0 0
    %1230 = vmatprep.subr.bf16.mxu0 0
    %1231 = vmatpush1.bf16.msra.mxu0 0
    %1232 = vmatprep.subr.bf16.mxu0 0
    %1233 = vmatpush1.bf16.msra.mxu0 0
    %1234 = vmatprep.subr.bf16.mxu0 0
    %1235 = vmatpush1.bf16.msra.mxu0 0
    %1236 = vmatprep.subr.bf16.mxu0 0
    %1237 = vmatpush1.bf16.msra.mxu0 0
    %1238 = vmatprep.subr.bf16.mxu0 0
    %1239 = vmatpush1.bf16.msra.mxu0 0
    %1240 = vmatprep.mubr.bf16.mxu0 0
    %1241 = vmatmul.mubr.bf16.gmra.mrb[0].mxu0 %v1206
    %v1242 = vpop.f32.mrb[0].mxu0
    %v1243 = vadd.f32 0.0, %v1242
    %v1244 = vpop.f32.mrb[0].mxu0
    %v1245 = vpop.f32.mrb[0].mxu0
    %v1246 = vadd.f32 0.0, %v1245
    %v1247 = vpop.f32.mrb[0].mxu0
    %1248 = vdwg.mxu0
    %1251 = vrot.lane.b32.xlu0 %v1155, 16
    %v1252 = vpop.permute.xlu0 %1251
    %1253 = vrot.lane.b32.xlu0 %v1158, 16
    %v1254 = vpop.permute.xlu0 %1253
    %1259 = vrot.lane.b32.xlu0 %v1199, 32
    %v1260 = vpop.permute.xlu0 %1259
    %1261 = vrot.lane.b32.xlu0 %v1202, 32
    %v1262 = vpop.permute.xlu0 %1261
    %1267 = vrot.lane.b32.xlu0 %v1243, 48
    %v1268 = vpop.permute.xlu0 %1267
    %1269 = vrot.lane.b32.xlu0 %v1246, 48
    %v1270 = vpop.permute.xlu0 %1269
    %v1273 = vsel %vm286, %v1111, %v1252
    %v1274 = vsel %vm286, %v1114, %v1254
    %v1275 = vsel %vm388, %v1273, %v1260
    %v1276 = vsel %vm388, %v1274, %v1262
    %vm1277 = vcmask 392192
    %v1278 = vsel %vm1277, %v1275, %v1268
    %v1279 = vsel %vm1277, %v1276, %v1270
    %v1280 = vpack.c.bf16 %v1279, %v1278
    %v1281 = vld [vmem:[%s8] sm:$0xf]
    %v1282 = vld [vmem:[%s8 + $0x4] sm:$0xf]
    %v1283 = vld [vmem:[%s8 + $0x8] sm:$0xf]
    %v1284 = vld [vmem:[%s8 + $0xc] sm:$0xf]
    %v1285 = vld [vmem:[%s8 + $0x10] sm:$0xf]
    %v1286 = vld [vmem:[%s8 + $0x14] sm:$0xf]
    %v1287 = vld [vmem:[%s8 + $0x18] sm:$0xf]
    %v1288 = vld [vmem:[%s8 + $0x1c] sm:$0xf]
    %v1289 = vld [vmem:[%s9] sm:$0x1]
    %v1291 = vlaneseq
    %v1292 = vshrl.u32 %v1291, 7
    %v1293 = vsub.s32 0, %v1292
    %v1294 = vrot.slane %v1289, %v1293
    %v1304 = vunpack.c.l.b16 %v1281
    %v1305 = vunpack.c.l.b16 %v1282
    %v1306 = vunpack.c.l.b16 %v1283
    %v1307 = vunpack.c.l.b16 %v1284
    %v1308 = vunpack.c.l.b16 %v1285
    %v1309 = vunpack.c.l.b16 %v1286
    %v1310 = vunpack.c.l.b16 %v1287
    %v1311 = vunpack.c.l.b16 %v1288
    %v1312 = vpack.c.b16 %v1305, %v1304
    %v1313 = vpack.c.b16 %v1307, %v1306
    %v1314 = vpack.c.b16 %v1309, %v1308
    %v1315 = vpack.c.b16 %v1311, %v1310
    %v1321 = vsel %vm502, %v1280, 0
    %1323 = vmatprep.subr.bf16.mxu0 0
    %1324 = vmatpush1.bf16.msra.mxu0 %v1312
    %1325 = vmatprep.subr.bf16.mxu0 0
    %1326 = vmatpush1.bf16.msra.mxu0 %v1313
    %1327 = vmatprep.subr.bf16.mxu0 0
    %1328 = vmatpush1.bf16.msra.mxu0 %v1314
    %1329 = vmatprep.subr.bf16.mxu0 0
    %1330 = vmatpush1.bf16.msra.mxu0 %v1315
    %1331 = vmatprep.subr.bf16.mxu0 0
    %1332 = vmatpush1.bf16.msra.mxu0 0
    %1333 = vmatprep.subr.bf16.mxu0 0
    %1334 = vmatpush1.bf16.msra.mxu0 0
    %1335 = vmatprep.subr.bf16.mxu0 0
    %1336 = vmatpush1.bf16.msra.mxu0 0
    %1337 = vmatprep.subr.bf16.mxu0 0
    %1338 = vmatpush1.bf16.msra.mxu0 0
    %1339 = vmatprep.subr.bf16.mxu0 0
    %1340 = vmatpush1.bf16.msra.mxu0 0
    %1341 = vmatprep.subr.bf16.mxu0 0
    %1342 = vmatpush1.bf16.msra.mxu0 0
    %1343 = vmatprep.subr.bf16.mxu0 0
    %1344 = vmatpush1.bf16.msra.mxu0 0
    %1345 = vmatprep.subr.bf16.mxu0 0
    %1346 = vmatpush1.bf16.msra.mxu0 0
    %1347 = vmatprep.subr.bf16.mxu0 0
    %1348 = vmatpush1.bf16.msra.mxu0 0
    %1349 = vmatprep.subr.bf16.mxu0 0
    %1350 = vmatpush1.bf16.msra.mxu0 0
    %1351 = vmatprep.subr.bf16.mxu0 0
    %1352 = vmatpush1.bf16.msra.mxu0 0
    %1353 = vmatprep.subr.bf16.mxu0 0
    %1354 = vmatpush1.bf16.msra.mxu0 0
    %1355 = vmatprep.mubr.bf16.mxu0 0
    %1356 = vmatmul.mubr.bf16.gmra.mrb[0].mxu0 %v1321
    %v1357 = vpop.f32.mrb[0].mxu0
    %v1358 = vadd.f32 %v1294, %v1357
    %v1359 = vpop.f32.mrb[0].mxu0
    %v1360 = vpop.f32.mrb[0].mxu0
    %v1361 = vadd.f32 %v1294, %v1360
    %v1362 = vpop.f32.mrb[0].mxu0
    %1363 = vdwg.mxu0
    %v1364 = vadd.f32 %v544, %v1358
    %v1365 = vadd.f32 %v545, %v1361
    %v1366 = vld [vmem:[%s10] sm:$0x1]
    %v1367 = vld [vmem:[%s11] sm:$0x1]
    %v1368 = vsel %vm502, %v1364, 0.0
    %1369 = vadd.xlane.f32.xlu0 %v1368
    %v1370 = vpop.xlane.xlu0 %1369
    %v1371 = vsel %vm502, %v1365, 0.0
    %1372 = vadd.xlane.f32.xlu0 %v1371
    %v1373 = vpop.xlane.xlu0 %1372
    %v1374 = vmul.f32 %v1370, %v509
    %v1375 = vmul.f32 %v1373, %v509
    %v1376 = vsub.f32 %v1364, %v1374
    %v1377 = vsub.f32 %v1365, %v1375
    %v1378 = vmul.f32 %v1376, %v1376
    %v1379 = vmul.f32 %v1377, %v1377
    %v1380 = vsel %vm502, %v1378, 0.0
    %1381 = vadd.xlane.f32.xlu0 %v1380
    %v1382 = vpop.xlane.xlu0 %1381
    %v1383 = vsel %vm502, %v1379, 0.0
    %1384 = vadd.xlane.f32.xlu0 %v1383
    %v1385 = vpop.xlane.xlu0 %1384
    %v1386 = vmul.f32 %v1382, %v509
    %v1387 = vmul.f32 %v1385, %v509
    %v1388 = vadd.f32 %v1386, 1e-12
    %v1389 = vadd.f32 %v1387, 1e-12
    %v1390 = vrsqrt.pop %v1388
    %v1391 = vrsqrt.pop %v1389
    %v1392 = vmul.f32 %v1376, %v1390
    %v1393 = vmul.f32 %v1377, %v1391
    %v1395 = vlaneseq
    %v1396 = vshrl.u32 %v1395, 7
    %v1397 = vsub.s32 0, %v1396
    %v1398 = vrot.slane %v1366, %v1397
    %v1400 = vmul.f32 %v1392, %v1398
    %v1401 = vmul.f32 %v1393, %v1398
    %v1403 = vlaneseq
    %v1404 = vshrl.u32 %v1403, 7
    %v1405 = vsub.s32 0, %v1404
    %v1406 = vrot.slane %v1367, %v1405
    %v1408 = vadd.f32 %v1400, %v1406
    %v1409 = vadd.f32 %v1401, %v1406
    %v1410 = vpack.c.bf16 %v1409, %v1408
    %v1411 = vld [vmem:[%s12] sm:$0xff]
    %v1412 = vld [vmem:[%s12 + $0x8] sm:$0xff]
    %v1413 = vld [vmem:[%s12 + $0x10] sm:$0xff]
    %v1414 = vld [vmem:[%s12 + $0x18] sm:$0xff]
    %v1415 = vld [vmem:[%s12 + $0x20] sm:$0xff]
    %v1416 = vld [vmem:[%s12 + $0x28] sm:$0xff]
    %v1417 = vld [vmem:[%s12 + $0x30] sm:$0xff]
    %v1418 = vld [vmem:[%s12 + $0x38] sm:$0xff]
    %v1419 = vld [vmem:[%s13] sm:$0x3]
    %v1421 = vlaneseq
    %v1422 = vshrl.u32 %v1421, 7
    %v1423 = vsub.s32 0, %v1422
    %v1424 = vrot.slane %v1419, %v1423
    %v1425 = vlaneseq
    %v1426 = vshrl.u32 %v1425, 7
    %v1427 = vsub.s32 1, %v1426
    %v1428 = vrot.slane %v1419, %v1427
    %v1439 = vunpack.c.l.b16 %v1411
    %v1440 = vunpack.c.h.b16 %v1411
    %v1441 = vunpack.c.l.b16 %v1412
    %v1442 = vunpack.c.h.b16 %v1412
    %v1443 = vunpack.c.l.b16 %v1413
    %v1444 = vunpack.c.h.b16 %v1413
    %v1445 = vunpack.c.l.b16 %v1414
    %v1446 = vunpack.c.h.b16 %v1414
    %v1447 = vunpack.c.l.b16 %v1415
    %v1448 = vunpack.c.h.b16 %v1415
    %v1449 = vunpack.c.l.b16 %v1416
    %v1450 = vunpack.c.h.b16 %v1416
    %v1451 = vunpack.c.l.b16 %v1417
    %v1452 = vunpack.c.h.b16 %v1417
    %v1453 = vunpack.c.l.b16 %v1418
    %v1454 = vunpack.c.h.b16 %v1418
    %v1455 = vpack.c.b16 %v1441, %v1439
    %v1456 = vpack.c.b16 %v1442, %v1440
    %v1457 = vpack.c.b16 %v1445, %v1443
    %v1458 = vpack.c.b16 %v1446, %v1444
    %v1459 = vpack.c.b16 %v1449, %v1447
    %v1460 = vpack.c.b16 %v1450, %v1448
    %v1461 = vpack.c.b16 %v1453, %v1451
    %v1462 = vpack.c.b16 %v1454, %v1452
    %v1472 = vsel %vm502, %v1410, 0
    %1474 = vmatprep.subr.bf16.mxu0 %v1456
    %1475 = vmatpush1.bf16.msra.mxu0 %v1455
    %1476 = vmatprep.subr.bf16.mxu0 %v1458
    %1477 = vmatpush1.bf16.msra.mxu0 %v1457
    %1478 = vmatprep.subr.bf16.mxu0 %v1460
    %1479 = vmatpush1.bf16.msra.mxu0 %v1459
    %1480 = vmatprep.subr.bf16.mxu0 %v1462
    %1481 = vmatpush1.bf16.msra.mxu0 %v1461
    %1482 = vmatprep.subr.bf16.mxu0 0
    %1483 = vmatpush1.bf16.msra.mxu0 0
    %1484 = vmatprep.subr.bf16.mxu0 0
    %1485 = vmatpush1.bf16.msra.mxu0 0
    %1486 = vmatprep.subr.bf16.mxu0 0
    %1487 = vmatpush1.bf16.msra.mxu0 0
    %1488 = vmatprep.subr.bf16.mxu0 0
    %1489 = vmatpush1.bf16.msra.mxu0 0
    %1490 = vmatprep.subr.bf16.mxu0 0
    %1491 = vmatpush1.bf16.msra.mxu0 0
    %1492 = vmatprep.subr.bf16.mxu0 0
    %1493 = vmatpush1.bf16.msra.mxu0 0
    %1494 = vmatprep.subr.bf16.mxu0 0
    %1495 = vmatpush1.bf16.msra.mxu0 0
    %1496 = vmatprep.subr.bf16.mxu0 0
    %1497 = vmatpush1.bf16.msra.mxu0 0
    %1498 = vmatprep.subr.bf16.mxu0 0
    %1499 = vmatpush1.bf16.msra.mxu0 0
    %1500 = vmatprep.subr.bf16.mxu0 0
    %1501 = vmatpush1.bf16.msra.mxu0 0
    %1502 = vmatprep.subr.bf16.mxu0 0
    %1503 = vmatpush1.bf16.msra.mxu0 0
    %1504 = vmatprep.subr.bf16.mxu0 0
    %1505 = vmatpush1.bf16.msra.mxu0 0
    %1506 = vmatprep.mubr.bf16.mxu0 0
    %1507 = vmatmul.mubr.bf16.gmra.mrb[0].mxu0 %v1472
    %v1508 = vpop.f32.mrb[0].mxu0
    %v1509 = vadd.f32 %v1424, %v1508
    %v1510 = vpop.f32.mrb[0].mxu0
    %v1511 = vadd.f32 %v1428, %v1510
    %v1512 = vpop.f32.mrb[0].mxu0
    %v1513 = vadd.f32 %v1424, %v1512
    %v1514 = vpop.f32.mrb[0].mxu0
    %v1515 = vadd.f32 %v1428, %v1514
    %1516 = vdwg.mxu0
    %v1517 = vmul.f32 %v1509, 0.5
    %v1518 = vmul.f32 %v1511, 0.5
    %v1519 = vmul.f32 %v1513, 0.5
    %v1520 = vmul.f32 %v1515, 0.5
    %v1521 = vmul.f32 %v1509, 0.70710677
    %v1522 = vmul.f32 %v1511, 0.70710677
    %v1523 = vmul.f32 %v1513, 0.70710677
    %v1524 = vmul.f32 %v1515, 0.70710677
    %v1525 = verf.f32.pop %v1521
    %v1526 = verf.f32.pop %v1522
    %v1527 = verf.f32.pop %v1523
    %v1528 = verf.f32.pop %v1524
    %v1529 = vadd.f32 %v1525, 1.0
    %v1530 = vadd.f32 %v1526, 1.0
    %v1531 = vadd.f32 %v1527, 1.0
    %v1532 = vadd.f32 %v1528, 1.0
    %v1533 = vmul.f32 %v1517, %v1529
    %v1534 = vmul.f32 %v1518, %v1530
    %v1535 = vmul.f32 %v1519, %v1531
    %v1536 = vmul.f32 %v1520, %v1532
    %v1537 = vpack.c.bf16 %v1535, %v1533
    %v1538 = vpack.c.bf16 %v1536, %v1534
    %v1539 = vld [vmem:[%s14] sm:$0xf]
    %v1540 = vld [vmem:[%s14 + $0x4] sm:$0xf]
    %v1541 = vld [vmem:[%s14 + $0x8] sm:$0xf]
    %v1542 = vld [vmem:[%s14 + $0xc] sm:$0xf]
    %v1543 = vld [vmem:[%s14 + $0x10] sm:$0xf]
    %v1544 = vld [vmem:[%s14 + $0x14] sm:$0xf]
    %v1545 = vld [vmem:[%s14 + $0x18] sm:$0xf]
    %v1546 = vld [vmem:[%s14 + $0x1c] sm:$0xf]
    %v1547 = vld [vmem:[%s14 + $0x20] sm:$0xf]
    %v1548 = vld [vmem:[%s14 + $0x24] sm:$0xf]
    %v1549 = vld [vmem:[%s14 + $0x28] sm:$0xf]
    %v1550 = vld [vmem:[%s14 + $0x2c] sm:$0xf]
    %v1551 = vld [vmem:[%s14 + $0x30] sm:$0xf]
    %v1552 = vld [vmem:[%s14 + $0x34] sm:$0xf]
    %v1553 = vld [vmem:[%s14 + $0x38] sm:$0xf]
    %v1554 = vld [vmem:[%s14 + $0x3c] sm:$0xf]
    %v1555 = vld [vmem:[%s14 + $0x40] sm:$0xf]
    %v1556 = vld [vmem:[%s14 + $0x44] sm:$0xf]
    %v1557 = vld [vmem:[%s14 + $0x48] sm:$0xf]
    %v1558 = vld [vmem:[%s14 + $0x4c] sm:$0xf]
    %v1559 = vld [vmem:[%s14 + $0x50] sm:$0xf]
    %v1560 = vld [vmem:[%s14 + $0x54] sm:$0xf]
    %v1561 = vld [vmem:[%s14 + $0x58] sm:$0xf]
    %v1562 = vld [vmem:[%s14 + $0x5c] sm:$0xf]
    %v1563 = vld [vmem:[%s14 + $0x60] sm:$0xf]
    %v1564 = vld [vmem:[%s14 + $0x64] sm:$0xf]
    %v1565 = vld [vmem:[%s14 + $0x68] sm:$0xf]
    %v1566 = vld [vmem:[%s14 + $0x6c] sm:$0xf]
    %v1567 = vld [vmem:[%s14 + $0x70] sm:$0xf]
    %v1568 = vld [vmem:[%s14 + $0x74] sm:$0xf]
    %v1569 = vld [vmem:[%s14 + $0x78] sm:$0xf]
    %v1570 = vld [vmem:[%s14 + $0x7c] sm:$0xf]
    %v1571 = vld [vmem:[%s15] sm:$0x1]
    %v1573 = vlaneseq
    %v1574 = vshrl.u32 %v1573, 7
    %v1575 = vsub.s32 0, %v1574
    %v1576 = vrot.slane %v1571, %v1575
    %v1610 = vunpack.c.l.b16 %v1539
    %v1611 = vunpack.c.l.b16 %v1540
    %v1612 = vunpack.c.l.b16 %v1541
    %v1613 = vunpack.c.l.b16 %v1542
    %v1614 = vunpack.c.l.b16 %v1543
    %v1615 = vunpack.c.l.b16 %v1544
    %v1616 = vunpack.c.l.b16 %v1545
    %v1617 = vunpack.c.l.b16 %v1546
    %v1618 = vunpack.c.l.b16 %v1547
    %v1619 = vunpack.c.l.b16 %v1548
    %v1620 = vunpack.c.l.b16 %v1549
    %v1621 = vunpack.c.l.b16 %v1550
    %v1622 = vunpack.c.l.b16 %v1551
    %v1623 = vunpack.c.l.b16 %v1552
    %v1624 = vunpack.c.l.b16 %v1553
    %v1625 = vunpack.c.l.b16 %v1554
    %v1626 = vunpack.c.l.b16 %v1555
    %v1627 = vunpack.c.l.b16 %v1556
    %v1628 = vunpack.c.l.b16 %v1557
    %v1629 = vunpack.c.l.b16 %v1558
    %v1630 = vunpack.c.l.b16 %v1559
    %v1631 = vunpack.c.l.b16 %v1560
    %v1632 = vunpack.c.l.b16 %v1561
    %v1633 = vunpack.c.l.b16 %v1562
    %v1634 = vunpack.c.l.b16 %v1563
    %v1635 = vunpack.c.l.b16 %v1564
    %v1636 = vunpack.c.l.b16 %v1565
    %v1637 = vunpack.c.l.b16 %v1566
    %v1638 = vunpack.c.l.b16 %v1567
    %v1639 = vunpack.c.l.b16 %v1568
    %v1640 = vunpack.c.l.b16 %v1569
    %v1641 = vunpack.c.l.b16 %v1570
    %v1642 = vpack.c.b16 %v1611, %v1610
    %v1643 = vpack.c.b16 %v1613, %v1612
    %v1644 = vpack.c.b16 %v1615, %v1614
    %v1645 = vpack.c.b16 %v1617, %v1616
    %v1646 = vpack.c.b16 %v1619, %v1618
    %v1647 = vpack.c.b16 %v1621, %v1620
    %v1648 = vpack.c.b16 %v1623, %v1622
    %v1649 = vpack.c.b16 %v1625, %v1624
    %v1650 = vpack.c.b16 %v1627, %v1626
    %v1651 = vpack.c.b16 %v1629, %v1628
    %v1652 = vpack.c.b16 %v1631, %v1630
    %v1653 = vpack.c.b16 %v1633, %v1632
    %v1654 = vpack.c.b16 %v1635, %v1634
    %v1655 = vpack.c.b16 %v1637, %v1636
    %v1656 = vpack.c.b16 %v1639, %v1638
    %v1657 = vpack.c.b16 %v1641, %v1640
    %1674 = vmatprep.subr.bf16.mxu0 0
    %1675 = vmatpush1.bf16.msra.mxu0 %v1642
    %1676 = vmatprep.subr.bf16.mxu0 0
    %1677 = vmatpush1.bf16.msra.mxu0 %v1643
    %1678 = vmatprep.subr.bf16.mxu0 0
    %1679 = vmatpush1.bf16.msra.mxu0 %v1644
    %1680 = vmatprep.subr.bf16.mxu0 0
    %1681 = vmatpush1.bf16.msra.mxu0 %v1645
    %1682 = vmatprep.subr.bf16.mxu0 0
    %1683 = vmatpush1.bf16.msra.mxu0 %v1646
    %1684 = vmatprep.subr.bf16.mxu0 0
    %1685 = vmatpush1.bf16.msra.mxu0 %v1647
    %1686 = vmatprep.subr.bf16.mxu0 0
    %1687 = vmatpush1.bf16.msra.mxu0 %v1648
    %1688 = vmatprep.subr.bf16.mxu0 0
    %1689 = vmatpush1.bf16.msra.mxu0 %v1649
    %1690 = vmatprep.subr.bf16.mxu0 0
    %1691 = vmatpush1.bf16.msra.mxu0 %v1650
    %1692 = vmatprep.subr.bf16.mxu0 0
    %1693 = vmatpush1.bf16.msra.mxu0 %v1651
    %1694 = vmatprep.subr.bf16.mxu0 0
    %1695 = vmatpush1.bf16.msra.mxu0 %v1652
    %1696 = vmatprep.subr.bf16.mxu0 0
    %1697 = vmatpush1.bf16.msra.mxu0 %v1653
    %1698 = vmatprep.subr.bf16.mxu0 0
    %1699 = vmatpush1.bf16.msra.mxu0 %v1654
    %1700 = vmatprep.subr.bf16.mxu0 0
    %1701 = vmatpush1.bf16.msra.mxu0 %v1655
    %1702 = vmatprep.subr.bf16.mxu0 0
    %1703 = vmatpush1.bf16.msra.mxu0 %v1656
    %1704 = vmatprep.subr.bf16.mxu0 0
    %1705 = vmatpush1.bf16.msra.mxu0 %v1657
    %1706 = vmatprep.mubr.bf16.mxu0 %v1538
    %1707 = vmatmul.mubr.bf16.gmra.mrb[0].mxu0 %v1537
    %v1708 = vpop.f32.mrb[0].mxu0
    %v1709 = vadd.f32 %v1576, %v1708
    %v1710 = vpop.f32.mrb[0].mxu0
    %v1711 = vpop.f32.mrb[0].mxu0
    %v1712 = vadd.f32 %v1576, %v1711
    %v1713 = vpop.f32.mrb[0].mxu0
    %1714 = vdwg.mxu0
    %v1715 = vadd.f32 %v1408, %v1709
    %v1716 = vadd.f32 %v1409, %v1712
    %v1717 = vld [vmem:[%s16] sm:$0x1]
    %v1718 = vld [vmem:[%s17] sm:$0x1]
    %v1719 = vsel %vm502, %v1715, 0.0
    %1720 = vadd.xlane.f32.xlu0 %v1719
    %v1721 = vpop.xlane.xlu0 %1720
    %v1722 = vsel %vm502, %v1716, 0.0
    %1723 = vadd.xlane.f32.xlu0 %v1722
    %v1724 = vpop.xlane.xlu0 %1723
    %v1725 = vmul.f32 %v1721, %v509
    %v1726 = vmul.f32 %v1724, %v509
    %v1727 = vsub.f32 %v1715, %v1725
    %v1728 = vsub.f32 %v1716, %v1726
    %v1729 = vmul.f32 %v1727, %v1727
    %v1730 = vmul.f32 %v1728, %v1728
    %v1731 = vsel %vm502, %v1729, 0.0
    %1732 = vadd.xlane.f32.xlu0 %v1731
    %v1733 = vpop.xlane.xlu0 %1732
    %v1734 = vsel %vm502, %v1730, 0.0
    %1735 = vadd.xlane.f32.xlu0 %v1734
    %v1736 = vpop.xlane.xlu0 %1735
    %v1737 = vmul.f32 %v1733, %v509
    %v1738 = vmul.f32 %v1736, %v509
    %v1739 = vadd.f32 %v1737, 1e-12
    %v1740 = vadd.f32 %v1738, 1e-12
    %v1741 = vrsqrt.pop %v1739
    %v1742 = vrsqrt.pop %v1740
    %v1743 = vmul.f32 %v1727, %v1741
    %v1744 = vmul.f32 %v1728, %v1742
    %v1746 = vlaneseq
    %v1747 = vshrl.u32 %v1746, 7
    %v1748 = vsub.s32 0, %v1747
    %v1749 = vrot.slane %v1717, %v1748
    %v1751 = vmul.f32 %v1743, %v1749
    %v1752 = vmul.f32 %v1744, %v1749
    %v1754 = vlaneseq
    %v1755 = vshrl.u32 %v1754, 7
    %v1756 = vsub.s32 0, %v1755
    %v1757 = vrot.slane %v1718, %v1756
    %v1759 = vadd.f32 %v1751, %v1757
    %v1760 = vadd.f32 %v1752, %v1757
    %v1761 = vpack.c.bf16 %v1760, %v1759
    %s1762 = scalar_lea.vmem %s6, 64
    %v1763 = vld [vmem:[%s1762] sm:$0xff]
    %v1764 = vld [vmem:[%s1762 + $0x8] sm:$0xff]
    %v1765 = vld [vmem:[%s1762 + $0x10] sm:$0xff]
    %v1766 = vld [vmem:[%s1762 + $0x18] sm:$0xff]
    %v1767 = vld [vmem:[%s1762 + $0x20] sm:$0xff]
    %v1768 = vld [vmem:[%s1762 + $0x28] sm:$0xff]
    %v1769 = vld [vmem:[%s1762 + $0x30] sm:$0xff]
    %v1770 = vld [vmem:[%s1762 + $0x38] sm:$0xff]
    %s1771 = scalar_lea.vmem %s7, 2
    %v1772 = vld [vmem:[%s1771] sm:$0x3]
    %v1774 = vlaneseq
    %v1775 = vshrl.u32 %v1774, 7
    %v1776 = vsub.s32 0, %v1775
    %v1777 = vrot.slane %v1772, %v1776
    %v1778 = vlaneseq
    %v1779 = vshrl.u32 %v1778, 7
    %v1780 = vsub.s32 1, %v1779
    %v1781 = vrot.slane %v1772, %v1780
    %v1792 = vunpack.c.l.b16 %v1763
    %v1793 = vunpack.c.h.b16 %v1763
    %v1794 = vunpack.c.l.b16 %v1764
    %v1795 = vunpack.c.h.b16 %v1764
    %v1796 = vunpack.c.l.b16 %v1765
    %v1797 = vunpack.c.h.b16 %v1765
    %v1798 = vunpack.c.l.b16 %v1766
    %v1799 = vunpack.c.h.b16 %v1766
    %v1800 = vunpack.c.l.b16 %v1767
    %v1801 = vunpack.c.h.b16 %v1767
    %v1802 = vunpack.c.l.b16 %v1768
    %v1803 = vunpack.c.h.b16 %v1768
    %v1804 = vunpack.c.l.b16 %v1769
    %v1805 = vunpack.c.h.b16 %v1769
    %v1806 = vunpack.c.l.b16 %v1770
    %v1807 = vunpack.c.h.b16 %v1770
    %v1808 = vpack.c.b16 %v1794, %v1792
    %v1809 = vpack.c.b16 %v1795, %v1793
    %v1810 = vpack.c.b16 %v1798, %v1796
    %v1811 = vpack.c.b16 %v1799, %v1797
    %v1812 = vpack.c.b16 %v1802, %v1800
    %v1813 = vpack.c.b16 %v1803, %v1801
    %v1814 = vpack.c.b16 %v1806, %v1804
    %v1815 = vpack.c.b16 %v1807, %v1805
    %v1825 = vsel %vm502, %v1761, 0
    %1827 = vmatprep.subr.bf16.mxu0 %v1809
    %1828 = vmatpush1.bf16.msra.mxu0 %v1808
    %1829 = vmatprep.subr.bf16.mxu0 %v1811
    %1830 = vmatpush1.bf16.msra.mxu0 %v1810
    %1831 = vmatprep.subr.bf16.mxu0 %v1813
    %1832 = vmatpush1.bf16.msra.mxu0 %v1812
    %1833 = vmatprep.subr.bf16.mxu0 %v1815
    %1834 = vmatpush1.bf16.msra.mxu0 %v1814
    %1835 = vmatprep.subr.bf16.mxu0 0
    %1836 = vmatpush1.bf16.msra.mxu0 0
    %1837 = vmatprep.subr.bf16.mxu0 0
    %1838 = vmatpush1.bf16.msra.mxu0 0
    %1839 = vmatprep.subr.bf16.mxu0 0
    %1840 = vmatpush1.bf16.msra.mxu0 0
    %1841 = vmatprep.subr.bf16.mxu0 0
    %1842 = vmatpush1.bf16.msra.mxu0 0
    %1843 = vmatprep.subr.bf16.mxu0 0
    %1844 = vmatpush1.bf16.msra.mxu0 0
    %1845 = vmatprep.subr.bf16.mxu0 0
    %1846 = vmatpush1.bf16.msra.mxu0 0
    %1847 = vmatprep.subr.bf16.mxu0 0
    %1848 = vmatpush1.bf16.msra.mxu0 0
    %1849 = vmatprep.subr.bf16.mxu0 0
    %1850 = vmatpush1.bf16.msra.mxu0 0
    %1851 = vmatprep.subr.bf16.mxu0 0
    %1852 = vmatpush1.bf16.msra.mxu0 0
    %1853 = vmatprep.subr.bf16.mxu0 0
    %1854 = vmatpush1.bf16.msra.mxu0 0
    %1855 = vmatprep.subr.bf16.mxu0 0
    %1856 = vmatpush1.bf16.msra.mxu0 0
    %1857 = vmatprep.subr.bf16.mxu0 0
    %1858 = vmatpush1.bf16.msra.mxu0 0
    %1859 = vmatprep.mubr.bf16.mxu0 0
    %1860 = vmatmul.mubr.bf16.gmra.mrb[0].mxu0 %v1825
    %v1861 = vpop.f32.mrb[0].mxu0
    %v1862 = vadd.f32 %v1777, %v1861
    %v1863 = vpop.f32.mrb[0].mxu0
    %v1864 = vadd.f32 %v1781, %v1863
    %v1865 = vpop.f32.mrb[0].mxu0
    %v1866 = vadd.f32 %v1777, %v1865
    %v1867 = vpop.f32.mrb[0].mxu0
    %v1868 = vadd.f32 %v1781, %v1867
    %1869 = vdwg.mxu0
    %1872 = vrot.lane.b32.xlu0 %v1862, 112
    %v1873 = vpop.permute.xlu0 %1872
    %1874 = vrot.lane.b32.xlu0 %v1866, 112
    %v1875 = vpop.permute.xlu0 %1874
    %1878 = vrot.lane.b32.xlu0 %v1862, 96
    %v1879 = vpop.permute.xlu0 %1878
    %1880 = vrot.lane.b32.xlu0 %v1866, 96
    %v1881 = vpop.permute.xlu0 %1880
    %1884 = vrot.lane.b32.xlu0 %v1862, 80
    %v1885 = vpop.permute.xlu0 %1884
    %1886 = vrot.lane.b32.xlu0 %v1866, 80
    %v1887 = vpop.permute.xlu0 %1886
    %1892 = vrot.lane.b32.xlu0 %v1864, 112
    %v1893 = vpop.permute.xlu0 %1892
    %1894 = vrot.lane.b32.xlu0 %v1868, 112
    %v1895 = vpop.permute.xlu0 %1894
    %1898 = vrot.lane.b32.xlu0 %v1864, 96
    %v1899 = vpop.permute.xlu0 %1898
    %1900 = vrot.lane.b32.xlu0 %v1868, 96
    %v1901 = vpop.permute.xlu0 %1900
    %1904 = vrot.lane.b32.xlu0 %v1864, 80
    %v1905 = vpop.permute.xlu0 %1904
    %1906 = vrot.lane.b32.xlu0 %v1868, 80
    %v1907 = vpop.permute.xlu0 %1906
    %v1910 = vpack.c.bf16 %v1866, %v1862
    %v1911 = vpack.c.bf16 %v1875, %v1873
    %v1912 = vpack.c.bf16 %v1881, %v1879
    %v1913 = vpack.c.bf16 %v1887, %v1885
    %1915 = vrot.lane.b32.xlu0 %v1910, 64
    %v1916 = vpop.permute.xlu0 %1915
    %v1918 = vsel %vm286, %v1910, 0
    %v1921 = vsel %vm286, %v1916, 0
    %1923 = vmatprep.subr.bf16.mxu0 0
    %1924 = vmatpush1.bf16.xpose.msra.mxu0 %v1921
    %1925 = vmatprep.subr.bf16.mxu0 0
    %1926 = vmatpush1.bf16.xpose.msra.mxu0 0
    %1927 = vmatprep.subr.bf16.mxu0 0
    %1928 = vmatpush1.bf16.xpose.msra.mxu0 0
    %1929 = vmatprep.subr.bf16.mxu0 0
    %1930 = vmatpush1.bf16.xpose.msra.mxu0 0
    %1931 = vmatprep.subr.bf16.mxu0 0
    %1932 = vmatpush1.bf16.xpose.msra.mxu0 0
    %1933 = vmatprep.subr.bf16.mxu0 0
    %1934 = vmatpush1.bf16.xpose.msra.mxu0 0
    %1935 = vmatprep.subr.bf16.mxu0 0
    %1936 = vmatpush1.bf16.xpose.msra.mxu0 0
    %1937 = vmatprep.subr.bf16.mxu0 0
    %1938 = vmatpush1.bf16.xpose.msra.mxu0 0
    %1939 = vmatprep.subr.bf16.mxu0 0
    %1940 = vmatpush1.bf16.xpose.msra.mxu0 0
    %1941 = vmatprep.subr.bf16.mxu0 0
    %1942 = vmatpush1.bf16.xpose.msra.mxu0 0
    %1943 = vmatprep.subr.bf16.mxu0 0
    %1944 = vmatpush1.bf16.xpose.msra.mxu0 0
    %1945 = vmatprep.subr.bf16.mxu0 0
    %1946 = vmatpush1.bf16.xpose.msra.mxu0 0
    %1947 = vmatprep.subr.bf16.mxu0 0
    %1948 = vmatpush1.bf16.xpose.msra.mxu0 0
    %1949 = vmatprep.subr.bf16.mxu0 0
    %1950 = vmatpush1.bf16.xpose.msra.mxu0 0
    %1951 = vmatprep.subr.bf16.mxu0 0
    %1952 = vmatpush1.bf16.xpose.msra.mxu0 0
    %1953 = vmatprep.subr.bf16.mxu0 0
    %1954 = vmatpush1.bf16.xpose.msra.mxu0 0
    %1955 = vmatprep.mubr.bf16.mxu0 0
    %1956 = vmatmul.mubr.bf16.gmra.mrb[0].mxu0 %v1918
    %v1957 = vpop.f32.mrb[0].mxu0
    %v1958 = vadd.f32 0.0, %v1957
    %v1959 = vpop.f32.mrb[0].mxu0
    %v1960 = vpop.f32.mrb[0].mxu0
    %v1961 = vadd.f32 0.0, %v1960
    %v1962 = vpop.f32.mrb[0].mxu0
    %1963 = vdwg.mxu0
    %1965 = vrot.lane.b32.xlu0 %v1911, 64
    %v1966 = vpop.permute.xlu0 %1965
    %v1968 = vsel %vm286, %v1911, 0
    %v1971 = vsel %vm286, %v1966, 0
    %1973 = vmatprep.subr.bf16.mxu0 0
    %1974 = vmatpush1.bf16.xpose.msra.mxu0 %v1971
    %1975 = vmatprep.subr.bf16.mxu0 0
    %1976 = vmatpush1.bf16.xpose.msra.mxu0 0
    %1977 = vmatprep.subr.bf16.mxu0 0
    %1978 = vmatpush1.bf16.xpose.msra.mxu0 0
    %1979 = vmatprep.subr.bf16.mxu0 0
    %1980 = vmatpush1.bf16.xpose.msra.mxu0 0
    %1981 = vmatprep.subr.bf16.mxu0 0
    %1982 = vmatpush1.bf16.xpose.msra.mxu0 0
    %1983 = vmatprep.subr.bf16.mxu0 0
    %1984 = vmatpush1.bf16.xpose.msra.mxu0 0
    %1985 = vmatprep.subr.bf16.mxu0 0
    %1986 = vmatpush1.bf16.xpose.msra.mxu0 0
    %1987 = vmatprep.subr.bf16.mxu0 0
    %1988 = vmatpush1.bf16.xpose.msra.mxu0 0
    %1989 = vmatprep.subr.bf16.mxu0 0
    %1990 = vmatpush1.bf16.xpose.msra.mxu0 0
    %1991 = vmatprep.subr.bf16.mxu0 0
    %1992 = vmatpush1.bf16.xpose.msra.mxu0 0
    %1993 = vmatprep.subr.bf16.mxu0 0
    %1994 = vmatpush1.bf16.xpose.msra.mxu0 0
    %1995 = vmatprep.subr.bf16.mxu0 0
    %1996 = vmatpush1.bf16.xpose.msra.mxu0 0
    %1997 = vmatprep.subr.bf16.mxu0 0
    %1998 = vmatpush1.bf16.xpose.msra.mxu0 0
    %1999 = vmatprep.subr.bf16.mxu0 0
    %2000 = vmatpush1.bf16.xpose.msra.mxu0 0
    %2001 = vmatprep.subr.bf16.mxu0 0
    %2002 = vmatpush1.bf16.xpose.msra.mxu0 0
    %2003 = vmatprep.subr.bf16.mxu0 0
    %2004 = vmatpush1.bf16.xpose.msra.mxu0 0
    %2005 = vmatprep.mubr.bf16.mxu0 0
    %2006 = vmatmul.mubr.bf16.gmra.mrb[0].mxu0 %v1968
    %v2007 = vpop.f32.mrb[0].mxu0
    %v2008 = vadd.f32 0.0, %v2007
    %v2009 = vpop.f32.mrb[0].mxu0
    %v2010 = vpop.f32.mrb[0].mxu0
    %v2011 = vadd.f32 0.0, %v2010
    %v2012 = vpop.f32.mrb[0].mxu0
    %2013 = vdwg.mxu0
    %2015 = vrot.lane.b32.xlu0 %v1912, 64
    %v2016 = vpop.permute.xlu0 %2015
    %v2018 = vsel %vm286, %v1912, 0
    %v2021 = vsel %vm286, %v2016, 0
    %2023 = vmatprep.subr.bf16.mxu0 0
    %2024 = vmatpush1.bf16.xpose.msra.mxu0 %v2021
    %2025 = vmatprep.subr.bf16.mxu0 0
    %2026 = vmatpush1.bf16.xpose.msra.mxu0 0
    %2027 = vmatprep.subr.bf16.mxu0 0
    %2028 = vmatpush1.bf16.xpose.msra.mxu0 0
    %2029 = vmatprep.subr.bf16.mxu0 0
    %2030 = vmatpush1.bf16.xpose.msra.mxu0 0
    %2031 = vmatprep.subr.bf16.mxu0 0
    %2032 = vmatpush1.bf16.xpose.msra.mxu0 0
    %2033 = vmatprep.subr.bf16.mxu0 0
    %2034 = vmatpush1.bf16.xpose.msra.mxu0 0
    %2035 = vmatprep.subr.bf16.mxu0 0
    %2036 = vmatpush1.bf16.xpose.msra.mxu0 0
    %2037 = vmatprep.subr.bf16.mxu0 0
    %2038 = vmatpush1.bf16.xpose.msra.mxu0 0
    %2039 = vmatprep.subr.bf16.mxu0 0
    %2040 = vmatpush1.bf16.xpose.msra.mxu0 0
    %2041 = vmatprep.subr.bf16.mxu0 0
    %2042 = vmatpush1.bf16.xpose.msra.mxu0 0
    %2043 = vmatprep.subr.bf16.mxu0 0
    %2044 = vmatpush1.bf16.xpose.msra.mxu0 0
    %2045 = vmatprep.subr.bf16.mxu0 0
    %2046 = vmatpush1.bf16.xpose.msra.mxu0 0
    %2047 = vmatprep.subr.bf16.mxu0 0
    %2048 = vmatpush1.bf16.xpose.msra.mxu0 0
    %2049 = vmatprep.subr.bf16.mxu0 0
    %2050 = vmatpush1.bf16.xpose.msra.mxu0 0
    %2051 = vmatprep.subr.bf16.mxu0 0
    %2052 = vmatpush1.bf16.xpose.msra.mxu0 0
    %2053 = vmatprep.subr.bf16.mxu0 0
    %2054 = vmatpush1.bf16.xpose.msra.mxu0 0
    %2055 = vmatprep.mubr.bf16.mxu0 0
    %2056 = vmatmul.mubr.bf16.gmra.mrb[0].mxu0 %v2018
    %v2057 = vpop.f32.mrb[0].mxu0
    %v2058 = vadd.f32 0.0, %v2057
    %v2059 = vpop.f32.mrb[0].mxu0
    %v2060 = vpop.f32.mrb[0].mxu0
    %v2061 = vadd.f32 0.0, %v2060
    %v2062 = vpop.f32.mrb[0].mxu0
    %2063 = vdwg.mxu0
    %2065 = vrot.lane.b32.xlu0 %v1913, 64
    %v2066 = vpop.permute.xlu0 %2065
    %v2068 = vsel %vm286, %v1913, 0
    %v2071 = vsel %vm286, %v2066, 0
    %2073 = vmatprep.subr.bf16.mxu0 0
    %2074 = vmatpush1.bf16.xpose.msra.mxu0 %v2071
    %2075 = vmatprep.subr.bf16.mxu0 0
    %2076 = vmatpush1.bf16.xpose.msra.mxu0 0
    %2077 = vmatprep.subr.bf16.mxu0 0
    %2078 = vmatpush1.bf16.xpose.msra.mxu0 0
    %2079 = vmatprep.subr.bf16.mxu0 0
    %2080 = vmatpush1.bf16.xpose.msra.mxu0 0
    %2081 = vmatprep.subr.bf16.mxu0 0
    %2082 = vmatpush1.bf16.xpose.msra.mxu0 0
    %2083 = vmatprep.subr.bf16.mxu0 0
    %2084 = vmatpush1.bf16.xpose.msra.mxu0 0
    %2085 = vmatprep.subr.bf16.mxu0 0
    %2086 = vmatpush1.bf16.xpose.msra.mxu0 0
    %2087 = vmatprep.subr.bf16.mxu0 0
    %2088 = vmatpush1.bf16.xpose.msra.mxu0 0
    %2089 = vmatprep.subr.bf16.mxu0 0
    %2090 = vmatpush1.bf16.xpose.msra.mxu0 0
    %2091 = vmatprep.subr.bf16.mxu0 0
    %2092 = vmatpush1.bf16.xpose.msra.mxu0 0
    %2093 = vmatprep.subr.bf16.mxu0 0
    %2094 = vmatpush1.bf16.xpose.msra.mxu0 0
    %2095 = vmatprep.subr.bf16.mxu0 0
    %2096 = vmatpush1.bf16.xpose.msra.mxu0 0
    %2097 = vmatprep.subr.bf16.mxu0 0
    %2098 = vmatpush1.bf16.xpose.msra.mxu0 0
    %2099 = vmatprep.subr.bf16.mxu0 0
    %2100 = vmatpush1.bf16.xpose.msra.mxu0 0
    %2101 = vmatprep.subr.bf16.mxu0 0
    %2102 = vmatpush1.bf16.xpose.msra.mxu0 0
    %2103 = vmatprep.subr.bf16.mxu0 0
    %2104 = vmatpush1.bf16.xpose.msra.mxu0 0
    %2105 = vmatprep.mubr.bf16.mxu0 0
    %2106 = vmatmul.mubr.bf16.gmra.mrb[0].mxu0 %v2068
    %v2107 = vpop.f32.mrb[0].mxu0
    %v2108 = vadd.f32 0.0, %v2107
    %v2109 = vpop.f32.mrb[0].mxu0
    %v2110 = vpop.f32.mrb[0].mxu0
    %v2111 = vadd.f32 0.0, %v2110
    %v2112 = vpop.f32.mrb[0].mxu0
    %2113 = vdwg.mxu0
    %v2114 = vmul.f32 %v1958, 0.25
    %v2115 = vmul.f32 %v1961, 0.25
    %v2116 = vmul.f32 %v2008, 0.25
    %v2117 = vmul.f32 %v2011, 0.25
    %v2118 = vmul.f32 %v2058, 0.25
    %v2119 = vmul.f32 %v2061, 0.25
    %v2120 = vmul.f32 %v2108, 0.25
    %v2121 = vmul.f32 %v2111, 0.25
    %v2122 = vadd.f32 %v2114, %v584
    %v2123 = vadd.f32 %v2115, %v585
    %v2124 = vadd.f32 %v2116, %v584
    %v2125 = vadd.f32 %v2117, %v585
    %v2126 = vadd.f32 %v2118, %v584
    %v2127 = vadd.f32 %v2119, %v585
    %v2128 = vadd.f32 %v2120, %v584
    %v2129 = vadd.f32 %v2121, %v585
    %v2130 = vsel %vm286, %v2122, -inf
    %2131 = vmax.xlane.f32.xlu0 %v2130
    %v2132 = vpop.xlane.xlu0 %2131
    %v2133 = vsel %vm286, %v2123, -inf
    %2134 = vmax.xlane.f32.xlu0 %v2133
    %v2135 = vpop.xlane.xlu0 %2134
    %v2136 = vsel %vm286, %v2124, -inf
    %2137 = vmax.xlane.f32.xlu0 %v2136
    %v2138 = vpop.xlane.xlu0 %2137
    %v2139 = vsel %vm286, %v2125, -inf
    %2140 = vmax.xlane.f32.xlu0 %v2139
    %v2141 = vpop.xlane.xlu0 %2140
    %v2142 = vsel %vm286, %v2126, -inf
    %2143 = vmax.xlane.f32.xlu0 %v2142
    %v2144 = vpop.xlane.xlu0 %2143
    %v2145 = vsel %vm286, %v2127, -inf
    %2146 = vmax.xlane.f32.xlu0 %v2145
    %v2147 = vpop.xlane.xlu0 %2146
    %v2148 = vsel %vm286, %v2128, -inf
    %2149 = vmax.xlane.f32.xlu0 %v2148
    %v2150 = vpop.xlane.xlu0 %2149
    %v2151 = vsel %vm286, %v2129, -inf
    %2152 = vmax.xlane.f32.xlu0 %v2151
    %v2153 = vpop.xlane.xlu0 %2152
    %v2154 = vsub.f32 %v2122, %v2132
    %v2155 = vsub.f32 %v2123, %v2135
    %v2156 = vsub.f32 %v2124, %v2138
    %v2157 = vsub.f32 %v2125, %v2141
    %v2158 = vsub.f32 %v2126, %v2144
    %v2159 = vsub.f32 %v2127, %v2147
    %v2160 = vsub.f32 %v2128, %v2150
    %v2161 = vsub.f32 %v2129, %v2153
    %v2162 = vmul.f32 %v2154, 1.442695
    %v2163 = vpow.pop %v2162
    %v2164 = vmul.f32 %v2155, 1.442695
    %v2165 = vpow.pop %v2164
    %v2166 = vmul.f32 %v2156, 1.442695
    %v2167 = vpow.pop %v2166
    %v2168 = vmul.f32 %v2157, 1.442695
    %v2169 = vpow.pop %v2168
    %v2170 = vmul.f32 %v2158, 1.442695
    %v2171 = vpow.pop %v2170
    %v2172 = vmul.f32 %v2159, 1.442695
    %v2173 = vpow.pop %v2172
    %v2174 = vmul.f32 %v2160, 1.442695
    %v2175 = vpow.pop %v2174
    %v2176 = vmul.f32 %v2161, 1.442695
    %v2177 = vpow.pop %v2176
    %v2178 = vsel %vm286, %v2163, 0.0
    %2179 = vadd.xlane.f32.xlu0 %v2178
    %v2180 = vpop.xlane.xlu0 %2179
    %v2181 = vsel %vm286, %v2165, 0.0
    %2182 = vadd.xlane.f32.xlu0 %v2181
    %v2183 = vpop.xlane.xlu0 %2182
    %v2184 = vsel %vm286, %v2167, 0.0
    %2185 = vadd.xlane.f32.xlu0 %v2184
    %v2186 = vpop.xlane.xlu0 %2185
    %v2187 = vsel %vm286, %v2169, 0.0
    %2188 = vadd.xlane.f32.xlu0 %v2187
    %v2189 = vpop.xlane.xlu0 %2188
    %v2190 = vsel %vm286, %v2171, 0.0
    %2191 = vadd.xlane.f32.xlu0 %v2190
    %v2192 = vpop.xlane.xlu0 %2191
    %v2193 = vsel %vm286, %v2173, 0.0
    %2194 = vadd.xlane.f32.xlu0 %v2193
    %v2195 = vpop.xlane.xlu0 %2194
    %v2196 = vsel %vm286, %v2175, 0.0
    %2197 = vadd.xlane.f32.xlu0 %v2196
    %v2198 = vpop.xlane.xlu0 %2197
    %v2199 = vsel %vm286, %v2177, 0.0
    %2200 = vadd.xlane.f32.xlu0 %v2199
    %v2201 = vpop.xlane.xlu0 %2200
    %v2202 = vrcp.pop %v2180
    %v2203 = vrcp.pop %v2183
    %v2204 = vrcp.pop %v2186
    %v2205 = vrcp.pop %v2189
    %v2206 = vrcp.pop %v2192
    %v2207 = vrcp.pop %v2195
    %v2208 = vrcp.pop %v2198
    %v2209 = vrcp.pop %v2201
    %v2210 = vmul.f32 %v2180, %v2202
    %v2211 = vmul.f32 %v2183, %v2203
    %v2212 = vmul.f32 %v2186, %v2204
    %v2213 = vmul.f32 %v2189, %v2205
    %v2214 = vmul.f32 %v2192, %v2206
    %v2215 = vmul.f32 %v2195, %v2207
    %v2216 = vmul.f32 %v2198, %v2208
    %v2217 = vmul.f32 %v2201, %v2209
    %v2218 = vsub.f32 2.0, %v2210
    %v2219 = vsub.f32 2.0, %v2211
    %v2220 = vsub.f32 2.0, %v2212
    %v2221 = vsub.f32 2.0, %v2213
    %v2222 = vsub.f32 2.0, %v2214
    %v2223 = vsub.f32 2.0, %v2215
    %v2224 = vsub.f32 2.0, %v2216
    %v2225 = vsub.f32 2.0, %v2217
    %v2226 = vmul.f32 %v2202, %v2218
    %v2227 = vmul.f32 %v2203, %v2219
    %v2228 = vmul.f32 %v2204, %v2220
    %v2229 = vmul.f32 %v2205, %v2221
    %v2230 = vmul.f32 %v2206, %v2222
    %v2231 = vmul.f32 %v2207, %v2223
    %v2232 = vmul.f32 %v2208, %v2224
    %v2233 = vmul.f32 %v2209, %v2225
    %v2234 = vmul.f32 %v2163, %v2226
    %v2235 = vmul.f32 %v2165, %v2227
    %v2236 = vmul.f32 %v2167, %v2228
    %v2237 = vmul.f32 %v2169, %v2229
    %v2238 = vmul.f32 %v2171, %v2230
    %v2239 = vmul.f32 %v2173, %v2231
    %v2240 = vmul.f32 %v2175, %v2232
    %v2241 = vmul.f32 %v2177, %v2233
    %v2242 = vpack.c.bf16 %v2235, %v2234
    %v2243 = vpack.c.bf16 %v2237, %v2236
    %v2244 = vpack.c.bf16 %v2239, %v2238
    %v2245 = vpack.c.bf16 %v2241, %v2240
    %v2246 = vpack.c.bf16 %v1868, %v1864
    %v2247 = vpack.c.bf16 %v1895, %v1893
    %v2248 = vpack.c.bf16 %v1901, %v1899
    %v2249 = vpack.c.bf16 %v1907, %v1905
    %v2251 = vsel %vm286, %v2242, 0
    %2253 = vmatprep.subr.bf16.mxu0 0
    %2254 = vmatpush1.bf16.msra.mxu0 %v2246
    %2255 = vmatprep.subr.bf16.mxu0 0
    %2256 = vmatpush1.bf16.msra.mxu0 0
    %2257 = vmatprep.subr.bf16.mxu0 0
    %2258 = vmatpush1.bf16.msra.mxu0 0
    %2259 = vmatprep.subr.bf16.mxu0 0
    %2260 = vmatpush1.bf16.msra.mxu0 0
    %2261 = vmatprep.subr.bf16.mxu0 0
    %2262 = vmatpush1.bf16.msra.mxu0 0
    %2263 = vmatprep.subr.bf16.mxu0 0
    %2264 = vmatpush1.bf16.msra.mxu0 0
    %2265 = vmatprep.subr.bf16.mxu0 0
    %2266 = vmatpush1.bf16.msra.mxu0 0
    %2267 = vmatprep.subr.bf16.mxu0 0
    %2268 = vmatpush1.bf16.msra.mxu0 0
    %2269 = vmatprep.subr.bf16.mxu0 0
    %2270 = vmatpush1.bf16.msra.mxu0 0
    %2271 = vmatprep.subr.bf16.mxu0 0
    %2272 = vmatpush1.bf16.msra.mxu0 0
    %2273 = vmatprep.subr.bf16.mxu0 0
    %2274 = vmatpush1.bf16.msra.mxu0 0
    %2275 = vmatprep.subr.bf16.mxu0 0
    %2276 = vmatpush1.bf16.msra.mxu0 0
    %2277 = vmatprep.subr.bf16.mxu0 0
    %2278 = vmatpush1.bf16.msra.mxu0 0
    %2279 = vmatprep.subr.bf16.mxu0 0
    %2280 = vmatpush1.bf16.msra.mxu0 0
    %2281 = vmatprep.subr.bf16.mxu0 0
    %2282 = vmatpush1.bf16.msra.mxu0 0
    %2283 = vmatprep.subr.bf16.mxu0 0
    %2284 = vmatpush1.bf16.msra.mxu0 0
    %2285 = vmatprep.mubr.bf16.mxu0 0
    %2286 = vmatmul.mubr.bf16.gmra.mrb[0].mxu0 %v2251
    %v2287 = vpop.f32.mrb[0].mxu0
    %v2288 = vadd.f32 0.0, %v2287
    %v2289 = vpop.f32.mrb[0].mxu0
    %v2290 = vpop.f32.mrb[0].mxu0
    %v2291 = vadd.f32 0.0, %v2290
    %v2292 = vpop.f32.mrb[0].mxu0
    %2293 = vdwg.mxu0
    %v2295 = vsel %vm286, %v2243, 0
    %2297 = vmatprep.subr.bf16.mxu0 0
    %2298 = vmatpush1.bf16.msra.mxu0 %v2247
    %2299 = vmatprep.subr.bf16.mxu0 0
    %2300 = vmatpush1.bf16.msra.mxu0 0
    %2301 = vmatprep.subr.bf16.mxu0 0
    %2302 = vmatpush1.bf16.msra.mxu0 0
    %2303 = vmatprep.subr.bf16.mxu0 0
    %2304 = vmatpush1.bf16.msra.mxu0 0
    %2305 = vmatprep.subr.bf16.mxu0 0
    %2306 = vmatpush1.bf16.msra.mxu0 0
    %2307 = vmatprep.subr.bf16.mxu0 0
    %2308 = vmatpush1.bf16.msra.mxu0 0
    %2309 = vmatprep.subr.bf16.mxu0 0
    %2310 = vmatpush1.bf16.msra.mxu0 0
    %2311 = vmatprep.subr.bf16.mxu0 0
    %2312 = vmatpush1.bf16.msra.mxu0 0
    %2313 = vmatprep.subr.bf16.mxu0 0
    %2314 = vmatpush1.bf16.msra.mxu0 0
    %2315 = vmatprep.subr.bf16.mxu0 0
    %2316 = vmatpush1.bf16.msra.mxu0 0
    %2317 = vmatprep.subr.bf16.mxu0 0
    %2318 = vmatpush1.bf16.msra.mxu0 0
    %2319 = vmatprep.subr.bf16.mxu0 0
    %2320 = vmatpush1.bf16.msra.mxu0 0
    %2321 = vmatprep.subr.bf16.mxu0 0
    %2322 = vmatpush1.bf16.msra.mxu0 0
    %2323 = vmatprep.subr.bf16.mxu0 0
    %2324 = vmatpush1.bf16.msra.mxu0 0
    %2325 = vmatprep.subr.bf16.mxu0 0
    %2326 = vmatpush1.bf16.msra.mxu0 0
    %2327 = vmatprep.subr.bf16.mxu0 0
    %2328 = vmatpush1.bf16.msra.mxu0 0
    %2329 = vmatprep.mubr.bf16.mxu0 0
    %2330 = vmatmul.mubr.bf16.gmra.mrb[0].mxu0 %v2295
    %v2331 = vpop.f32.mrb[0].mxu0
    %v2332 = vadd.f32 0.0, %v2331
    %v2333 = vpop.f32.mrb[0].mxu0
    %v2334 = vpop.f32.mrb[0].mxu0
    %v2335 = vadd.f32 0.0, %v2334
    %v2336 = vpop.f32.mrb[0].mxu0
    %2337 = vdwg.mxu0
    %v2339 = vsel %vm286, %v2244, 0
    %2341 = vmatprep.subr.bf16.mxu0 0
    %2342 = vmatpush1.bf16.msra.mxu0 %v2248
    %2343 = vmatprep.subr.bf16.mxu0 0
    %2344 = vmatpush1.bf16.msra.mxu0 0
    %2345 = vmatprep.subr.bf16.mxu0 0
    %2346 = vmatpush1.bf16.msra.mxu0 0
    %2347 = vmatprep.subr.bf16.mxu0 0
    %2348 = vmatpush1.bf16.msra.mxu0 0
    %2349 = vmatprep.subr.bf16.mxu0 0
    %2350 = vmatpush1.bf16.msra.mxu0 0
    %2351 = vmatprep.subr.bf16.mxu0 0
    %2352 = vmatpush1.bf16.msra.mxu0 0
    %2353 = vmatprep.subr.bf16.mxu0 0
    %2354 = vmatpush1.bf16.msra.mxu0 0
    %2355 = vmatprep.subr.bf16.mxu0 0
    %2356 = vmatpush1.bf16.msra.mxu0 0
    %2357 = vmatprep.subr.bf16.mxu0 0
    %2358 = vmatpush1.bf16.msra.mxu0 0
    %2359 = vmatprep.subr.bf16.mxu0 0
    %2360 = vmatpush1.bf16.msra.mxu0 0
    %2361 = vmatprep.subr.bf16.mxu0 0
    %2362 = vmatpush1.bf16.msra.mxu0 0
    %2363 = vmatprep.subr.bf16.mxu0 0
    %2364 = vmatpush1.bf16.msra.mxu0 0
    %2365 = vmatprep.subr.bf16.mxu0 0
    %2366 = vmatpush1.bf16.msra.mxu0 0
    %2367 = vmatprep.subr.bf16.mxu0 0
    %2368 = vmatpush1.bf16.msra.mxu0 0
    %2369 = vmatprep.subr.bf16.mxu0 0
    %2370 = vmatpush1.bf16.msra.mxu0 0
    %2371 = vmatprep.subr.bf16.mxu0 0
    %2372 = vmatpush1.bf16.msra.mxu0 0
    %2373 = vmatprep.mubr.bf16.mxu0 0
    %2374 = vmatmul.mubr.bf16.gmra.mrb[0].mxu0 %v2339
    %v2375 = vpop.f32.mrb[0].mxu0
    %v2376 = vadd.f32 0.0, %v2375
    %v2377 = vpop.f32.mrb[0].mxu0
    %v2378 = vpop.f32.mrb[0].mxu0
    %v2379 = vadd.f32 0.0, %v2378
    %v2380 = vpop.f32.mrb[0].mxu0
    %2381 = vdwg.mxu0
    %v2383 = vsel %vm286, %v2245, 0
    %2385 = vmatprep.subr.bf16.mxu0 0
    %2386 = vmatpush1.bf16.msra.mxu0 %v2249
    %2387 = vmatprep.subr.bf16.mxu0 0
    %2388 = vmatpush1.bf16.msra.mxu0 0
    %2389 = vmatprep.subr.bf16.mxu0 0
    %2390 = vmatpush1.bf16.msra.mxu0 0
    %2391 = vmatprep.subr.bf16.mxu0 0
    %2392 = vmatpush1.bf16.msra.mxu0 0
    %2393 = vmatprep.subr.bf16.mxu0 0
    %2394 = vmatpush1.bf16.msra.mxu0 0
    %2395 = vmatprep.subr.bf16.mxu0 0
    %2396 = vmatpush1.bf16.msra.mxu0 0
    %2397 = vmatprep.subr.bf16.mxu0 0
    %2398 = vmatpush1.bf16.msra.mxu0 0
    %2399 = vmatprep.subr.bf16.mxu0 0
    %2400 = vmatpush1.bf16.msra.mxu0 0
    %2401 = vmatprep.subr.bf16.mxu0 0
    %2402 = vmatpush1.bf16.msra.mxu0 0
    %2403 = vmatprep.subr.bf16.mxu0 0
    %2404 = vmatpush1.bf16.msra.mxu0 0
    %2405 = vmatprep.subr.bf16.mxu0 0
    %2406 = vmatpush1.bf16.msra.mxu0 0
    %2407 = vmatprep.subr.bf16.mxu0 0
    %2408 = vmatpush1.bf16.msra.mxu0 0
    %2409 = vmatprep.subr.bf16.mxu0 0
    %2410 = vmatpush1.bf16.msra.mxu0 0
    %2411 = vmatprep.subr.bf16.mxu0 0
    %2412 = vmatpush1.bf16.msra.mxu0 0
    %2413 = vmatprep.subr.bf16.mxu0 0
    %2414 = vmatpush1.bf16.msra.mxu0 0
    %2415 = vmatprep.subr.bf16.mxu0 0
    %2416 = vmatpush1.bf16.msra.mxu0 0
    %2417 = vmatprep.mubr.bf16.mxu0 0
    %2418 = vmatmul.mubr.bf16.gmra.mrb[0].mxu0 %v2383
    %v2419 = vpop.f32.mrb[0].mxu0
    %v2420 = vadd.f32 0.0, %v2419
    %v2421 = vpop.f32.mrb[0].mxu0
    %v2422 = vpop.f32.mrb[0].mxu0
    %v2423 = vadd.f32 0.0, %v2422
    %v2424 = vpop.f32.mrb[0].mxu0
    %2425 = vdwg.mxu0
    %2428 = vrot.lane.b32.xlu0 %v2332, 16
    %v2429 = vpop.permute.xlu0 %2428
    %2430 = vrot.lane.b32.xlu0 %v2335, 16
    %v2431 = vpop.permute.xlu0 %2430
    %2436 = vrot.lane.b32.xlu0 %v2376, 32
    %v2437 = vpop.permute.xlu0 %2436
    %2438 = vrot.lane.b32.xlu0 %v2379, 32
    %v2439 = vpop.permute.xlu0 %2438
    %2444 = vrot.lane.b32.xlu0 %v2420, 48
    %v2445 = vpop.permute.xlu0 %2444
    %2446 = vrot.lane.b32.xlu0 %v2423, 48
    %v2447 = vpop.permute.xlu0 %2446
    %v2450 = vsel %vm286, %v2288, %v2429
    %v2451 = vsel %vm286, %v2291, %v2431
    %v2452 = vsel %vm388, %v2450, %v2437
    %v2453 = vsel %vm388, %v2451, %v2439
    %v2454 = vsel %vm1277, %v2452, %v2445
    %v2455 = vsel %vm1277, %v2453, %v2447
    %v2456 = vpack.c.bf16 %v2455, %v2454
    %s2457 = scalar_lea.vmem %s8, 32
    %v2458 = vld [vmem:[%s2457] sm:$0xf]
    %v2459 = vld [vmem:[%s2457 + $0x4] sm:$0xf]
    %v2460 = vld [vmem:[%s2457 + $0x8] sm:$0xf]
    %v2461 = vld [vmem:[%s2457 + $0xc] sm:$0xf]
    %v2462 = vld [vmem:[%s2457 + $0x10] sm:$0xf]
    %v2463 = vld [vmem:[%s2457 + $0x14] sm:$0xf]
    %v2464 = vld [vmem:[%s2457 + $0x18] sm:$0xf]
    %v2465 = vld [vmem:[%s2457 + $0x1c] sm:$0xf]
    %s2466 = scalar_lea.vmem %s9, 1
    %v2467 = vld [vmem:[%s2466] sm:$0x1]
    %v2469 = vlaneseq
    %v2470 = vshrl.u32 %v2469, 7
    %v2471 = vsub.s32 0, %v2470
    %v2472 = vrot.slane %v2467, %v2471
    %v2482 = vunpack.c.l.b16 %v2458
    %v2483 = vunpack.c.l.b16 %v2459
    %v2484 = vunpack.c.l.b16 %v2460
    %v2485 = vunpack.c.l.b16 %v2461
    %v2486 = vunpack.c.l.b16 %v2462
    %v2487 = vunpack.c.l.b16 %v2463
    %v2488 = vunpack.c.l.b16 %v2464
    %v2489 = vunpack.c.l.b16 %v2465
    %v2490 = vpack.c.b16 %v2483, %v2482
    %v2491 = vpack.c.b16 %v2485, %v2484
    %v2492 = vpack.c.b16 %v2487, %v2486
    %v2493 = vpack.c.b16 %v2489, %v2488
    %v2499 = vsel %vm502, %v2456, 0
    %2501 = vmatprep.subr.bf16.mxu0 0
    %2502 = vmatpush1.bf16.msra.mxu0 %v2490
    %2503 = vmatprep.subr.bf16.mxu0 0
    %2504 = vmatpush1.bf16.msra.mxu0 %v2491
    %2505 = vmatprep.subr.bf16.mxu0 0
    %2506 = vmatpush1.bf16.msra.mxu0 %v2492
    %2507 = vmatprep.subr.bf16.mxu0 0
    %2508 = vmatpush1.bf16.msra.mxu0 %v2493
    %2509 = vmatprep.subr.bf16.mxu0 0
    %2510 = vmatpush1.bf16.msra.mxu0 0
    %2511 = vmatprep.subr.bf16.mxu0 0
    %2512 = vmatpush1.bf16.msra.mxu0 0
    %2513 = vmatprep.subr.bf16.mxu0 0
    %2514 = vmatpush1.bf16.msra.mxu0 0
    %2515 = vmatprep.subr.bf16.mxu0 0
    %2516 = vmatpush1.bf16.msra.mxu0 0
    %2517 = vmatprep.subr.bf16.mxu0 0
    %2518 = vmatpush1.bf16.msra.mxu0 0
    %2519 = vmatprep.subr.bf16.mxu0 0
    %2520 = vmatpush1.bf16.msra.mxu0 0
    %2521 = vmatprep.subr.bf16.mxu0 0
    %2522 = vmatpush1.bf16.msra.mxu0 0
    %2523 = vmatprep.subr.bf16.mxu0 0
    %2524 = vmatpush1.bf16.msra.mxu0 0
    %2525 = vmatprep.subr.bf16.mxu0 0
    %2526 = vmatpush1.bf16.msra.mxu0 0
    %2527 = vmatprep.subr.bf16.mxu0 0
    %2528 = vmatpush1.bf16.msra.mxu0 0
    %2529 = vmatprep.subr.bf16.mxu0 0
    %2530 = vmatpush1.bf16.msra.mxu0 0
    %2531 = vmatprep.subr.bf16.mxu0 0
    %2532 = vmatpush1.bf16.msra.mxu0 0
    %2533 = vmatprep.mubr.bf16.mxu0 0
    %2534 = vmatmul.mubr.bf16.gmra.mrb[0].mxu0 %v2499
    %v2535 = vpop.f32.mrb[0].mxu0
    %v2536 = vadd.f32 %v2472, %v2535
    %v2537 = vpop.f32.mrb[0].mxu0
    %v2538 = vpop.f32.mrb[0].mxu0
    %v2539 = vadd.f32 %v2472, %v2538
    %v2540 = vpop.f32.mrb[0].mxu0
    %2541 = vdwg.mxu0
    %v2542 = vadd.f32 %v1759, %v2536
    %v2543 = vadd.f32 %v1760, %v2539
    %s2544 = scalar_lea.vmem %s10, 1
    %v2545 = vld [vmem:[%s2544] sm:$0x1]
    %s2546 = scalar_lea.vmem %s11, 1
    %v2547 = vld [vmem:[%s2546] sm:$0x1]
    %v2548 = vsel %vm502, %v2542, 0.0
    %2549 = vadd.xlane.f32.xlu0 %v2548
    %v2550 = vpop.xlane.xlu0 %2549
    %v2551 = vsel %vm502, %v2543, 0.0
    %2552 = vadd.xlane.f32.xlu0 %v2551
    %v2553 = vpop.xlane.xlu0 %2552
    %v2554 = vmul.f32 %v2550, %v509
    %v2555 = vmul.f32 %v2553, %v509
    %v2556 = vsub.f32 %v2542, %v2554
    %v2557 = vsub.f32 %v2543, %v2555
    %v2558 = vmul.f32 %v2556, %v2556
    %v2559 = vmul.f32 %v2557, %v2557
    %v2560 = vsel %vm502, %v2558, 0.0
    %2561 = vadd.xlane.f32.xlu0 %v2560
    %v2562 = vpop.xlane.xlu0 %2561
    %v2563 = vsel %vm502, %v2559, 0.0
    %2564 = vadd.xlane.f32.xlu0 %v2563
    %v2565 = vpop.xlane.xlu0 %2564
    %v2566 = vmul.f32 %v2562, %v509
    %v2567 = vmul.f32 %v2565, %v509
    %v2568 = vadd.f32 %v2566, 1e-12
    %v2569 = vadd.f32 %v2567, 1e-12
    %v2570 = vrsqrt.pop %v2568
    %v2571 = vrsqrt.pop %v2569
    %v2572 = vmul.f32 %v2556, %v2570
    %v2573 = vmul.f32 %v2557, %v2571
    %v2575 = vlaneseq
    %v2576 = vshrl.u32 %v2575, 7
    %v2577 = vsub.s32 0, %v2576
    %v2578 = vrot.slane %v2545, %v2577
    %v2580 = vmul.f32 %v2572, %v2578
    %v2581 = vmul.f32 %v2573, %v2578
    %v2583 = vlaneseq
    %v2584 = vshrl.u32 %v2583, 7
    %v2585 = vsub.s32 0, %v2584
    %v2586 = vrot.slane %v2547, %v2585
    %v2588 = vadd.f32 %v2580, %v2586
    %v2589 = vadd.f32 %v2581, %v2586
    %v2590 = vpack.c.bf16 %v2589, %v2588
    %s2591 = scalar_lea.vmem %s12, 64
    %v2592 = vld [vmem:[%s2591] sm:$0xff]
    %v2593 = vld [vmem:[%s2591 + $0x8] sm:$0xff]
    %v2594 = vld [vmem:[%s2591 + $0x10] sm:$0xff]
    %v2595 = vld [vmem:[%s2591 + $0x18] sm:$0xff]
    %v2596 = vld [vmem:[%s2591 + $0x20] sm:$0xff]
    %v2597 = vld [vmem:[%s2591 + $0x28] sm:$0xff]
    %v2598 = vld [vmem:[%s2591 + $0x30] sm:$0xff]
    %v2599 = vld [vmem:[%s2591 + $0x38] sm:$0xff]
    %s2600 = scalar_lea.vmem %s13, 2
    %v2601 = vld [vmem:[%s2600] sm:$0x3]
    %v2603 = vlaneseq
    %v2604 = vshrl.u32 %v2603, 7
    %v2605 = vsub.s32 0, %v2604
    %v2606 = vrot.slane %v2601, %v2605
    %v2607 = vlaneseq
    %v2608 = vshrl.u32 %v2607, 7
    %v2609 = vsub.s32 1, %v2608
    %v2610 = vrot.slane %v2601, %v2609
    %v2621 = vunpack.c.l.b16 %v2592
    %v2622 = vunpack.c.h.b16 %v2592
    %v2623 = vunpack.c.l.b16 %v2593
    %v2624 = vunpack.c.h.b16 %v2593
    %v2625 = vunpack.c.l.b16 %v2594
    %v2626 = vunpack.c.h.b16 %v2594
    %v2627 = vunpack.c.l.b16 %v2595
    %v2628 = vunpack.c.h.b16 %v2595
    %v2629 = vunpack.c.l.b16 %v2596
    %v2630 = vunpack.c.h.b16 %v2596
    %v2631 = vunpack.c.l.b16 %v2597
    %v2632 = vunpack.c.h.b16 %v2597
    %v2633 = vunpack.c.l.b16 %v2598
    %v2634 = vunpack.c.h.b16 %v2598
    %v2635 = vunpack.c.l.b16 %v2599
    %v2636 = vunpack.c.h.b16 %v2599
    %v2637 = vpack.c.b16 %v2623, %v2621
    %v2638 = vpack.c.b16 %v2624, %v2622
    %v2639 = vpack.c.b16 %v2627, %v2625
    %v2640 = vpack.c.b16 %v2628, %v2626
    %v2641 = vpack.c.b16 %v2631, %v2629
    %v2642 = vpack.c.b16 %v2632, %v2630
    %v2643 = vpack.c.b16 %v2635, %v2633
    %v2644 = vpack.c.b16 %v2636, %v2634
    %v2654 = vsel %vm502, %v2590, 0
    %2656 = vmatprep.subr.bf16.mxu0 %v2638
    %2657 = vmatpush1.bf16.msra.mxu0 %v2637
    %2658 = vmatprep.subr.bf16.mxu0 %v2640
    %2659 = vmatpush1.bf16.msra.mxu0 %v2639
    %2660 = vmatprep.subr.bf16.mxu0 %v2642
    %2661 = vmatpush1.bf16.msra.mxu0 %v2641
    %2662 = vmatprep.subr.bf16.mxu0 %v2644
    %2663 = vmatpush1.bf16.msra.mxu0 %v2643
    %2664 = vmatprep.subr.bf16.mxu0 0
    %2665 = vmatpush1.bf16.msra.mxu0 0
    %2666 = vmatprep.subr.bf16.mxu0 0
    %2667 = vmatpush1.bf16.msra.mxu0 0
    %2668 = vmatprep.subr.bf16.mxu0 0
    %2669 = vmatpush1.bf16.msra.mxu0 0
    %2670 = vmatprep.subr.bf16.mxu0 0
    %2671 = vmatpush1.bf16.msra.mxu0 0
    %2672 = vmatprep.subr.bf16.mxu0 0
    %2673 = vmatpush1.bf16.msra.mxu0 0
    %2674 = vmatprep.subr.bf16.mxu0 0
    %2675 = vmatpush1.bf16.msra.mxu0 0
    %2676 = vmatprep.subr.bf16.mxu0 0
    %2677 = vmatpush1.bf16.msra.mxu0 0
    %2678 = vmatprep.subr.bf16.mxu0 0
    %2679 = vmatpush1.bf16.msra.mxu0 0
    %2680 = vmatprep.subr.bf16.mxu0 0
    %2681 = vmatpush1.bf16.msra.mxu0 0
    %2682 = vmatprep.subr.bf16.mxu0 0
    %2683 = vmatpush1.bf16.msra.mxu0 0
    %2684 = vmatprep.subr.bf16.mxu0 0
    %2685 = vmatpush1.bf16.msra.mxu0 0
    %2686 = vmatprep.subr.bf16.mxu0 0
    %2687 = vmatpush1.bf16.msra.mxu0 0
    %2688 = vmatprep.mubr.bf16.mxu0 0
    %2689 = vmatmul.mubr.bf16.gmra.mrb[0].mxu0 %v2654
    %v2690 = vpop.f32.mrb[0].mxu0
    %v2691 = vadd.f32 %v2606, %v2690
    %v2692 = vpop.f32.mrb[0].mxu0
    %v2693 = vadd.f32 %v2610, %v2692
    %v2694 = vpop.f32.mrb[0].mxu0
    %v2695 = vadd.f32 %v2606, %v2694
    %v2696 = vpop.f32.mrb[0].mxu0
    %v2697 = vadd.f32 %v2610, %v2696
    %2698 = vdwg.mxu0
    %v2699 = vmul.f32 %v2691, 0.5
    %v2700 = vmul.f32 %v2693, 0.5
    %v2701 = vmul.f32 %v2695, 0.5
    %v2702 = vmul.f32 %v2697, 0.5
    %v2703 = vmul.f32 %v2691, 0.70710677
    %v2704 = vmul.f32 %v2693, 0.70710677
    %v2705 = vmul.f32 %v2695, 0.70710677
    %v2706 = vmul.f32 %v2697, 0.70710677
    %v2707 = verf.f32.pop %v2703
    %v2708 = verf.f32.pop %v2704
    %v2709 = verf.f32.pop %v2705
    %v2710 = verf.f32.pop %v2706
    %v2711 = vadd.f32 %v2707, 1.0
    %v2712 = vadd.f32 %v2708, 1.0
    %v2713 = vadd.f32 %v2709, 1.0
    %v2714 = vadd.f32 %v2710, 1.0
    %v2715 = vmul.f32 %v2699, %v2711
    %v2716 = vmul.f32 %v2700, %v2712
    %v2717 = vmul.f32 %v2701, %v2713
    %v2718 = vmul.f32 %v2702, %v2714
    %v2719 = vpack.c.bf16 %v2717, %v2715
    %v2720 = vpack.c.bf16 %v2718, %v2716
    %s2721 = scalar_lea.vmem %s14, 128
    %v2722 = vld [vmem:[%s2721] sm:$0xf]
    %v2723 = vld [vmem:[%s2721 + $0x4] sm:$0xf]
    %v2724 = vld [vmem:[%s2721 + $0x8] sm:$0xf]
    %v2725 = vld [vmem:[%s2721 + $0xc] sm:$0xf]
    %v2726 = vld [vmem:[%s2721 + $0x10] sm:$0xf]
    %v2727 = vld [vmem:[%s2721 + $0x14] sm:$0xf]
    %v2728 = vld [vmem:[%s2721 + $0x18] sm:$0xf]
    %v2729 = vld [vmem:[%s2721 + $0x1c] sm:$0xf]
    %v2730 = vld [vmem:[%s2721 + $0x20] sm:$0xf]
    %v2731 = vld [vmem:[%s2721 + $0x24] sm:$0xf]
    %v2732 = vld [vmem:[%s2721 + $0x28] sm:$0xf]
    %v2733 = vld [vmem:[%s2721 + $0x2c] sm:$0xf]
    %v2734 = vld [vmem:[%s2721 + $0x30] sm:$0xf]
    %v2735 = vld [vmem:[%s2721 + $0x34] sm:$0xf]
    %v2736 = vld [vmem:[%s2721 + $0x38] sm:$0xf]
    %v2737 = vld [vmem:[%s2721 + $0x3c] sm:$0xf]
    %v2738 = vld [vmem:[%s2721 + $0x40] sm:$0xf]
    %v2739 = vld [vmem:[%s2721 + $0x44] sm:$0xf]
    %v2740 = vld [vmem:[%s2721 + $0x48] sm:$0xf]
    %v2741 = vld [vmem:[%s2721 + $0x4c] sm:$0xf]
    %v2742 = vld [vmem:[%s2721 + $0x50] sm:$0xf]
    %v2743 = vld [vmem:[%s2721 + $0x54] sm:$0xf]
    %v2744 = vld [vmem:[%s2721 + $0x58] sm:$0xf]
    %v2745 = vld [vmem:[%s2721 + $0x5c] sm:$0xf]
    %v2746 = vld [vmem:[%s2721 + $0x60] sm:$0xf]
    %v2747 = vld [vmem:[%s2721 + $0x64] sm:$0xf]
    %v2748 = vld [vmem:[%s2721 + $0x68] sm:$0xf]
    %v2749 = vld [vmem:[%s2721 + $0x6c] sm:$0xf]
    %v2750 = vld [vmem:[%s2721 + $0x70] sm:$0xf]
    %v2751 = vld [vmem:[%s2721 + $0x74] sm:$0xf]
    %v2752 = vld [vmem:[%s2721 + $0x78] sm:$0xf]
    %v2753 = vld [vmem:[%s2721 + $0x7c] sm:$0xf]
    %s2754 = scalar_lea.vmem %s15, 1
    %v2755 = vld [vmem:[%s2754] sm:$0x1]
    %v2757 = vlaneseq
    %v2758 = vshrl.u32 %v2757, 7
    %v2759 = vsub.s32 0, %v2758
    %v2760 = vrot.slane %v2755, %v2759
    %v2794 = vunpack.c.l.b16 %v2722
    %v2795 = vunpack.c.l.b16 %v2723
    %v2796 = vunpack.c.l.b16 %v2724
    %v2797 = vunpack.c.l.b16 %v2725
    %v2798 = vunpack.c.l.b16 %v2726
    %v2799 = vunpack.c.l.b16 %v2727
    %v2800 = vunpack.c.l.b16 %v2728
    %v2801 = vunpack.c.l.b16 %v2729
    %v2802 = vunpack.c.l.b16 %v2730
    %v2803 = vunpack.c.l.b16 %v2731
    %v2804 = vunpack.c.l.b16 %v2732
    %v2805 = vunpack.c.l.b16 %v2733
    %v2806 = vunpack.c.l.b16 %v2734
    %v2807 = vunpack.c.l.b16 %v2735
    %v2808 = vunpack.c.l.b16 %v2736
    %v2809 = vunpack.c.l.b16 %v2737
    %v2810 = vunpack.c.l.b16 %v2738
    %v2811 = vunpack.c.l.b16 %v2739
    %v2812 = vunpack.c.l.b16 %v2740
    %v2813 = vunpack.c.l.b16 %v2741
    %v2814 = vunpack.c.l.b16 %v2742
    %v2815 = vunpack.c.l.b16 %v2743
    %v2816 = vunpack.c.l.b16 %v2744
    %v2817 = vunpack.c.l.b16 %v2745
    %v2818 = vunpack.c.l.b16 %v2746
    %v2819 = vunpack.c.l.b16 %v2747
    %v2820 = vunpack.c.l.b16 %v2748
    %v2821 = vunpack.c.l.b16 %v2749
    %v2822 = vunpack.c.l.b16 %v2750
    %v2823 = vunpack.c.l.b16 %v2751
    %v2824 = vunpack.c.l.b16 %v2752
    %v2825 = vunpack.c.l.b16 %v2753
    %v2826 = vpack.c.b16 %v2795, %v2794
    %v2827 = vpack.c.b16 %v2797, %v2796
    %v2828 = vpack.c.b16 %v2799, %v2798
    %v2829 = vpack.c.b16 %v2801, %v2800
    %v2830 = vpack.c.b16 %v2803, %v2802
    %v2831 = vpack.c.b16 %v2805, %v2804
    %v2832 = vpack.c.b16 %v2807, %v2806
    %v2833 = vpack.c.b16 %v2809, %v2808
    %v2834 = vpack.c.b16 %v2811, %v2810
    %v2835 = vpack.c.b16 %v2813, %v2812
    %v2836 = vpack.c.b16 %v2815, %v2814
    %v2837 = vpack.c.b16 %v2817, %v2816
    %v2838 = vpack.c.b16 %v2819, %v2818
    %v2839 = vpack.c.b16 %v2821, %v2820
    %v2840 = vpack.c.b16 %v2823, %v2822
    %v2841 = vpack.c.b16 %v2825, %v2824
    %2858 = vmatprep.subr.bf16.mxu0 0
    %2859 = vmatpush1.bf16.msra.mxu0 %v2826
    %2860 = vmatprep.subr.bf16.mxu0 0
    %2861 = vmatpush1.bf16.msra.mxu0 %v2827
    %2862 = vmatprep.subr.bf16.mxu0 0
    %2863 = vmatpush1.bf16.msra.mxu0 %v2828
    %2864 = vmatprep.subr.bf16.mxu0 0
    %2865 = vmatpush1.bf16.msra.mxu0 %v2829
    %2866 = vmatprep.subr.bf16.mxu0 0
    %2867 = vmatpush1.bf16.msra.mxu0 %v2830
    %2868 = vmatprep.subr.bf16.mxu0 0
    %2869 = vmatpush1.bf16.msra.mxu0 %v2831
    %2870 = vmatprep.subr.bf16.mxu0 0
    %2871 = vmatpush1.bf16.msra.mxu0 %v2832
    %2872 = vmatprep.subr.bf16.mxu0 0
    %2873 = vmatpush1.bf16.msra.mxu0 %v2833
    %2874 = vmatprep.subr.bf16.mxu0 0
    %2875 = vmatpush1.bf16.msra.mxu0 %v2834
    %2876 = vmatprep.subr.bf16.mxu0 0
    %2877 = vmatpush1.bf16.msra.mxu0 %v2835
    %2878 = vmatprep.subr.bf16.mxu0 0
    %2879 = vmatpush1.bf16.msra.mxu0 %v2836
    %2880 = vmatprep.subr.bf16.mxu0 0
    %2881 = vmatpush1.bf16.msra.mxu0 %v2837
    %2882 = vmatprep.subr.bf16.mxu0 0
    %2883 = vmatpush1.bf16.msra.mxu0 %v2838
    %2884 = vmatprep.subr.bf16.mxu0 0
    %2885 = vmatpush1.bf16.msra.mxu0 %v2839
    %2886 = vmatprep.subr.bf16.mxu0 0
    %2887 = vmatpush1.bf16.msra.mxu0 %v2840
    %2888 = vmatprep.subr.bf16.mxu0 0
    %2889 = vmatpush1.bf16.msra.mxu0 %v2841
    %2890 = vmatprep.mubr.bf16.mxu0 %v2720
    %2891 = vmatmul.mubr.bf16.gmra.mrb[0].mxu0 %v2719
    %v2892 = vpop.f32.mrb[0].mxu0
    %v2893 = vadd.f32 %v2760, %v2892
    %v2894 = vpop.f32.mrb[0].mxu0
    %v2895 = vpop.f32.mrb[0].mxu0
    %v2896 = vadd.f32 %v2760, %v2895
    %v2897 = vpop.f32.mrb[0].mxu0
    %2898 = vdwg.mxu0
    %v2899 = vadd.f32 %v2588, %v2893
    %v2900 = vadd.f32 %v2589, %v2896
    %s2901 = scalar_lea.vmem %s16, 1
    %v2902 = vld [vmem:[%s2901] sm:$0x1]
    %s2903 = scalar_lea.vmem %s17, 1
    %v2904 = vld [vmem:[%s2903] sm:$0x1]
    %v2905 = vsel %vm502, %v2899, 0.0
    %2906 = vadd.xlane.f32.xlu0 %v2905
    %v2907 = vpop.xlane.xlu0 %2906
    %v2908 = vsel %vm502, %v2900, 0.0
    %2909 = vadd.xlane.f32.xlu0 %v2908
    %v2910 = vpop.xlane.xlu0 %2909
    %v2911 = vmul.f32 %v2907, %v509
    %v2912 = vmul.f32 %v2910, %v509
    %v2913 = vsub.f32 %v2899, %v2911
    %v2914 = vsub.f32 %v2900, %v2912
    %v2915 = vmul.f32 %v2913, %v2913
    %v2916 = vmul.f32 %v2914, %v2914
    %v2917 = vsel %vm502, %v2915, 0.0
    %2918 = vadd.xlane.f32.xlu0 %v2917
    %v2919 = vpop.xlane.xlu0 %2918
    %v2920 = vsel %vm502, %v2916, 0.0
    %2921 = vadd.xlane.f32.xlu0 %v2920
    %v2922 = vpop.xlane.xlu0 %2921
    %v2923 = vmul.f32 %v2919, %v509
    %v2924 = vmul.f32 %v2922, %v509
    %v2925 = vadd.f32 %v2923, 1e-12
    %v2926 = vadd.f32 %v2924, 1e-12
    %v2927 = vrsqrt.pop %v2925
    %v2928 = vrsqrt.pop %v2926
    %v2929 = vmul.f32 %v2913, %v2927
    %v2930 = vmul.f32 %v2914, %v2928
    %v2932 = vlaneseq
    %v2933 = vshrl.u32 %v2932, 7
    %v2934 = vsub.s32 0, %v2933
    %v2935 = vrot.slane %v2902, %v2934
    %v2937 = vmul.f32 %v2929, %v2935
    %v2938 = vmul.f32 %v2930, %v2935
    %v2940 = vlaneseq
    %v2941 = vshrl.u32 %v2940, 7
    %v2942 = vsub.s32 0, %v2941
    %v2943 = vrot.slane %v2904, %v2942
    %v2945 = vadd.f32 %v2937, %v2943
    %v2946 = vadd.f32 %v2938, %v2943
    %2949 = vrot.lane.b32.xlu0 %v574, 64
    %v2950 = vpop.permute.xlu0 %2949
    %2951 = vrot.lane.b32.xlu0 %v575, 64
    %v2952 = vpop.permute.xlu0 %2951
    %v2955 = vsel %vm502, %v2945, %v2950
    %v2956 = vsel %vm502, %v2946, %v2952
    %2957 = vst [vmem:[#allocation2] sm:$0xff] %v2955
    %2958 = vst [vmem:[#allocation2 + $0x8] sm:$0xff] %v2956
    // Predicated region
    $region74: #{bert_embedder_forward.1} parent=1 // pred_check
      _
    $region75: #{bert_embedder_forward.1} parent=1 // pred_check_branch
      %2960 = sbr.rel (0) target = $region77
    $region76: #{bert_embedder_forward.1} parent=1 // pred_region
      %s2962 = ssub.s32 256, 256
      %2963 = vsyncadd [#allocation3], %s2962
      %s2964 = sshll.u32 [#allocation2], 4
      %s2965 = int_to_ptr.vmem [resolvable:$true] %s2964
      %2970 = dma.vmem_to_hbm [thread:$0]  %s2965, 256, %s18, [#allocation3], 128, 128, 8
    $region77: #{bert_embedder_forward.1} parent=1 // pred_fallthru
      _
    // Predicated region
    $region78: #{bert_embedder_forward.1} parent=1 // pred_check
      _
    $region79: #{bert_embedder_forward.1} parent=1 // pred_check_branch
      %2972 = sbr.rel (0) target = $region81
    $region80: #{bert_embedder_forward.1} parent=1 // pred_region
      %2973 = dma.done [#allocation3], 256
    $region81: #{bert_embedder_forward.1} parent=1 // pred_fallthru
      _
    %2974 = vsyncpa [#allocation3], 1

</llo_original>
